<compile_context>
chip_gen: v7x
topology: tpu7x:2x2x1
jax: 0.10.0
libtpu: 0.0.40
codegen_flags: <defaults>
</compile_context>

<pallas_src>
import jax
import jax.numpy as jnp
from jax import lax
from jax.experimental import pallas as pl
from jax.experimental.pallas import tpu as pltpu

EPS = 1e-5


# ------------------------------ kernel -------------------------------------

def fused_conv_bn_kernel(a_ref, w1_ref, g1_ref, b1_ref, w2_ref, o_ref):
    """One C1 block per grid step, grid = (core_split, c1_blocks_per_core).

    a_ref : (P, 9*Cin)    bf16  resident (constant block index)
    w1_ref: (9*Cin, TC1)  bf16  contiguous slab, streamed over the grid
    g1/b1 : (1, TC1)      f32
    w2_ref: (TC1, C2)     bf16
    o_ref : (P, C2)       f32   partial conv_2 accumulator for this core
    """
    k = pl.program_id(1)

    @pl.when(k == 0)
    def _():
        o_ref[...] = jnp.zeros_like(o_ref)

    # conv_1 (3x3, s2, p1) as im2col matmul: bf16 x bf16 -> f32 accumulate.
    h1 = jnp.dot(a_ref[...], w1_ref[...], preferred_element_type=jnp.float32)

    # bn_1 (training-mode batch stats), exact per C1 block.
    m1 = jnp.mean(h1, axis=0, keepdims=True)
    d1 = h1 - m1
    v1 = jnp.mean(d1 * d1, axis=0, keepdims=True)            # biased variance
    scale1 = g1_ref[...] * lax.rsqrt(v1 + EPS)                # (1, TC1), EUP
    h1n = d1 * scale1 + b1_ref[...]

    # conv_2 (1x1): partial product for this C1 block, accumulated in f32.
    o_ref[...] += jnp.dot(h1n.astype(jnp.bfloat16), w2_ref[...],
                          preferred_element_type=jnp.float32)


# --------------------------- one-time weight prep ---------------------------

def _pick_tc1(c1):
    if c1 % 256 == 0:
        return 256
    if c1 % 128 == 0:
        return 128
    return c1


def prepare_params(w1, g1, b1, w2, g2, b2):
    """Run ONCE at init: torch-layout weights -> blocked, bf16 matmul layout.

    Hoists the transpose/reshape/astype HBM traffic out of the per-call path.
    """
    c1, cin = w1.shape[0], w1.shape[1]
    c2 = w2.shape[0]
    tc1 = _pick_tc1(c1)
    nb = c1 // tc1

    # (C1, Cin, 3, 3) -> (kh, kw, cin, c1) -> (9*Cin, C1) -> (nb, 9*Cin, TC1)
    w1_mat = jnp.transpose(w1, (2, 3, 1, 0)).reshape(9 * cin, c1)
    w1_blocks = jnp.transpose(w1_mat.reshape(9 * cin, nb, tc1),
                              (1, 0, 2)).astype(jnp.bfloat16)
    # (C2, C1, 1, 1) -> (C1, C2) -> (nb, TC1, C2)
    w2_blocks = jnp.transpose(w2[:, :, 0, 0], (1, 0)).reshape(
        nb, tc1, c2).astype(jnp.bfloat16)

    g1_blocks = g1.astype(jnp.float32).reshape(nb, 1, tc1)
    b1_blocks = b1.astype(jnp.float32).reshape(nb, 1, tc1)
    return (w1_blocks, g1_blocks, b1_blocks, w2_blocks,
            g2.astype(jnp.float32), b2.astype(jnp.float32))


# ------------------------------ forward ------------------------------------

def _im2col_3x3_s2_p1(x_nhwc):
    """3x3 / stride-2 / pad-1 patches. Returns (N*Ho*Wo, 9*Cin)."""
    n, h, w, c = x_nhwc.shape
    ho, wo = (h + 2 - 3) // 2 + 1, (w + 2 - 3) // 2 + 1
    xp = jnp.pad(x_nhwc, ((0, 0), (1, 1), (1, 1), (0, 0)))
    patches = jnp.stack(
        [xp[:, kh:kh + 2 * ho:2, kw:kw + 2 * wo:2, :]
         for kh in range(3) for kw in range(3)],
        axis=3)                                   # (N, Ho, Wo, 9, Cin)
    return patches.reshape(n * ho * wo, 9 * c), (n, ho, wo)


@jax.jit
def fused_forward(x3_nchw, w1_blocks, g1_blocks, b1_blocks, w2_blocks, g2, b2):
    """x3: NCHW f32. Returns bn_2 output in NCHW (N, C2, Ho, Wo)."""
    n, cin, h, w = x3_nchw.shape
    nb, ninecin, tc1 = w1_blocks.shape
    c2 = w2_blocks.shape[2]

    # Split the C1 blocks across a leading "parallel" axis (both TCs on v7x).
    if nb % 2 == 0 and nb >= 2:
        n_split, nk = 2, nb // 2
    else:
        n_split, nk = 1, nb

    # --- prep (fused into one tiny XLA fusion under this jit) ---------------
    x_nhwc = jnp.transpose(x3_nchw, (0, 2, 3, 1))
    a, (nn_, ho, wo) = _im2col_3x3_s2_p1(x_nhwc)
    a_bf = a.astype(jnp.bfloat16)                          # (P, 9*Cin)
    p = a_bf.shape[0]

    # --- kernel: conv_1 + bn_1 + partial conv_2 -----------------------------
    partials = pl.pallas_call(
        fused_conv_bn_kernel,
        out_shape=jax.ShapeDtypeStruct((n_split, p, c2), jnp.float32),
        grid_spec=pltpu.PrefetchScalarGridSpec(
            num_scalar_prefetch=0,
            grid=(n_split, nk),
            in_specs=[
                pl.BlockSpec((p, ninecin), lambda c, k: (0, 0)),       # A
                pl.BlockSpec((None, ninecin, tc1),
                             lambda c, k: (c * nk + k, 0, 0)),         # W1 blk
                pl.BlockSpec((None, 1, tc1),
                             lambda c, k: (c * nk + k, 0, 0)),         # gamma1
                pl.BlockSpec((None, 1, tc1),
                             lambda c, k: (c * nk + k, 0, 0)),         # beta1
                pl.BlockSpec((None, tc1, c2),
                             lambda c, k: (c * nk + k, 0, 0)),         # W2 blk
            ],
            out_specs=pl.BlockSpec((None, p, c2), lambda c, k: (c, 0, 0)),
        ),
        compiler_params=pltpu.CompilerParams(
            dimension_semantics=("parallel", "arbitrary")),
    )(a_bf, w1_blocks, g1_blocks, b1_blocks, w2_blocks)

    # --- epilogue: sum per-core partials + bn_2 + layout (one tiny fusion) ---
    h2 = jnp.sum(partials, axis=0)                          # (P, C2) f32
    m2 = jnp.mean(h2, axis=0, keepdims=True)
    d2 = h2 - m2
    v2 = jnp.mean(d2 * d2, axis=0, keepdims=True)
    y = d2 * (g2[None, :] * lax.rsqrt(v2 + EPS)) + b2[None, :]
    y = y.reshape(nn_, ho, wo, c2)
    return jnp.transpose(y, (0, 3, 1, 2))                   # back to NCHW


# ----------------------------- references ----------------------------------

def _conv(x, w, strides, padding, matmul_dtype=None):
    if matmul_dtype is not None:
        x = x.astype(matmul_dtype)
        w = w.astype(matmul_dtype)
    return lax.conv_general_dilated(
        x, w, window_strides=strides, padding=padding,
        dimension_numbers=('NCHW', 'OIHW', 'NCHW'),
        preferred_element_type=jnp.float32)


def _bn(x, g, b):
    m = jnp.mean(x, axis=(0, 2, 3), keepdims=True)
    v = jnp.mean((x - m) ** 2, axis=(0, 2, 3), keepdims=True)
    return ((x - m) * lax.rsqrt(v + EPS) * g[None, :, None, None]
            + b[None, :, None, None])


def reference_forward(x3, w1, g1, b1, w2, g2, b2, matmul_dtype=None):
    """Pure-JAX reference. matmul_dtype=bf16 mirrors the kernel's MXU inputs."""
    h = _conv(x3, w1, (2, 2), ((1, 1), (1, 1)), matmul_dtype)
    h = _bn(h, g1, b1)
    h = _conv(h, w2, (1, 1), 'VALID', matmul_dtype)
    return _bn(h, g2, b2)


if __name__ == "__main__":
    key = jax.random.PRNGKey(0)
    k_x, k_w1, k_w2 = jax.random.split(key, 3)

    # Shapes from the module's __init__ / spec input (already small spatially).
    N, CIN, H, W = 1, 512, 8, 8
    C1, C2 = 512, 256

    x3 = jax.random.normal(k_x, (N, CIN, H, W), dtype=jnp.float32)

    w1 = jax.random.normal(k_w1, (C1, CIN, 3, 3), dtype=jnp.float32) * 0.02
    w2 = jax.random.normal(k_w2, (C2, C1, 1, 1), dtype=jnp.float32) * 0.05
    g1 = jnp.ones((C1,), jnp.float32)
    b1 = jnp.zeros((C1,), jnp.float32)
    g2 = jnp.ones((C2,), jnp.float32)
    b2 = jnp.zeros((C2,), jnp.float32)

    # One-time weight prep (hoisted out of the per-call path).
    params = jax.block_until_ready(prepare_params(w1, g1, b1, w2, g2, b2))

    out = jax.block_until_ready(fused_forward(x3, *params))
    assert out.shape == (N, C2, H // 2, W // 2), out.shape

    # Tight check vs a reference using the same bf16-operand / f32-accumulate
    # quantization as the kernel's MXU inputs.
    ref_bf16 = reference_forward(x3, w1, g1, b1, w2, g2, b2, jnp.bfloat16)
    err_t = float(jnp.max(jnp.abs(out - ref_bf16)))
    assert jnp.allclose(out, ref_bf16, atol=5e-3, rtol=5e-3), err_t

    # Loose sanity check vs the full-f32 reference.
    ref_f32 = reference_forward(x3, w1, g1, b1, w2, g2, b2, None)
    err_l = float(jnp.max(jnp.abs(out - ref_f32)))
    assert jnp.allclose(out, ref_f32, atol=5e-2, rtol=5e-2), err_l

    print("KERNEL_OK")
</pallas_src>

<mosaic_0001>
module attributes {stable_mosaic.version = 11 : i64} {
  func.func @fused_conv_bn_kernel(%arg0: i32, %arg1: i32, %arg2: memref<16x4608xbf16, #tpu.memory_space<vmem>>, %arg3: memref<1x4608x256xbf16, #tpu.memory_space<vmem>>, %arg4: memref<1x1x256xf32, #tpu.memory_space<vmem>>, %arg5: memref<1x1x256xf32, #tpu.memory_space<vmem>>, %arg6: memref<1x256x256xbf16, #tpu.memory_space<vmem>>, %arg7: memref<1x16x256xf32, #tpu.memory_space<vmem>>) attributes {dimension_semantics = [#tpu.dimension_semantics<parallel>, #tpu.dimension_semantics<arbitrary>], iteration_bounds = array<i64: 2, 1>, scalar_prefetch = 0 : i64, scratch_operands = 0 : i64, tpu.core_type = #tpu.core_type<tc>, window_params = [{pipeline_mode = #tpu.pipeline_mode<synchronous>, transform_indices = @transform_0, window_bounds = array<i64: 16, 4608>}, {transform_indices = @transform_1, window_bounds = array<i64: 1, 4608, 256>}, {transform_indices = @transform_2, window_bounds = array<i64: 1, 1, 256>}, {transform_indices = @transform_3, window_bounds = array<i64: 1, 1, 256>}, {transform_indices = @transform_4, window_bounds = array<i64: 1, 256, 256>}, {transform_indices = @transform_5, window_bounds = array<i64: 1, 16, 256>}]} {
    %c0_i32 = arith.constant 0 : i32
    %0 = arith.cmpi eq, %arg1, %c0_i32 : i32
    %1 = arith.extui %0 : i1 to i32
    %c0_i32_0 = arith.constant 0 : i32
    %2 = arith.cmpi ne, %1, %c0_i32_0 : i32
    scf.if %2 {
      %cst_26 = arith.constant 0.000000e+00 : f32
      %40 = vector.broadcast %cst_26 : f32 to vector<16x256xf32>
      %c0_27 = arith.constant 0 : index
      %c0_28 = arith.constant 0 : index
      %c0_29 = arith.constant 0 : index
      %41 = vector.load %arg7[%c0_27, %c0_28, %c0_29] : memref<1x16x256xf32, #tpu.memory_space<vmem>>, vector<1x16x256xf32>
      %42 = vector.shape_cast %41 : vector<1x16x256xf32> to vector<16x256xf32>
      %43 = vector.shape_cast %40 : vector<16x256xf32> to vector<1x16x256xf32>
      tpu.vector_store %arg7[%c0_27, %c0_28, %c0_29], %43 {strides = array<i32>} : memref<1x16x256xf32, #tpu.memory_space<vmem>>, vector<1x16x256xf32>,
    } else {
    }
    %c0 = arith.constant 0 : index
    %c0_1 = arith.constant 0 : index
    %3 = vector.load %arg2[%c0, %c0_1] : memref<16x4608xbf16, #tpu.memory_space<vmem>>, vector<16x4608xbf16>
    %c0_2 = arith.constant 0 : index
    %c0_3 = arith.constant 0 : index
    %c0_4 = arith.constant 0 : index
    %4 = vector.load %arg3[%c0_2, %c0_3, %c0_4] : memref<1x4608x256xbf16, #tpu.memory_space<vmem>>, vector<1x4608x256xbf16>
    %5 = vector.shape_cast %4 : vector<1x4608x256xbf16> to vector<4608x256xbf16>
    %cst = arith.constant dense<0.000000e+00> : vector<16x256xf32>
    %6 = tpu.matmul %3, %5, %cst {dimension_numbers = #tpu.dot_dimension_numbers<[1], [0], [0], [1], [0, 0, 1, 1], [], []>} : vector<16x4608xbf16>, vector<4608x256xbf16>, vector<16x256xf32> -> vector<16x256xf32>
    %cst_5 = arith.constant dense<0.000000e+00> : vector<256xf32>
    %7 = vector.multi_reduction <add>, %6, %cst_5 [0] : vector<16x256xf32> to vector<256xf32>
    %8 = vector.shape_cast %7 : vector<256xf32> to vector<1x256xf32>
    %cst_6 = arith.constant 1.600000e+01 : f32
    %9 = vector.broadcast %cst_6 : f32 to vector<1x256xf32>
    %10 = arith.divf %8, %9 : vector<1x256xf32>
    %11 = vector.broadcast %10 : vector<1x256xf32> to vector<16x256xf32>
    %12 = arith.subf %6, %11 : vector<16x256xf32>
    %13 = arith.mulf %12, %12 : vector<16x256xf32>
    %cst_7 = arith.constant dense<0.000000e+00> : vector<256xf32>
    %14 = vector.multi_reduction <add>, %13, %cst_7 [0] : vector<16x256xf32> to vector<256xf32>
    %15 = vector.shape_cast %14 : vector<256xf32> to vector<1x256xf32>
    %cst_8 = arith.constant 1.600000e+01 : f32
    %16 = vector.broadcast %cst_8 : f32 to vector<1x256xf32>
    %17 = arith.divf %15, %16 : vector<1x256xf32>
    %c0_9 = arith.constant 0 : index
    %c0_10 = arith.constant 0 : index
    %c0_11 = arith.constant 0 : index
    %18 = vector.load %arg4[%c0_9, %c0_10, %c0_11] : memref<1x1x256xf32, #tpu.memory_space<vmem>>, vector<1x1x256xf32>
    %19 = vector.shape_cast %18 : vector<1x1x256xf32> to vector<1x256xf32>
    %cst_12 = arith.constant 9.99999974E-6 : f32
    %20 = vector.broadcast %cst_12 : f32 to vector<1x256xf32>
    %21 = arith.addf %17, %20 : vector<1x256xf32>
    %22 = math.rsqrt %21 : vector<1x256xf32>
    %23 = arith.mulf %19, %22 : vector<1x256xf32>
    %24 = vector.broadcast %23 : vector<1x256xf32> to vector<16x256xf32>
    %25 = arith.mulf %12, %24 : vector<16x256xf32>
    %c0_13 = arith.constant 0 : index
    %c0_14 = arith.constant 0 : index
    %c0_15 = arith.constant 0 : index
    %26 = vector.load %arg5[%c0_13, %c0_14, %c0_15] : memref<1x1x256xf32, #tpu.memory_space<vmem>>, vector<1x1x256xf32>
    %27 = vector.shape_cast %26 : vector<1x1x256xf32> to vector<1x256xf32>
    %28 = vector.broadcast %27 : vector<1x256xf32> to vector<16x256xf32>
    %29 = arith.addf %25, %28 : vector<16x256xf32>
    %c0_16 = arith.constant 0 : index
    %c0_17 = arith.constant 0 : index
    %c0_18 = arith.constant 0 : index
    %30 = vector.load %arg7[%c0_16, %c0_17, %c0_18] : memref<1x16x256xf32, #tpu.memory_space<vmem>>, vector<1x16x256xf32>
    %31 = vector.shape_cast %30 : vector<1x16x256xf32> to vector<16x256xf32>
    %32 = arith.truncf %29 : vector<16x256xf32> to vector<16x256xbf16>
    %c0_19 = arith.constant 0 : index
    %c0_20 = arith.constant 0 : index
    %c0_21 = arith.constant 0 : index
    %33 = vector.load %arg6[%c0_19, %c0_20, %c0_21] : memref<1x256x256xbf16, #tpu.memory_space<vmem>>, vector<1x256x256xbf16>
    %34 = vector.shape_cast %33 : vector<1x256x256xbf16> to vector<256x256xbf16>
    %cst_22 = arith.constant dense<0.000000e+00> : vector<16x256xf32>
    %35 = tpu.matmul %32, %34, %cst_22 {dimension_numbers = #tpu.dot_dimension_numbers<[1], [0], [0], [1], [0, 0, 1, 1], [], []>} : vector<16x256xbf16>, vector<256x256xbf16>, vector<16x256xf32> -> vector<16x256xf32>
    %36 = arith.addf %31, %35 : vector<16x256xf32>
    %c0_23 = arith.constant 0 : index
    %c0_24 = arith.constant 0 : index
    %c0_25 = arith.constant 0 : index
    %37 = vector.load %arg7[%c0_23, %c0_24, %c0_25] : memref<1x16x256xf32, #tpu.memory_space<vmem>>, vector<1x16x256xf32>
    %38 = vector.shape_cast %37 : vector<1x16x256xf32> to vector<16x256xf32>
    %39 = vector.shape_cast %36 : vector<16x256xf32> to vector<1x16x256xf32>
    tpu.vector_store %arg7[%c0_23, %c0_24, %c0_25], %39 {strides = array<i32>} : memref<1x16x256xf32, #tpu.memory_space<vmem>>, vector<1x16x256xf32>,
    return
  }
  func.func @transform_0(%arg0: i32, %arg1: i32) -> (i32, i32) {
    %c0_i32 = arith.constant 0 : i32
    %c0_i32_0 = arith.constant 0 : i32
    %c0_i32_1 = arith.constant 0 : i32
    return %c0_i32, %c0_i32_0 : i32, i32
  }
  func.func @transform_1(%arg0: i32, %arg1: i32) -> (i32, i32, i32) {
    %c1_i32 = arith.constant 1 : i32
    %0 = arith.muli %arg0, %c1_i32 : i32
    %1 = arith.addi %0, %arg1 : i32
    %c0_i32 = arith.constant 0 : i32
    %c0_i32_0 = arith.constant 0 : i32
    %c0_i32_1 = arith.constant 0 : i32
    return %1, %c0_i32, %c0_i32_0 : i32, i32, i32
  }
  func.func @transform_2(%arg0: i32, %arg1: i32) -> (i32, i32, i32) {
    %c1_i32 = arith.constant 1 : i32
    %0 = arith.muli %arg0, %c1_i32 : i32
    %1 = arith.addi %0, %arg1 : i32
    %c0_i32 = arith.constant 0 : i32
    %c0_i32_0 = arith.constant 0 : i32
    %c0_i32_1 = arith.constant 0 : i32
    return %1, %c0_i32, %c0_i32_0 : i32, i32, i32
  }
  func.func @transform_3(%arg0: i32, %arg1: i32) -> (i32, i32, i32) {
    %c1_i32 = arith.constant 1 : i32
    %0 = arith.muli %arg0, %c1_i32 : i32
    %1 = arith.addi %0, %arg1 : i32
    %c0_i32 = arith.constant 0 : i32
    %c0_i32_0 = arith.constant 0 : i32
    %c0_i32_1 = arith.constant 0 : i32
    return %1, %c0_i32, %c0_i32_0 : i32, i32, i32
  }
  func.func @transform_4(%arg0: i32, %arg1: i32) -> (i32, i32, i32) {
    %c1_i32 = arith.constant 1 : i32
    %0 = arith.muli %arg0, %c1_i32 : i32
    %1 = arith.addi %0, %arg1 : i32
    %c0_i32 = arith.constant 0 : i32
    %c0_i32_0 = arith.constant 0 : i32
    %c0_i32_1 = arith.constant 0 : i32
    return %1, %c0_i32, %c0_i32_0 : i32, i32, i32
  }
  func.func @transform_5(%arg0: i32, %arg1: i32) -> (i32, i32, i32) {
    %c0_i32 = arith.constant 0 : i32
    %c0_i32_0 = arith.constant 0 : i32
    %c0_i32_1 = arith.constant 0 : i32
    return %arg0, %c0_i32, %c0_i32_0 : i32, i32, i32
  }
}

</mosaic_0001>

<llo_original>
// kernel: fused_forward.1
$region0: #{fused_forward.1}
  #allocation0 [shape = 'u32[]', space=smem, size = 0x4, offset = 0x4, fixed_abs, tag = 'smem constant byte address 0x4 - core index']
  #allocation1 [shape = 'u32[144,128]{1,0:T(1,128)}', space=vmem, size = 0x12000, scoped, tag = 'internal scratch']
  %s0 = inlined_call_operand.vmem [shape: bf16[16,4608], index: 0, kind: input, shape index: {}]
  %s1 = inlined_call_operand.hbm [shape: bf16[2,4608,256], index: 1, kind: input, shape index: {}]
  %s2 = inlined_call_operand.hbm [shape: f32[2,1,256], index: 2, kind: input, shape index: {}]
  %s3 = inlined_call_operand.hbm [shape: f32[2,1,256], index: 3, kind: input, shape index: {}]
  %s4 = inlined_call_operand.hbm [shape: bf16[2,256,256], index: 4, kind: input, shape index: {}]
  %s5 = inlined_call_operand.vmem [shape: f32[2,16,256], index: 5, kind: output, shape index: {}]
  %s6 = sld [smem:[#allocation0]]
  $region73: #{fused_forward.1} parent=0
    _
  %s8 = ssub.s32 1, %s6
  %s9 = scalar_select 0, %s8, %s6
  $region1: #{fused_forward.1} parent=0
    #allocation2 [shape = 'u8[4718592]{0}', space=vmem, size = 0x480000, scoped, tag = 'input window, operand 1']
    #allocation3 [shape = 's32[2]{0}', space=sflag, size = 0x8, scoped, tag = 'scoped memory for fused_forward.1']
    #allocation4 [shape = 'u8[2048]{0}', space=vmem, size = 0x800, scoped, tag = 'input window, operand 2']
    #allocation5 [shape = 's32[2]{0}', space=sflag, size = 0x8, scoped, tag = 'scoped memory for fused_forward.1']
    #allocation6 [shape = 'u8[2048]{0}', space=vmem, size = 0x800, scoped, tag = 'input window, operand 3']
    #allocation7 [shape = 'u8[262144]{0}', space=vmem, size = 0x40000, scoped, tag = 'input window, operand 4']
    #allocation8 [shape = 's32[2]{0}', space=sflag, size = 0x8, scoped, tag = 'scoped memory for fused_forward.1']
    %10 = vsyncpa [#allocation3], 0
    %s11 = scalar_lea.sflag [#allocation3], 1
    %12 = vsyncpa %s11, 0
    %13 = vsyncpa [#allocation5], 0
    %s14 = scalar_lea.sflag [#allocation5], 1
    %15 = vsyncpa %s14, 0
    %16 = vsyncpa [#allocation8], 0
    %s17 = scalar_lea.sflag [#allocation8], 1
    %18 = vsyncpa %s17, 0
    loop: start=0, step=1, limit=4
    $region2: #{fused_forward.1} parent=1 // loop_pre_header
      _
    $region3: #{fused_forward.1} parent=1 // loop_header
      %s20 = sphi 0, %s24
      %p21 = scmp.ge.s32.totalorder %s20, 4
      %s27 = sphi 0, %s39
      %s28 = sphi 0, %s35
      %s29 = sphi 0, %s27
      %s30 = sphi 0, %s28
      %s31 = sphi 0, %s29
      %s32 = sphi 0, %s30
      %s40 = sphi 0, %s40
      %s42 = sphi 0, %s40
      %s43 = sphi 0, %s42
      %s57 = sphi 0, %s43
      %s65 = sphi 0, %s67
      %s68 = sphi 0, %s65
      %s69 = sphi 0, %s68
      %s85 = sphi 0, %s69
      %s93 = sphi 0, %s95
      %s96 = sphi 0, %s93
      %s97 = sphi 0, %s96
      %s113 = sphi 0, %s97
      %s121 = sphi 0, %s123
      %s124 = sphi 0, %s121
      %s125 = sphi 0, %s124
      %s141 = sphi 0, %s125
      %s149 = sphi 0, %s151
      %s152 = sphi 0, %s149
      %s153 = sphi 0, %s152
      %s169 = sphi 0, %s153
      %s175 = sphi 0, %s177
      %s178 = sphi 0, %s175
      %s179 = sphi 0, %s178
      %s195 = sphi 0, %s179
    $region4: #{fused_forward.1} parent=1 // loop_header_branch
      %23 = sbr.rel (%p21) target = $region8
    $region5: #{fused_forward.1} parent=1 // loop_body
      %s25 = ssub.s32 %s20, 1
      %s26 = ssub.s32 %s20, 2
      %s33 = sadd.s32 1, %s28
      %p34 = scmp.ge.s32.totalorder %s33, 1
      %s35 = scalar_select %p34, 0, %s33
      %s36 = sadd.s32 1, %s27
      %s37 = scalar_select %p34, %s36, %s27
      %p38 = scmp.ge.s32.totalorder %s37, 2
      %s39 = scalar_select %p38, 0, %s37
      %s41 = sadd.s32 %s40, 1
      %p44 = scmp.eq.s32.totalorder %s20, 1
      %p45 = scmp.ne.s32.totalorder %s40, %s42
      %p46 = scmp.eq.s32.totalorder %s20, 0
      %p47 = por %p45, %p46
      %p48 = scmp.ne.s32.totalorder %s40, %s42
      %p49 = scmp.eq.s32.totalorder %s25, 1
      %p50 = por %p48, %p49
      %p51 = scmp.ne.s32.totalorder %s42, %s43
      %p52 = scmp.eq.s32.totalorder %s25, 0
      %p53 = por %p51, %p52
      %p54 = scmp.ne.s32.totalorder %s42, %s43
      %p55 = scmp.eq.s32.totalorder %s26, 1
      %p56 = por %p54, %p55
      %p58 = scmp.ne.s32.totalorder %s43, %s57
      %p59 = scmp.eq.s32.totalorder %s26, 0
      %p60 = por %p58, %p59
      %s61 = sadd.s32 %s27, %s28
      %s62 = sadd.s32 %s39, %s35
      %s63 = ssub.s32 %s61, %s62
      %p64 = scmp.eq.s32.totalorder %s63, 0
      %s66 = sadd.s32 %s65, 1
      %s67 = scalar_select %p64, %s65, %s66
      %p70 = pneg %p64
      %p71 = scmp.eq.s32.totalorder %s20, 1
      %p72 = por %p70, %p71
      %p73 = scmp.ne.s32.totalorder %s65, %s68
      %p74 = scmp.eq.s32.totalorder %s20, 0
      %p75 = por %p73, %p74
      %p76 = scmp.ne.s32.totalorder %s65, %s68
      %p77 = scmp.eq.s32.totalorder %s25, 1
      %p78 = por %p76, %p77
      %p79 = scmp.ne.s32.totalorder %s68, %s69
      %p80 = scmp.eq.s32.totalorder %s25, 0
      %p81 = por %p79, %p80
      %p82 = scmp.ne.s32.totalorder %s68, %s69
      %p83 = scmp.eq.s32.totalorder %s26, 1
      %p84 = por %p82, %p83
      %p86 = scmp.ne.s32.totalorder %s69, %s85
      %p87 = scmp.eq.s32.totalorder %s26, 0
      %p88 = por %p86, %p87
      %s89 = sadd.s32 %s27, %s28
      %s90 = sadd.s32 %s39, %s35
      %s91 = ssub.s32 %s89, %s90
      %p92 = scmp.eq.s32.totalorder %s91, 0
      %s94 = sadd.s32 %s93, 1
      %s95 = scalar_select %p92, %s93, %s94
      %p98 = pneg %p92
      %p99 = scmp.eq.s32.totalorder %s20, 1
      %p100 = por %p98, %p99
      %p101 = scmp.ne.s32.totalorder %s93, %s96
      %p102 = scmp.eq.s32.totalorder %s20, 0
      %p103 = por %p101, %p102
      %p104 = scmp.ne.s32.totalorder %s93, %s96
      %p105 = scmp.eq.s32.totalorder %s25, 1
      %p106 = por %p104, %p105
      %p107 = scmp.ne.s32.totalorder %s96, %s97
      %p108 = scmp.eq.s32.totalorder %s25, 0
      %p109 = por %p107, %p108
      %p110 = scmp.ne.s32.totalorder %s96, %s97
      %p111 = scmp.eq.s32.totalorder %s26, 1
      %p112 = por %p110, %p111
      %p114 = scmp.ne.s32.totalorder %s97, %s113
      %p115 = scmp.eq.s32.totalorder %s26, 0
      %p116 = por %p114, %p115
      %s117 = sadd.s32 %s27, %s28
      %s118 = sadd.s32 %s39, %s35
      %s119 = ssub.s32 %s117, %s118
      %p120 = scmp.eq.s32.totalorder %s119, 0
      %s122 = sadd.s32 %s121, 1
      %s123 = scalar_select %p120, %s121, %s122
      %p126 = pneg %p120
      %p127 = scmp.eq.s32.totalorder %s20, 1
      %p128 = por %p126, %p127
      %p129 = scmp.ne.s32.totalorder %s121, %s124
      %p130 = scmp.eq.s32.totalorder %s20, 0
      %p131 = por %p129, %p130
      %p132 = scmp.ne.s32.totalorder %s121, %s124
      %p133 = scmp.eq.s32.totalorder %s25, 1
      %p134 = por %p132, %p133
      %p135 = scmp.ne.s32.totalorder %s124, %s125
      %p136 = scmp.eq.s32.totalorder %s25, 0
      %p137 = por %p135, %p136
      %p138 = scmp.ne.s32.totalorder %s124, %s125
      %p139 = scmp.eq.s32.totalorder %s26, 1
      %p140 = por %p138, %p139
      %p142 = scmp.ne.s32.totalorder %s125, %s141
      %p143 = scmp.eq.s32.totalorder %s26, 0
      %p144 = por %p142, %p143
      %s145 = sadd.s32 %s27, %s28
      %s146 = sadd.s32 %s39, %s35
      %s147 = ssub.s32 %s145, %s146
      %p148 = scmp.eq.s32.totalorder %s147, 0
      %s150 = sadd.s32 %s149, 1
      %s151 = scalar_select %p148, %s149, %s150
      %p154 = pneg %p148
      %p155 = scmp.eq.s32.totalorder %s20, 1
      %p156 = por %p154, %p155
      %p157 = scmp.ne.s32.totalorder %s149, %s152
      %p158 = scmp.eq.s32.totalorder %s20, 0
      %p159 = por %p157, %p158
      %p160 = scmp.ne.s32.totalorder %s149, %s152
      %p161 = scmp.eq.s32.totalorder %s25, 1
      %p162 = por %p160, %p161
      %p163 = scmp.ne.s32.totalorder %s152, %s153
      %p164 = scmp.eq.s32.totalorder %s25, 0
      %p165 = por %p163, %p164
      %p166 = scmp.ne.s32.totalorder %s152, %s153
      %p167 = scmp.eq.s32.totalorder %s26, 1
      %p168 = por %p166, %p167
      %p170 = scmp.ne.s32.totalorder %s153, %s169
      %p171 = scmp.eq.s32.totalorder %s26, 0
      %p172 = por %p170, %p171
      %s173 = ssub.s32 %s27, %s39
      %p174 = scmp.eq.s32.totalorder %s173, 0
      %s176 = sadd.s32 %s175, 1
      %s177 = scalar_select %p174, %s175, %s176
      %p180 = pneg %p174
      %p181 = scmp.eq.s32.totalorder %s20, 1
      %p182 = por %p180, %p181
      %p183 = scmp.ne.s32.totalorder %s175, %s178
      %p184 = scmp.eq.s32.totalorder %s20, 0
      %p185 = por %p183, %p184
      %p186 = scmp.ne.s32.totalorder %s175, %s178
      %p187 = scmp.eq.s32.totalorder %s25, 1
      %p188 = por %p186, %p187
      %p189 = scmp.ne.s32.totalorder %s178, %s179
      %p190 = scmp.eq.s32.totalorder %s25, 0
      %p191 = por %p189, %p190
      %p192 = scmp.ne.s32.totalorder %s178, %s179
      %p193 = scmp.eq.s32.totalorder %s26, 1
      %p194 = por %p192, %p193
      %p196 = scmp.ne.s32.totalorder %s179, %s195
      %p197 = scmp.eq.s32.totalorder %s26, 0
      %p198 = por %p196, %p197
      %p199 = scmp.le.s32.totalorder 1, %s20
      %p200 = scmp.lt.s32.totalorder %s20, 3
      %p201 = pnand %p199, %p200
      %p202 = pneg %p201
      // Predicated region
      $region9: #{fused_forward.1} parent=5 // pred_check
        _
      $region10: #{fused_forward.1} parent=5 // pred_check_branch
        %204 = sbr.rel (%p201) target = $region12
      $region11: #{fused_forward.1} parent=5 // pred_region
        %s205 = ssub.s32 %s20, 1
        // Predicated region
        $region13: #{fused_forward.1} parent=11 // pred_check
          %p206 = pneg %p53
        $region14: #{fused_forward.1} parent=11 // pred_check_branch
          %208 = sbr.rel (%p206) target = $region16
        $region15: #{fused_forward.1} parent=11 // pred_region
          _
        $region16: #{fused_forward.1} parent=11 // pred_fallthru
          _
      $region12: #{fused_forward.1} parent=5 // pred_fallthru
        _
      %p209 = scmp.lt.s32.totalorder %s20, 2
      // Predicated region
      $region17: #{fused_forward.1} parent=5 // pred_check
        %p210 = pneg %p209
      $region18: #{fused_forward.1} parent=5 // pred_check_branch
        %212 = sbr.rel (%p210) target = $region20
      $region19: #{fused_forward.1} parent=5 // pred_region
        // Predicated region
        $region21: #{fused_forward.1} parent=19 // pred_check
          %p213 = pneg %p75
        $region22: #{fused_forward.1} parent=19 // pred_check_branch
          %215 = sbr.rel (%p213) target = $region24
        $region23: #{fused_forward.1} parent=19 // pred_region
          %s216 = sand.u32 %s65, 1
          %s217 = scalar_lea.sflag [#allocation3], %s216
          %s218 = sand.u32 %s65, 1
          %s219 = smul.addr %s218, 4608
          %s220 = scalar_lea.vmem [#allocation2], %s219
          %s221 = sadd.s32 %s27, %s28
          %s223 = ssub.s32 73728, 73728
          %224 = vsyncadd %s217, %s223
          %s225 = smul.addr %s221, 1152
          %s226 = smul.addr %s225, 64
          %s227 = scalar_lea.hbm %s1, %s226
          %s228 = sshll.u32 %s220, 4
          %s229 = int_to_ptr.vmem [resolvable:$true] %s228
          %234 = dma.hbm_to_vmem [thread:$0]  %s227, 73728, %s229, %s217, 128, 128, 8
        $region24: #{fused_forward.1} parent=19 // pred_fallthru
          _
        // Predicated region
        $region25: #{fused_forward.1} parent=19 // pred_check
          %p235 = pneg %p103
        $region26: #{fused_forward.1} parent=19 // pred_check_branch
          %237 = sbr.rel (%p235) target = $region28
        $region27: #{fused_forward.1} parent=19 // pred_region
          %s238 = sand.u32 %s20, 1
          %s239 = scalar_lea.sflag [#allocation5], %s238
          %s240 = sand.u32 %s93, 1
          %s241 = smul.addr %s240, 2
          %s242 = scalar_lea.vmem [#allocation4], %s241
          %s243 = sadd.s32 %s27, %s28
          %s245 = ssub.s32 32, 32
          %246 = vsyncadd %s239, %s245
          %s247 = smul.addr %s243, 2
          %s248 = smul.addr %s247, 16
          %s249 = scalar_lea.hbm %s2, %s248
          %s251 = sshll.u32 %s242, 4
          %s252 = int_to_ptr.vmem [resolvable:$true] %s251
          %254 = dma.hbm_to_vmem [thread:$0]  %s249, 32, %s252, %s239
        $region28: #{fused_forward.1} parent=19 // pred_fallthru
          _
        // Predicated region
        $region29: #{fused_forward.1} parent=19 // pred_check
          %p255 = pneg %p131
        $region30: #{fused_forward.1} parent=19 // pred_check_branch
          %257 = sbr.rel (%p255) target = $region32
        $region31: #{fused_forward.1} parent=19 // pred_region
          %s258 = sand.u32 %s20, 1
          %s259 = scalar_lea.sflag [#allocation5], %s258
          %s260 = sand.u32 %s121, 1
          %s261 = smul.addr %s260, 2
          %s262 = scalar_lea.vmem [#allocation6], %s261
          %s263 = sadd.s32 %s27, %s28
          %s265 = ssub.s32 32, 32
          %266 = vsyncadd %s259, %s265
          %s267 = smul.addr %s263, 2
          %s268 = smul.addr %s267, 16
          %s269 = scalar_lea.hbm %s3, %s268
          %s271 = sshll.u32 %s262, 4
          %s272 = int_to_ptr.vmem [resolvable:$true] %s271
          %274 = dma.hbm_to_vmem [thread:$0]  %s269, 32, %s272, %s259
        $region32: #{fused_forward.1} parent=19 // pred_fallthru
          _
        // Predicated region
        $region33: #{fused_forward.1} parent=19 // pred_check
          %p275 = pneg %p159
        $region34: #{fused_forward.1} parent=19 // pred_check_branch
          %277 = sbr.rel (%p275) target = $region36
        $region35: #{fused_forward.1} parent=19 // pred_region
          %s278 = sand.u32 %s149, 1
          %s279 = scalar_lea.sflag [#allocation8], %s278
          %s280 = sand.u32 %s149, 1
          %s281 = smul.addr %s280, 256
          %s282 = scalar_lea.vmem [#allocation7], %s281
          %s283 = sadd.s32 %s27, %s28
          %s285 = ssub.s32 4096, 4096
          %286 = vsyncadd %s279, %s285
          %s287 = smul.addr %s283, 64
          %s288 = smul.addr %s287, 64
          %s289 = scalar_lea.hbm %s4, %s288
          %s290 = sshll.u32 %s282, 4
          %s291 = int_to_ptr.vmem [resolvable:$true] %s290
          %296 = dma.hbm_to_vmem [thread:$0]  %s289, 4096, %s291, %s279, 128, 128, 8
        $region36: #{fused_forward.1} parent=19 // pred_fallthru
          _
      $region20: #{fused_forward.1} parent=5 // pred_fallthru
        _
      %p297 = scmp.le.s32.totalorder 1, %s20
      %p298 = scmp.lt.s32.totalorder %s20, 3
      %p299 = pnand %p297, %p298
      %p300 = pneg %p299
      // Predicated region
      $region37: #{fused_forward.1} parent=5 // pred_check
        _
      $region38: #{fused_forward.1} parent=5 // pred_check_branch
        %302 = sbr.rel (%p299) target = $region40
      $region39: #{fused_forward.1} parent=5 // pred_region
        %s303 = ssub.s32 %s20, 1
        %s304 = sand.u32 %s68, 1
        %s305 = scalar_lea.sflag [#allocation3], %s304
        %s306 = sand.u32 %s68, 1
        %s307 = smul.addr %s306, 4608
        %s308 = scalar_lea.vmem [#allocation2], %s307
        // Predicated region
        $region41: #{fused_forward.1} parent=39 // pred_check
          %p309 = pneg %p81
        $region42: #{fused_forward.1} parent=39 // pred_check_branch
          %311 = sbr.rel (%p309) target = $region44
        $region43: #{fused_forward.1} parent=39 // pred_region
          %312 = dma.done %s305, 73728
        $region44: #{fused_forward.1} parent=39 // pred_fallthru
          _
        %s313 = sand.u32 %s25, 1
        %s314 = scalar_lea.sflag [#allocation5], %s313
        %s315 = sand.u32 %s96, 1
        %s316 = smul.addr %s315, 2
        %s317 = scalar_lea.vmem [#allocation4], %s316
        // Predicated region
        $region45: #{fused_forward.1} parent=39 // pred_check
          %p318 = pneg %p109
        $region46: #{fused_forward.1} parent=39 // pred_check_branch
          %320 = sbr.rel (%p318) target = $region48
        $region47: #{fused_forward.1} parent=39 // pred_region
          %321 = dma.done %s314, 32
        $region48: #{fused_forward.1} parent=39 // pred_fallthru
          _
        %s322 = sand.u32 %s25, 1
        %s323 = scalar_lea.sflag [#allocation5], %s322
        %s324 = sand.u32 %s124, 1
        %s325 = smul.addr %s324, 2
        %s326 = scalar_lea.vmem [#allocation6], %s325
        // Predicated region
        $region49: #{fused_forward.1} parent=39 // pred_check
          %p327 = pneg %p137
        $region50: #{fused_forward.1} parent=39 // pred_check_branch
          %329 = sbr.rel (%p327) target = $region52
        $region51: #{fused_forward.1} parent=39 // pred_region
          %330 = dma.done %s323, 32
        $region52: #{fused_forward.1} parent=39 // pred_fallthru
          _
        %s331 = sand.u32 %s152, 1
        %s332 = scalar_lea.sflag [#allocation8], %s331
        %s333 = sand.u32 %s152, 1
        %s334 = smul.addr %s333, 256
        %s335 = scalar_lea.vmem [#allocation7], %s334
        // Predicated region
        $region53: #{fused_forward.1} parent=39 // pred_check
          %p336 = pneg %p165
        $region54: #{fused_forward.1} parent=39 // pred_check_branch
          %338 = sbr.rel (%p336) target = $region56
        $region55: #{fused_forward.1} parent=39 // pred_region
          %339 = dma.done %s332, 4096
        $region56: #{fused_forward.1} parent=39 // pred_fallthru
          _
        %p340 = pneg %p53
        %p341 = pneg %p50
        %s342 = sand.u32 %s68, 1
        %s343 = scalar_lea.sflag [#allocation3], %s342
        %s344 = sand.u32 %s68, 1
        %s345 = smul.addr %s344, 4608
        %s346 = scalar_lea.vmem [#allocation2], %s345
        %p347 = pneg %p81
        %p348 = pneg %p78
        %s349 = sand.u32 %s25, 1
        %s350 = scalar_lea.sflag [#allocation5], %s349
        %s351 = sand.u32 %s96, 1
        %s352 = smul.addr %s351, 2
        %s353 = scalar_lea.vmem [#allocation4], %s352
        %p354 = pneg %p109
        %p355 = pneg %p106
        %s356 = sand.u32 %s25, 1
        %s357 = scalar_lea.sflag [#allocation5], %s356
        %s358 = sand.u32 %s124, 1
        %s359 = smul.addr %s358, 2
        %s360 = scalar_lea.vmem [#allocation6], %s359
        %p361 = pneg %p137
        %p362 = pneg %p134
        %s363 = sand.u32 %s152, 1
        %s364 = scalar_lea.sflag [#allocation8], %s363
        %s365 = sand.u32 %s152, 1
        %s366 = smul.addr %s365, 256
        %s367 = scalar_lea.vmem [#allocation7], %s366
        %p368 = pneg %p165
        %p369 = pneg %p162
        %p370 = pneg %p191
        %p371 = pneg %p188
        %p372 = scmp.lt.s32.totalorder %s29, 1
        %s373 = scalar_select %p372, %s29, 1
        %s374 = smul.addr %s373, 4
        %s375 = smul.addr %s374, 8
        %s376 = scalar_lea.vmem %s5, %s375
        %s377 = sadd.s32 %s29, %s30
        %s378 = sadd.s32 %s29, %s30
        %s379 = sadd.s32 %s29, %s30
        %s380 = sadd.s32 %s29, %s30
        %p381 = scmp.lt.s32.totalorder %s29, 1
        %s382 = scalar_select %p381, %s29, 1
        %s383 = smul.addr %s382, 4
        %s384 = smul.addr %s383, 8
        %s385 = scalar_lea.vmem %s5, %s384
        %p386 = scmp.eq.s32.totalorder %s30, 0
        // Predicated region
        $region57: #{fused_forward.1} parent=39 // pred_check
          %p387 = pneg %p386
        $region58: #{fused_forward.1} parent=39 // pred_check_branch
          %389 = sbr.rel (%p387) target = $region60
        $region59: #{fused_forward.1} parent=39 // pred_region
          %390 = vst [vmem:[%s385] sm:$0xff] 0.0
          %391 = vst [vmem:[%s385 + $0x8] sm:$0xff] 0.0
          %392 = vst [vmem:[%s385 + $0x10] sm:$0xff] 0.0
          %393 = vst [vmem:[%s385 + $0x18] sm:$0xff] 0.0
        $region60: #{fused_forward.1} parent=39 // pred_fallthru
          _
        %v394 = vld [vmem:[%s0] sm:$0xff]
        %v395 = vld [vmem:[%s0 + $0x8] sm:$0xff]
        %v396 = vld [vmem:[%s0 + $0x10] sm:$0xff]
        %v397 = vld [vmem:[%s0 + $0x18] sm:$0xff]
        %v398 = vld [vmem:[%s0 + $0x20] sm:$0xff]
        %v399 = vld [vmem:[%s0 + $0x28] sm:$0xff]
        %v400 = vld [vmem:[%s0 + $0x30] sm:$0xff]
        %v401 = vld [vmem:[%s0 + $0x38] sm:$0xff]
        %v402 = vld [vmem:[%s0 + $0x40] sm:$0xff]
        %v403 = vld [vmem:[%s0 + $0x48] sm:$0xff]
        %v404 = vld [vmem:[%s0 + $0x50] sm:$0xff]
        %v405 = vld [vmem:[%s0 + $0x58] sm:$0xff]
        %v406 = vld [vmem:[%s0 + $0x60] sm:$0xff]
        %v407 = vld [vmem:[%s0 + $0x68] sm:$0xff]
        %v408 = vld [vmem:[%s0 + $0x70] sm:$0xff]
        %v409 = vld [vmem:[%s0 + $0x78] sm:$0xff]
        %v410 = vld [vmem:[%s0 + $0x80] sm:$0xff]
        %v411 = vld [vmem:[%s0 + $0x88] sm:$0xff]
        %v412 = vld [vmem:[%s0 + $0x90] sm:$0xff]
        %v413 = vld [vmem:[%s0 + $0x98] sm:$0xff]
        %v414 = vld [vmem:[%s0 + $0xa0] sm:$0xff]
        %v415 = vld [vmem:[%s0 + $0xa8] sm:$0xff]
        %v416 = vld [vmem:[%s0 + $0xb0] sm:$0xff]
        %v417 = vld [vmem:[%s0 + $0xb8] sm:$0xff]
        %v418 = vld [vmem:[%s0 + $0xc0] sm:$0xff]
        %v419 = vld [vmem:[%s0 + $0xc8] sm:$0xff]
        %v420 = vld [vmem:[%s0 + $0xd0] sm:$0xff]
        %v421 = vld [vmem:[%s0 + $0xd8] sm:$0xff]
        %v422 = vld [vmem:[%s0 + $0xe0] sm:$0xff]
        %v423 = vld [vmem:[%s0 + $0xe8] sm:$0xff]
        %v424 = vld [vmem:[%s0 + $0xf0] sm:$0xff]
        %v425 = vld [vmem:[%s0 + $0xf8] sm:$0xff]
        %v426 = vld [vmem:[%s0 + $0x100] sm:$0xff]
        %v427 = vld [vmem:[%s0 + $0x108] sm:$0xff]
        %v428 = vld [vmem:[%s0 + $0x110] sm:$0xff]
        %v429 = vld [vmem:[%s0 + $0x118] sm:$0xff]
        %v430 = vld [vmem:[%s308] sm:$0xff]
        %v431 = vld [vmem:[%s308 + $0x8] sm:$0xff]
        %v432 = vld [vmem:[%s308 + $0x10] sm:$0xff]
        %v433 = vld [vmem:[%s308 + $0x18] sm:$0xff]
        %v434 = vld [vmem:[%s308 + $0x20] sm:$0xff]
        %v435 = vld [vmem:[%s308 + $0x28] sm:$0xff]
        %v436 = vld [vmem:[%s308 + $0x30] sm:$0xff]
        %v437 = vld [vmem:[%s308 + $0x38] sm:$0xff]
        %v438 = vld [vmem:[%s308 + $0x40] sm:$0xff]
        %v439 = vld [vmem:[%s308 + $0x48] sm:$0xff]
        %v440 = vld [vmem:[%s308 + $0x50] sm:$0xff]
        %v441 = vld [vmem:[%s308 + $0x58] sm:$0xff]
        %v442 = vld [vmem:[%s308 + $0x60] sm:$0xff]
        %v443 = vld [vmem:[%s308 + $0x68] sm:$0xff]
        %v444 = vld [vmem:[%s308 + $0x70] sm:$0xff]
        %v445 = vld [vmem:[%s308 + $0x78] sm:$0xff]
        %v446 = vld [vmem:[%s308 + $0x80] sm:$0xff]
        %v447 = vld [vmem:[%s308 + $0x88] sm:$0xff]
        %v448 = vld [vmem:[%s308 + $0x90] sm:$0xff]
        %v449 = vld [vmem:[%s308 + $0x98] sm:$0xff]
        %v450 = vld [vmem:[%s308 + $0xa0] sm:$0xff]
        %v451 = vld [vmem:[%s308 + $0xa8] sm:$0xff]
        %v452 = vld [vmem:[%s308 + $0xb0] sm:$0xff]
        %v453 = vld [vmem:[%s308 + $0xb8] sm:$0xff]
        %v454 = vld [vmem:[%s308 + $0xc0] sm:$0xff]
        %v455 = vld [vmem:[%s308 + $0xc8] sm:$0xff]
        %v456 = vld [vmem:[%s308 + $0xd0] sm:$0xff]
        %v457 = vld [vmem:[%s308 + $0xd8] sm:$0xff]
        %v458 = vld [vmem:[%s308 + $0xe0] sm:$0xff]
        %v459 = vld [vmem:[%s308 + $0xe8] sm:$0xff]
        %v460 = vld [vmem:[%s308 + $0xf0] sm:$0xff]
        %v461 = vld [vmem:[%s308 + $0xf8] sm:$0xff]
        %v462 = vld [vmem:[%s308 + $0x100] sm:$0xff]
        %v463 = vld [vmem:[%s308 + $0x108] sm:$0xff]
        %v464 = vld [vmem:[%s308 + $0x110] sm:$0xff]
        %v465 = vld [vmem:[%s308 + $0x118] sm:$0xff]
        %v466 = vld [vmem:[%s308 + $0x120] sm:$0xff]
        %v467 = vld [vmem:[%s308 + $0x128] sm:$0xff]
        %v468 = vld [vmem:[%s308 + $0x130] sm:$0xff]
        %v469 = vld [vmem:[%s308 + $0x138] sm:$0xff]
        %v470 = vld [vmem:[%s308 + $0x140] sm:$0xff]
        %v471 = vld [vmem:[%s308 + $0x148] sm:$0xff]
        %v472 = vld [vmem:[%s308 + $0x150] sm:$0xff]
        %v473 = vld [vmem:[%s308 + $0x158] sm:$0xff]
        %v474 = vld [vmem:[%s308 + $0x160] sm:$0xff]
        %v475 = vld [vmem:[%s308 + $0x168] sm:$0xff]
        %v476 = vld [vmem:[%s308 + $0x170] sm:$0xff]
        %v477 = vld [vmem:[%s308 + $0x178] sm:$0xff]
        %v478 = vld [vmem:[%s308 + $0x180] sm:$0xff]
        %v479 = vld [vmem:[%s308 + $0x188] sm:$0xff]
        %v480 = vld [vmem:[%s308 + $0x190] sm:$0xff]
        %v481 = vld [vmem:[%s308 + $0x198] sm:$0xff]
        %v482 = vld [vmem:[%s308 + $0x1a0] sm:$0xff]
        %v483 = vld [vmem:[%s308 + $0x1a8] sm:$0xff]
        %v484 = vld [vmem:[%s308 + $0x1b0] sm:$0xff]
        %v485 = vld [vmem:[%s308 + $0x1b8] sm:$0xff]
        %v486 = vld [vmem:[%s308 + $0x1c0] sm:$0xff]
        %v487 = vld [vmem:[%s308 + $0x1c8] sm:$0xff]
        %v488 = vld [vmem:[%s308 + $0x1d0] sm:$0xff]
        %v489 = vld [vmem:[%s308 + $0x1d8] sm:$0xff]
        %v490 = vld [vmem:[%s308 + $0x1e0] sm:$0xff]
        %v491 = vld [vmem:[%s308 + $0x1e8] sm:$0xff]
        %v492 = vld [vmem:[%s308 + $0x1f0] sm:$0xff]
        %v493 = vld [vmem:[%s308 + $0x1f8] sm:$0xff]
        %v494 = vld [vmem:[%s308 + $0x200] sm:$0xff]
        %v495 = vld [vmem:[%s308 + $0x208] sm:$0xff]
        %v496 = vld [vmem:[%s308 + $0x210] sm:$0xff]
        %v497 = vld [vmem:[%s308 + $0x218] sm:$0xff]
        %v498 = vld [vmem:[%s308 + $0x220] sm:$0xff]
        %v499 = vld [vmem:[%s308 + $0x228] sm:$0xff]
        %v500 = vld [vmem:[%s308 + $0x230] sm:$0xff]
        %v501 = vld [vmem:[%s308 + $0x238] sm:$0xff]
        %v502 = vld [vmem:[%s308 + $0x240] sm:$0xff]
        %v503 = vld [vmem:[%s308 + $0x248] sm:$0xff]
        %v504 = vld [vmem:[%s308 + $0x250] sm:$0xff]
        %v505 = vld [vmem:[%s308 + $0x258] sm:$0xff]
        %v506 = vld [vmem:[%s308 + $0x260] sm:$0xff]
        %v507 = vld [vmem:[%s308 + $0x268] sm:$0xff]
        %v508 = vld [vmem:[%s308 + $0x270] sm:$0xff]
        %v509 = vld [vmem:[%s308 + $0x278] sm:$0xff]
        %v510 = vld [vmem:[%s308 + $0x280] sm:$0xff]
        %v511 = vld [vmem:[%s308 + $0x288] sm:$0xff]
        %v512 = vld [vmem:[%s308 + $0x290] sm:$0xff]
        %v513 = vld [vmem:[%s308 + $0x298] sm:$0xff]
        %v514 = vld [vmem:[%s308 + $0x2a0] sm:$0xff]
        %v515 = vld [vmem:[%s308 + $0x2a8] sm:$0xff]
        %v516 = vld [vmem:[%s308 + $0x2b0] sm:$0xff]
        %v517 = vld [vmem:[%s308 + $0x2b8] sm:$0xff]
        %v518 = vld [vmem:[%s308 + $0x2c0] sm:$0xff]
        %v519 = vld [vmem:[%s308 + $0x2c8] sm:$0xff]
        %v520 = vld [vmem:[%s308 + $0x2d0] sm:$0xff]
        %v521 = vld [vmem:[%s308 + $0x2d8] sm:$0xff]
        %v522 = vld [vmem:[%s308 + $0x2e0] sm:$0xff]
        %v523 = vld [vmem:[%s308 + $0x2e8] sm:$0xff]
        %v524 = vld [vmem:[%s308 + $0x2f0] sm:$0xff]
        %v525 = vld [vmem:[%s308 + $0x2f8] sm:$0xff]
        %v526 = vld [vmem:[%s308 + $0x300] sm:$0xff]
        %v527 = vld [vmem:[%s308 + $0x308] sm:$0xff]
        %v528 = vld [vmem:[%s308 + $0x310] sm:$0xff]
        %v529 = vld [vmem:[%s308 + $0x318] sm:$0xff]
        %v530 = vld [vmem:[%s308 + $0x320] sm:$0xff]
        %v531 = vld [vmem:[%s308 + $0x328] sm:$0xff]
        %v532 = vld [vmem:[%s308 + $0x330] sm:$0xff]
        %v533 = vld [vmem:[%s308 + $0x338] sm:$0xff]
        %v534 = vld [vmem:[%s308 + $0x340] sm:$0xff]
        %v535 = vld [vmem:[%s308 + $0x348] sm:$0xff]
        %v536 = vld [vmem:[%s308 + $0x350] sm:$0xff]
        %v537 = vld [vmem:[%s308 + $0x358] sm:$0xff]
        %v538 = vld [vmem:[%s308 + $0x360] sm:$0xff]
        %v539 = vld [vmem:[%s308 + $0x368] sm:$0xff]
        %v540 = vld [vmem:[%s308 + $0x370] sm:$0xff]
        %v541 = vld [vmem:[%s308 + $0x378] sm:$0xff]
        %v542 = vld [vmem:[%s308 + $0x380] sm:$0xff]
        %v543 = vld [vmem:[%s308 + $0x388] sm:$0xff]
        %v544 = vld [vmem:[%s308 + $0x390] sm:$0xff]
        %v545 = vld [vmem:[%s308 + $0x398] sm:$0xff]
        %v546 = vld [vmem:[%s308 + $0x3a0] sm:$0xff]
        %v547 = vld [vmem:[%s308 + $0x3a8] sm:$0xff]
        %v548 = vld [vmem:[%s308 + $0x3b0] sm:$0xff]
        %v549 = vld [vmem:[%s308 + $0x3b8] sm:$0xff]
        %v550 = vld [vmem:[%s308 + $0x3c0] sm:$0xff]
        %v551 = vld [vmem:[%s308 + $0x3c8] sm:$0xff]
        %v552 = vld [vmem:[%s308 + $0x3d0] sm:$0xff]
        %v553 = vld [vmem:[%s308 + $0x3d8] sm:$0xff]
        %v554 = vld [vmem:[%s308 + $0x3e0] sm:$0xff]
        %v555 = vld [vmem:[%s308 + $0x3e8] sm:$0xff]
        %v556 = vld [vmem:[%s308 + $0x3f0] sm:$0xff]
        %v557 = vld [vmem:[%s308 + $0x3f8] sm:$0xff]
        %v558 = vld [vmem:[%s308 + $0x400] sm:$0xff]
        %v559 = vld [vmem:[%s308 + $0x408] sm:$0xff]
        %v560 = vld [vmem:[%s308 + $0x410] sm:$0xff]
        %v561 = vld [vmem:[%s308 + $0x418] sm:$0xff]
        %v562 = vld [vmem:[%s308 + $0x420] sm:$0xff]
        %v563 = vld [vmem:[%s308 + $0x428] sm:$0xff]
        %v564 = vld [vmem:[%s308 + $0x430] sm:$0xff]
        %v565 = vld [vmem:[%s308 + $0x438] sm:$0xff]
        %v566 = vld [vmem:[%s308 + $0x440] sm:$0xff]
        %v567 = vld [vmem:[%s308 + $0x448] sm:$0xff]
        %v568 = vld [vmem:[%s308 + $0x450] sm:$0xff]
        %v569 = vld [vmem:[%s308 + $0x458] sm:$0xff]
        %v570 = vld [vmem:[%s308 + $0x460] sm:$0xff]
        %v571 = vld [vmem:[%s308 + $0x468] sm:$0xff]
        %v572 = vld [vmem:[%s308 + $0x470] sm:$0xff]
        %v573 = vld [vmem:[%s308 + $0x478] sm:$0xff]
        %v574 = vld [vmem:[%s308 + $0x480] sm:$0xff]
        %v575 = vld [vmem:[%s308 + $0x488] sm:$0xff]
        %v576 = vld [vmem:[%s308 + $0x490] sm:$0xff]
        %v577 = vld [vmem:[%s308 + $0x498] sm:$0xff]
        %v578 = vld [vmem:[%s308 + $0x4a0] sm:$0xff]
        %v579 = vld [vmem:[%s308 + $0x4a8] sm:$0xff]
        %v580 = vld [vmem:[%s308 + $0x4b0] sm:$0xff]
        %v581 = vld [vmem:[%s308 + $0x4b8] sm:$0xff]
        %v582 = vld [vmem:[%s308 + $0x4c0] sm:$0xff]
        %v583 = vld [vmem:[%s308 + $0x4c8] sm:$0xff]
        %v584 = vld [vmem:[%s308 + $0x4d0] sm:$0xff]
        %v585 = vld [vmem:[%s308 + $0x4d8] sm:$0xff]
        %v586 = vld [vmem:[%s308 + $0x4e0] sm:$0xff]
        %v587 = vld [vmem:[%s308 + $0x4e8] sm:$0xff]
        %v588 = vld [vmem:[%s308 + $0x4f0] sm:$0xff]
        %v589 = vld [vmem:[%s308 + $0x4f8] sm:$0xff]
        %v590 = vld [vmem:[%s308 + $0x500] sm:$0xff]
        %v591 = vld [vmem:[%s308 + $0x508] sm:$0xff]
        %v592 = vld [vmem:[%s308 + $0x510] sm:$0xff]
        %v593 = vld [vmem:[%s308 + $0x518] sm:$0xff]
        %v594 = vld [vmem:[%s308 + $0x520] sm:$0xff]
        %v595 = vld [vmem:[%s308 + $0x528] sm:$0xff]
        %v596 = vld [vmem:[%s308 + $0x530] sm:$0xff]
        %v597 = vld [vmem:[%s308 + $0x538] sm:$0xff]
        %v598 = vld [vmem:[%s308 + $0x540] sm:$0xff]
        %v599 = vld [vmem:[%s308 + $0x548] sm:$0xff]
        %v600 = vld [vmem:[%s308 + $0x550] sm:$0xff]
        %v601 = vld [vmem:[%s308 + $0x558] sm:$0xff]
        %v602 = vld [vmem:[%s308 + $0x560] sm:$0xff]
        %v603 = vld [vmem:[%s308 + $0x568] sm:$0xff]
        %v604 = vld [vmem:[%s308 + $0x570] sm:$0xff]
        %v605 = vld [vmem:[%s308 + $0x578] sm:$0xff]
        %v606 = vld [vmem:[%s308 + $0x580] sm:$0xff]
        %v607 = vld [vmem:[%s308 + $0x588] sm:$0xff]
        %v608 = vld [vmem:[%s308 + $0x590] sm:$0xff]
        %v609 = vld [vmem:[%s308 + $0x598] sm:$0xff]
        %v610 = vld [vmem:[%s308 + $0x5a0] sm:$0xff]
        %v611 = vld [vmem:[%s308 + $0x5a8] sm:$0xff]
        %v612 = vld [vmem:[%s308 + $0x5b0] sm:$0xff]
        %v613 = vld [vmem:[%s308 + $0x5b8] sm:$0xff]
        %v614 = vld [vmem:[%s308 + $0x5c0] sm:$0xff]
        %v615 = vld [vmem:[%s308 + $0x5c8] sm:$0xff]
        %v616 = vld [vmem:[%s308 + $0x5d0] sm:$0xff]
        %v617 = vld [vmem:[%s308 + $0x5d8] sm:$0xff]
        %v618 = vld [vmem:[%s308 + $0x5e0] sm:$0xff]
        %v619 = vld [vmem:[%s308 + $0x5e8] sm:$0xff]
        %v620 = vld [vmem:[%s308 + $0x5f0] sm:$0xff]
        %v621 = vld [vmem:[%s308 + $0x5f8] sm:$0xff]
        %v622 = vld [vmem:[%s308 + $0x600] sm:$0xff]
        %v623 = vld [vmem:[%s308 + $0x608] sm:$0xff]
        %v624 = vld [vmem:[%s308 + $0x610] sm:$0xff]
        %v625 = vld [vmem:[%s308 + $0x618] sm:$0xff]
        %v626 = vld [vmem:[%s308 + $0x620] sm:$0xff]
        %v627 = vld [vmem:[%s308 + $0x628] sm:$0xff]
        %v628 = vld [vmem:[%s308 + $0x630] sm:$0xff]
        %v629 = vld [vmem:[%s308 + $0x638] sm:$0xff]
        %v630 = vld [vmem:[%s308 + $0x640] sm:$0xff]
        %v631 = vld [vmem:[%s308 + $0x648] sm:$0xff]
        %v632 = vld [vmem:[%s308 + $0x650] sm:$0xff]
        %v633 = vld [vmem:[%s308 + $0x658] sm:$0xff]
        %v634 = vld [vmem:[%s308 + $0x660] sm:$0xff]
        %v635 = vld [vmem:[%s308 + $0x668] sm:$0xff]
        %v636 = vld [vmem:[%s308 + $0x670] sm:$0xff]
        %v637 = vld [vmem:[%s308 + $0x678] sm:$0xff]
        %v638 = vld [vmem:[%s308 + $0x680] sm:$0xff]
        %v639 = vld [vmem:[%s308 + $0x688] sm:$0xff]
        %v640 = vld [vmem:[%s308 + $0x690] sm:$0xff]
        %v641 = vld [vmem:[%s308 + $0x698] sm:$0xff]
        %v642 = vld [vmem:[%s308 + $0x6a0] sm:$0xff]
        %v643 = vld [vmem:[%s308 + $0x6a8] sm:$0xff]
        %v644 = vld [vmem:[%s308 + $0x6b0] sm:$0xff]
        %v645 = vld [vmem:[%s308 + $0x6b8] sm:$0xff]
        %v646 = vld [vmem:[%s308 + $0x6c0] sm:$0xff]
        %v647 = vld [vmem:[%s308 + $0x6c8] sm:$0xff]
        %v648 = vld [vmem:[%s308 + $0x6d0] sm:$0xff]
        %v649 = vld [vmem:[%s308 + $0x6d8] sm:$0xff]
        %v650 = vld [vmem:[%s308 + $0x6e0] sm:$0xff]
        %v651 = vld [vmem:[%s308 + $0x6e8] sm:$0xff]
        %v652 = vld [vmem:[%s308 + $0x6f0] sm:$0xff]
        %v653 = vld [vmem:[%s308 + $0x6f8] sm:$0xff]
        %v654 = vld [vmem:[%s308 + $0x700] sm:$0xff]
        %v655 = vld [vmem:[%s308 + $0x708] sm:$0xff]
        %v656 = vld [vmem:[%s308 + $0x710] sm:$0xff]
        %v657 = vld [vmem:[%s308 + $0x718] sm:$0xff]
        %v658 = vld [vmem:[%s308 + $0x720] sm:$0xff]
        %v659 = vld [vmem:[%s308 + $0x728] sm:$0xff]
        %v660 = vld [vmem:[%s308 + $0x730] sm:$0xff]
        %v661 = vld [vmem:[%s308 + $0x738] sm:$0xff]
        %v662 = vld [vmem:[%s308 + $0x740] sm:$0xff]
        %v663 = vld [vmem:[%s308 + $0x748] sm:$0xff]
        %v664 = vld [vmem:[%s308 + $0x750] sm:$0xff]
        %v665 = vld [vmem:[%s308 + $0x758] sm:$0xff]
        %v666 = vld [vmem:[%s308 + $0x760] sm:$0xff]
        %v667 = vld [vmem:[%s308 + $0x768] sm:$0xff]
        %v668 = vld [vmem:[%s308 + $0x770] sm:$0xff]
        %v669 = vld [vmem:[%s308 + $0x778] sm:$0xff]
        %v670 = vld [vmem:[%s308 + $0x780] sm:$0xff]
        %v671 = vld [vmem:[%s308 + $0x788] sm:$0xff]
        %v672 = vld [vmem:[%s308 + $0x790] sm:$0xff]
        %v673 = vld [vmem:[%s308 + $0x798] sm:$0xff]
        %v674 = vld [vmem:[%s308 + $0x7a0] sm:$0xff]
        %v675 = vld [vmem:[%s308 + $0x7a8] sm:$0xff]
        %v676 = vld [vmem:[%s308 + $0x7b0] sm:$0xff]
        %v677 = vld [vmem:[%s308 + $0x7b8] sm:$0xff]
        %v678 = vld [vmem:[%s308 + $0x7c0] sm:$0xff]
        %v679 = vld [vmem:[%s308 + $0x7c8] sm:$0xff]
        %v680 = vld [vmem:[%s308 + $0x7d0] sm:$0xff]
        %v681 = vld [vmem:[%s308 + $0x7d8] sm:$0xff]
        %v682 = vld [vmem:[%s308 + $0x7e0] sm:$0xff]
        %v683 = vld [vmem:[%s308 + $0x7e8] sm:$0xff]
        %v684 = vld [vmem:[%s308 + $0x7f0] sm:$0xff]
        %v685 = vld [vmem:[%s308 + $0x7f8] sm:$0xff]
        %v686 = vld [vmem:[%s308 + $0x800] sm:$0xff]
        %v687 = vld [vmem:[%s308 + $0x808] sm:$0xff]
        %v688 = vld [vmem:[%s308 + $0x810] sm:$0xff]
        %v689 = vld [vmem:[%s308 + $0x818] sm:$0xff]
        %v690 = vld [vmem:[%s308 + $0x820] sm:$0xff]
        %v691 = vld [vmem:[%s308 + $0x828] sm:$0xff]
        %v692 = vld [vmem:[%s308 + $0x830] sm:$0xff]
        %v693 = vld [vmem:[%s308 + $0x838] sm:$0xff]
        %v694 = vld [vmem:[%s308 + $0x840] sm:$0xff]
        %v695 = vld [vmem:[%s308 + $0x848] sm:$0xff]
        %v696 = vld [vmem:[%s308 + $0x850] sm:$0xff]
        %v697 = vld [vmem:[%s308 + $0x858] sm:$0xff]
        %v698 = vld [vmem:[%s308 + $0x860] sm:$0xff]
        %v699 = vld [vmem:[%s308 + $0x868] sm:$0xff]
        %v700 = vld [vmem:[%s308 + $0x870] sm:$0xff]
        %v701 = vld [vmem:[%s308 + $0x878] sm:$0xff]
        %v702 = vld [vmem:[%s308 + $0x880] sm:$0xff]
        %v703 = vld [vmem:[%s308 + $0x888] sm:$0xff]
        %v704 = vld [vmem:[%s308 + $0x890] sm:$0xff]
        %v705 = vld [vmem:[%s308 + $0x898] sm:$0xff]
        %v706 = vld [vmem:[%s308 + $0x8a0] sm:$0xff]
        %v707 = vld [vmem:[%s308 + $0x8a8] sm:$0xff]
        %v708 = vld [vmem:[%s308 + $0x8b0] sm:$0xff]
        %v709 = vld [vmem:[%s308 + $0x8b8] sm:$0xff]
        %v710 = vld [vmem:[%s308 + $0x8c0] sm:$0xff]
        %v711 = vld [vmem:[%s308 + $0x8c8] sm:$0xff]
        %v712 = vld [vmem:[%s308 + $0x8d0] sm:$0xff]
        %v713 = vld [vmem:[%s308 + $0x8d8] sm:$0xff]
        %v714 = vld [vmem:[%s308 + $0x8e0] sm:$0xff]
        %v715 = vld [vmem:[%s308 + $0x8e8] sm:$0xff]
        %v716 = vld [vmem:[%s308 + $0x8f0] sm:$0xff]
        %v717 = vld [vmem:[%s308 + $0x8f8] sm:$0xff]
        %v718 = vld [vmem:[%s308 + $0x900] sm:$0xff]
        %v719 = vld [vmem:[%s308 + $0x908] sm:$0xff]
        %v720 = vld [vmem:[%s308 + $0x910] sm:$0xff]
        %v721 = vld [vmem:[%s308 + $0x918] sm:$0xff]
        %v722 = vld [vmem:[%s308 + $0x920] sm:$0xff]
        %v723 = vld [vmem:[%s308 + $0x928] sm:$0xff]
        %v724 = vld [vmem:[%s308 + $0x930] sm:$0xff]
        %v725 = vld [vmem:[%s308 + $0x938] sm:$0xff]
        %v726 = vld [vmem:[%s308 + $0x940] sm:$0xff]
        %v727 = vld [vmem:[%s308 + $0x948] sm:$0xff]
        %v728 = vld [vmem:[%s308 + $0x950] sm:$0xff]
        %v729 = vld [vmem:[%s308 + $0x958] sm:$0xff]
        %v730 = vld [vmem:[%s308 + $0x960] sm:$0xff]
        %v731 = vld [vmem:[%s308 + $0x968] sm:$0xff]
        %v732 = vld [vmem:[%s308 + $0x970] sm:$0xff]
        %v733 = vld [vmem:[%s308 + $0x978] sm:$0xff]
        %v734 = vld [vmem:[%s308 + $0x980] sm:$0xff]
        %v735 = vld [vmem:[%s308 + $0x988] sm:$0xff]
        %v736 = vld [vmem:[%s308 + $0x990] sm:$0xff]
        %v737 = vld [vmem:[%s308 + $0x998] sm:$0xff]
        %v738 = vld [vmem:[%s308 + $0x9a0] sm:$0xff]
        %v739 = vld [vmem:[%s308 + $0x9a8] sm:$0xff]
        %v740 = vld [vmem:[%s308 + $0x9b0] sm:$0xff]
        %v741 = vld [vmem:[%s308 + $0x9b8] sm:$0xff]
        %v742 = vld [vmem:[%s308 + $0x9c0] sm:$0xff]
        %v743 = vld [vmem:[%s308 + $0x9c8] sm:$0xff]
        %v744 = vld [vmem:[%s308 + $0x9d0] sm:$0xff]
        %v745 = vld [vmem:[%s308 + $0x9d8] sm:$0xff]
        %v746 = vld [vmem:[%s308 + $0x9e0] sm:$0xff]
        %v747 = vld [vmem:[%s308 + $0x9e8] sm:$0xff]
        %v748 = vld [vmem:[%s308 + $0x9f0] sm:$0xff]
        %v749 = vld [vmem:[%s308 + $0x9f8] sm:$0xff]
        %v750 = vld [vmem:[%s308 + $0xa00] sm:$0xff]
        %v751 = vld [vmem:[%s308 + $0xa08] sm:$0xff]
        %v752 = vld [vmem:[%s308 + $0xa10] sm:$0xff]
        %v753 = vld [vmem:[%s308 + $0xa18] sm:$0xff]
        %v754 = vld [vmem:[%s308 + $0xa20] sm:$0xff]
        %v755 = vld [vmem:[%s308 + $0xa28] sm:$0xff]
        %v756 = vld [vmem:[%s308 + $0xa30] sm:$0xff]
        %v757 = vld [vmem:[%s308 + $0xa38] sm:$0xff]
        %v758 = vld [vmem:[%s308 + $0xa40] sm:$0xff]
        %v759 = vld [vmem:[%s308 + $0xa48] sm:$0xff]
        %v760 = vld [vmem:[%s308 + $0xa50] sm:$0xff]
        %v761 = vld [vmem:[%s308 + $0xa58] sm:$0xff]
        %v762 = vld [vmem:[%s308 + $0xa60] sm:$0xff]
        %v763 = vld [vmem:[%s308 + $0xa68] sm:$0xff]
        %v764 = vld [vmem:[%s308 + $0xa70] sm:$0xff]
        %v765 = vld [vmem:[%s308 + $0xa78] sm:$0xff]
        %v766 = vld [vmem:[%s308 + $0xa80] sm:$0xff]
        %v767 = vld [vmem:[%s308 + $0xa88] sm:$0xff]
        %v768 = vld [vmem:[%s308 + $0xa90] sm:$0xff]
        %v769 = vld [vmem:[%s308 + $0xa98] sm:$0xff]
        %v770 = vld [vmem:[%s308 + $0xaa0] sm:$0xff]
        %v771 = vld [vmem:[%s308 + $0xaa8] sm:$0xff]
        %v772 = vld [vmem:[%s308 + $0xab0] sm:$0xff]
        %v773 = vld [vmem:[%s308 + $0xab8] sm:$0xff]
        %v774 = vld [vmem:[%s308 + $0xac0] sm:$0xff]
        %v775 = vld [vmem:[%s308 + $0xac8] sm:$0xff]
        %v776 = vld [vmem:[%s308 + $0xad0] sm:$0xff]
        %v777 = vld [vmem:[%s308 + $0xad8] sm:$0xff]
        %v778 = vld [vmem:[%s308 + $0xae0] sm:$0xff]
        %v779 = vld [vmem:[%s308 + $0xae8] sm:$0xff]
        %v780 = vld [vmem:[%s308 + $0xaf0] sm:$0xff]
        %v781 = vld [vmem:[%s308 + $0xaf8] sm:$0xff]
        %v782 = vld [vmem:[%s308 + $0xb00] sm:$0xff]
        %v783 = vld [vmem:[%s308 + $0xb08] sm:$0xff]
        %v784 = vld [vmem:[%s308 + $0xb10] sm:$0xff]
        %v785 = vld [vmem:[%s308 + $0xb18] sm:$0xff]
        %v786 = vld [vmem:[%s308 + $0xb20] sm:$0xff]
        %v787 = vld [vmem:[%s308 + $0xb28] sm:$0xff]
        %v788 = vld [vmem:[%s308 + $0xb30] sm:$0xff]
        %v789 = vld [vmem:[%s308 + $0xb38] sm:$0xff]
        %v790 = vld [vmem:[%s308 + $0xb40] sm:$0xff]
        %v791 = vld [vmem:[%s308 + $0xb48] sm:$0xff]
        %v792 = vld [vmem:[%s308 + $0xb50] sm:$0xff]
        %v793 = vld [vmem:[%s308 + $0xb58] sm:$0xff]
        %v794 = vld [vmem:[%s308 + $0xb60] sm:$0xff]
        %v795 = vld [vmem:[%s308 + $0xb68] sm:$0xff]
        %v796 = vld [vmem:[%s308 + $0xb70] sm:$0xff]
        %v797 = vld [vmem:[%s308 + $0xb78] sm:$0xff]
        %v798 = vld [vmem:[%s308 + $0xb80] sm:$0xff]
        %v799 = vld [vmem:[%s308 + $0xb88] sm:$0xff]
        %v800 = vld [vmem:[%s308 + $0xb90] sm:$0xff]
        %v801 = vld [vmem:[%s308 + $0xb98] sm:$0xff]
        %v802 = vld [vmem:[%s308 + $0xba0] sm:$0xff]
        %v803 = vld [vmem:[%s308 + $0xba8] sm:$0xff]
        %v804 = vld [vmem:[%s308 + $0xbb0] sm:$0xff]
        %v805 = vld [vmem:[%s308 + $0xbb8] sm:$0xff]
        %v806 = vld [vmem:[%s308 + $0xbc0] sm:$0xff]
        %v807 = vld [vmem:[%s308 + $0xbc8] sm:$0xff]
        %v808 = vld [vmem:[%s308 + $0xbd0] sm:$0xff]
        %v809 = vld [vmem:[%s308 + $0xbd8] sm:$0xff]
        %v810 = vld [vmem:[%s308 + $0xbe0] sm:$0xff]
        %v811 = vld [vmem:[%s308 + $0xbe8] sm:$0xff]
        %v812 = vld [vmem:[%s308 + $0xbf0] sm:$0xff]
        %v813 = vld [vmem:[%s308 + $0xbf8] sm:$0xff]
        %v814 = vld [vmem:[%s308 + $0xc00] sm:$0xff]
        %v815 = vld [vmem:[%s308 + $0xc08] sm:$0xff]
        %v816 = vld [vmem:[%s308 + $0xc10] sm:$0xff]
        %v817 = vld [vmem:[%s308 + $0xc18] sm:$0xff]
        %v818 = vld [vmem:[%s308 + $0xc20] sm:$0xff]
        %v819 = vld [vmem:[%s308 + $0xc28] sm:$0xff]
        %v820 = vld [vmem:[%s308 + $0xc30] sm:$0xff]
        %v821 = vld [vmem:[%s308 + $0xc38] sm:$0xff]
        %v822 = vld [vmem:[%s308 + $0xc40] sm:$0xff]
        %v823 = vld [vmem:[%s308 + $0xc48] sm:$0xff]
        %v824 = vld [vmem:[%s308 + $0xc50] sm:$0xff]
        %v825 = vld [vmem:[%s308 + $0xc58] sm:$0xff]
        %v826 = vld [vmem:[%s308 + $0xc60] sm:$0xff]
        %v827 = vld [vmem:[%s308 + $0xc68] sm:$0xff]
        %v828 = vld [vmem:[%s308 + $0xc70] sm:$0xff]
        %v829 = vld [vmem:[%s308 + $0xc78] sm:$0xff]
        %v830 = vld [vmem:[%s308 + $0xc80] sm:$0xff]
        %v831 = vld [vmem:[%s308 + $0xc88] sm:$0xff]
        %v832 = vld [vmem:[%s308 + $0xc90] sm:$0xff]
        %v833 = vld [vmem:[%s308 + $0xc98] sm:$0xff]
        %v834 = vld [vmem:[%s308 + $0xca0] sm:$0xff]
        %v835 = vld [vmem:[%s308 + $0xca8] sm:$0xff]
        %v836 = vld [vmem:[%s308 + $0xcb0] sm:$0xff]
        %v837 = vld [vmem:[%s308 + $0xcb8] sm:$0xff]
        %v838 = vld [vmem:[%s308 + $0xcc0] sm:$0xff]
        %v839 = vld [vmem:[%s308 + $0xcc8] sm:$0xff]
        %v840 = vld [vmem:[%s308 + $0xcd0] sm:$0xff]
        %v841 = vld [vmem:[%s308 + $0xcd8] sm:$0xff]
        %v842 = vld [vmem:[%s308 + $0xce0] sm:$0xff]
        %v843 = vld [vmem:[%s308 + $0xce8] sm:$0xff]
        %v844 = vld [vmem:[%s308 + $0xcf0] sm:$0xff]
        %v845 = vld [vmem:[%s308 + $0xcf8] sm:$0xff]
        %v846 = vld [vmem:[%s308 + $0xd00] sm:$0xff]
        %v847 = vld [vmem:[%s308 + $0xd08] sm:$0xff]
        %v848 = vld [vmem:[%s308 + $0xd10] sm:$0xff]
        %v849 = vld [vmem:[%s308 + $0xd18] sm:$0xff]
        %v850 = vld [vmem:[%s308 + $0xd20] sm:$0xff]
        %v851 = vld [vmem:[%s308 + $0xd28] sm:$0xff]
        %v852 = vld [vmem:[%s308 + $0xd30] sm:$0xff]
        %v853 = vld [vmem:[%s308 + $0xd38] sm:$0xff]
        %v854 = vld [vmem:[%s308 + $0xd40] sm:$0xff]
        %v855 = vld [vmem:[%s308 + $0xd48] sm:$0xff]
        %v856 = vld [vmem:[%s308 + $0xd50] sm:$0xff]
        %v857 = vld [vmem:[%s308 + $0xd58] sm:$0xff]
        %v858 = vld [vmem:[%s308 + $0xd60] sm:$0xff]
        %v859 = vld [vmem:[%s308 + $0xd68] sm:$0xff]
        %v860 = vld [vmem:[%s308 + $0xd70] sm:$0xff]
        %v861 = vld [vmem:[%s308 + $0xd78] sm:$0xff]
        %v862 = vld [vmem:[%s308 + $0xd80] sm:$0xff]
        %v863 = vld [vmem:[%s308 + $0xd88] sm:$0xff]
        %v864 = vld [vmem:[%s308 + $0xd90] sm:$0xff]
        %v865 = vld [vmem:[%s308 + $0xd98] sm:$0xff]
        %v866 = vld [vmem:[%s308 + $0xda0] sm:$0xff]
        %v867 = vld [vmem:[%s308 + $0xda8] sm:$0xff]
        %v868 = vld [vmem:[%s308 + $0xdb0] sm:$0xff]
        %v869 = vld [vmem:[%s308 + $0xdb8] sm:$0xff]
        %v870 = vld [vmem:[%s308 + $0xdc0] sm:$0xff]
        %v871 = vld [vmem:[%s308 + $0xdc8] sm:$0xff]
        %v872 = vld [vmem:[%s308 + $0xdd0] sm:$0xff]
        %v873 = vld [vmem:[%s308 + $0xdd8] sm:$0xff]
        %v874 = vld [vmem:[%s308 + $0xde0] sm:$0xff]
        %v875 = vld [vmem:[%s308 + $0xde8] sm:$0xff]
        %v876 = vld [vmem:[%s308 + $0xdf0] sm:$0xff]
        %v877 = vld [vmem:[%s308 + $0xdf8] sm:$0xff]
        %v878 = vld [vmem:[%s308 + $0xe00] sm:$0xff]
        %v879 = vld [vmem:[%s308 + $0xe08] sm:$0xff]
        %v880 = vld [vmem:[%s308 + $0xe10] sm:$0xff]
        %v881 = vld [vmem:[%s308 + $0xe18] sm:$0xff]
        %v882 = vld [vmem:[%s308 + $0xe20] sm:$0xff]
        %v883 = vld [vmem:[%s308 + $0xe28] sm:$0xff]
        %v884 = vld [vmem:[%s308 + $0xe30] sm:$0xff]
        %v885 = vld [vmem:[%s308 + $0xe38] sm:$0xff]
        %v886 = vld [vmem:[%s308 + $0xe40] sm:$0xff]
        %v887 = vld [vmem:[%s308 + $0xe48] sm:$0xff]
        %v888 = vld [vmem:[%s308 + $0xe50] sm:$0xff]
        %v889 = vld [vmem:[%s308 + $0xe58] sm:$0xff]
        %v890 = vld [vmem:[%s308 + $0xe60] sm:$0xff]
        %v891 = vld [vmem:[%s308 + $0xe68] sm:$0xff]
        %v892 = vld [vmem:[%s308 + $0xe70] sm:$0xff]
        %v893 = vld [vmem:[%s308 + $0xe78] sm:$0xff]
        %v894 = vld [vmem:[%s308 + $0xe80] sm:$0xff]
        %v895 = vld [vmem:[%s308 + $0xe88] sm:$0xff]
        %v896 = vld [vmem:[%s308 + $0xe90] sm:$0xff]
        %v897 = vld [vmem:[%s308 + $0xe98] sm:$0xff]
        %v898 = vld [vmem:[%s308 + $0xea0] sm:$0xff]
        %v899 = vld [vmem:[%s308 + $0xea8] sm:$0xff]
        %v900 = vld [vmem:[%s308 + $0xeb0] sm:$0xff]
        %v901 = vld [vmem:[%s308 + $0xeb8] sm:$0xff]
        %v902 = vld [vmem:[%s308 + $0xec0] sm:$0xff]
        %v903 = vld [vmem:[%s308 + $0xec8] sm:$0xff]
        %v904 = vld [vmem:[%s308 + $0xed0] sm:$0xff]
        %v905 = vld [vmem:[%s308 + $0xed8] sm:$0xff]
        %v906 = vld [vmem:[%s308 + $0xee0] sm:$0xff]
        %v907 = vld [vmem:[%s308 + $0xee8] sm:$0xff]
        %v908 = vld [vmem:[%s308 + $0xef0] sm:$0xff]
        %v909 = vld [vmem:[%s308 + $0xef8] sm:$0xff]
        %v910 = vld [vmem:[%s308 + $0xf00] sm:$0xff]
        %v911 = vld [vmem:[%s308 + $0xf08] sm:$0xff]
        %v912 = vld [vmem:[%s308 + $0xf10] sm:$0xff]
        %v913 = vld [vmem:[%s308 + $0xf18] sm:$0xff]
        %v914 = vld [vmem:[%s308 + $0xf20] sm:$0xff]
        %v915 = vld [vmem:[%s308 + $0xf28] sm:$0xff]
        %v916 = vld [vmem:[%s308 + $0xf30] sm:$0xff]
        %v917 = vld [vmem:[%s308 + $0xf38] sm:$0xff]
        %v918 = vld [vmem:[%s308 + $0xf40] sm:$0xff]
        %v919 = vld [vmem:[%s308 + $0xf48] sm:$0xff]
        %v920 = vld [vmem:[%s308 + $0xf50] sm:$0xff]
        %v921 = vld [vmem:[%s308 + $0xf58] sm:$0xff]
        %v922 = vld [vmem:[%s308 + $0xf60] sm:$0xff]
        %v923 = vld [vmem:[%s308 + $0xf68] sm:$0xff]
        %v924 = vld [vmem:[%s308 + $0xf70] sm:$0xff]
        %v925 = vld [vmem:[%s308 + $0xf78] sm:$0xff]
        %v926 = vld [vmem:[%s308 + $0xf80] sm:$0xff]
        %v927 = vld [vmem:[%s308 + $0xf88] sm:$0xff]
        %v928 = vld [vmem:[%s308 + $0xf90] sm:$0xff]
        %v929 = vld [vmem:[%s308 + $0xf98] sm:$0xff]
        %v930 = vld [vmem:[%s308 + $0xfa0] sm:$0xff]
        %v931 = vld [vmem:[%s308 + $0xfa8] sm:$0xff]
        %v932 = vld [vmem:[%s308 + $0xfb0] sm:$0xff]
        %v933 = vld [vmem:[%s308 + $0xfb8] sm:$0xff]
        %v934 = vld [vmem:[%s308 + $0xfc0] sm:$0xff]
        %v935 = vld [vmem:[%s308 + $0xfc8] sm:$0xff]
        %v936 = vld [vmem:[%s308 + $0xfd0] sm:$0xff]
        %v937 = vld [vmem:[%s308 + $0xfd8] sm:$0xff]
        %v938 = vld [vmem:[%s308 + $0xfe0] sm:$0xff]
        %v939 = vld [vmem:[%s308 + $0xfe8] sm:$0xff]
        %v940 = vld [vmem:[%s308 + $0xff0] sm:$0xff]
        %v941 = vld [vmem:[%s308 + $0xff8] sm:$0xff]
        %v942 = vld [vmem:[%s308 + $0x1000] sm:$0xff]
        %v943 = vld [vmem:[%s308 + $0x1008] sm:$0xff]
        %v944 = vld [vmem:[%s308 + $0x1010] sm:$0xff]
        %v945 = vld [vmem:[%s308 + $0x1018] sm:$0xff]
        %v946 = vld [vmem:[%s308 + $0x1020] sm:$0xff]
        %v947 = vld [vmem:[%s308 + $0x1028] sm:$0xff]
        %v948 = vld [vmem:[%s308 + $0x1030] sm:$0xff]
        %v949 = vld [vmem:[%s308 + $0x1038] sm:$0xff]
        %v950 = vld [vmem:[%s308 + $0x1040] sm:$0xff]
        %v951 = vld [vmem:[%s308 + $0x1048] sm:$0xff]
        %v952 = vld [vmem:[%s308 + $0x1050] sm:$0xff]
        %v953 = vld [vmem:[%s308 + $0x1058] sm:$0xff]
        %v954 = vld [vmem:[%s308 + $0x1060] sm:$0xff]
        %v955 = vld [vmem:[%s308 + $0x1068] sm:$0xff]
        %v956 = vld [vmem:[%s308 + $0x1070] sm:$0xff]
        %v957 = vld [vmem:[%s308 + $0x1078] sm:$0xff]
        %v958 = vld [vmem:[%s308 + $0x1080] sm:$0xff]
        %v959 = vld [vmem:[%s308 + $0x1088] sm:$0xff]
        %v960 = vld [vmem:[%s308 + $0x1090] sm:$0xff]
        %v961 = vld [vmem:[%s308 + $0x1098] sm:$0xff]
        %v962 = vld [vmem:[%s308 + $0x10a0] sm:$0xff]
        %v963 = vld [vmem:[%s308 + $0x10a8] sm:$0xff]
        %v964 = vld [vmem:[%s308 + $0x10b0] sm:$0xff]
        %v965 = vld [vmem:[%s308 + $0x10b8] sm:$0xff]
        %v966 = vld [vmem:[%s308 + $0x10c0] sm:$0xff]
        %v967 = vld [vmem:[%s308 + $0x10c8] sm:$0xff]
        %v968 = vld [vmem:[%s308 + $0x10d0] sm:$0xff]
        %v969 = vld [vmem:[%s308 + $0x10d8] sm:$0xff]
        %v970 = vld [vmem:[%s308 + $0x10e0] sm:$0xff]
        %v971 = vld [vmem:[%s308 + $0x10e8] sm:$0xff]
        %v972 = vld [vmem:[%s308 + $0x10f0] sm:$0xff]
        %v973 = vld [vmem:[%s308 + $0x10f8] sm:$0xff]
        %v974 = vld [vmem:[%s308 + $0x1100] sm:$0xff]
        %v975 = vld [vmem:[%s308 + $0x1108] sm:$0xff]
        %v976 = vld [vmem:[%s308 + $0x1110] sm:$0xff]
        %v977 = vld [vmem:[%s308 + $0x1118] sm:$0xff]
        %v978 = vld [vmem:[%s308 + $0x1120] sm:$0xff]
        %v979 = vld [vmem:[%s308 + $0x1128] sm:$0xff]
        %v980 = vld [vmem:[%s308 + $0x1130] sm:$0xff]
        %v981 = vld [vmem:[%s308 + $0x1138] sm:$0xff]
        %v982 = vld [vmem:[%s308 + $0x1140] sm:$0xff]
        %v983 = vld [vmem:[%s308 + $0x1148] sm:$0xff]
        %v984 = vld [vmem:[%s308 + $0x1150] sm:$0xff]
        %v985 = vld [vmem:[%s308 + $0x1158] sm:$0xff]
        %v986 = vld [vmem:[%s308 + $0x1160] sm:$0xff]
        %v987 = vld [vmem:[%s308 + $0x1168] sm:$0xff]
        %v988 = vld [vmem:[%s308 + $0x1170] sm:$0xff]
        %v989 = vld [vmem:[%s308 + $0x1178] sm:$0xff]
        %v990 = vld [vmem:[%s308 + $0x1180] sm:$0xff]
        %v991 = vld [vmem:[%s308 + $0x1188] sm:$0xff]
        %v992 = vld [vmem:[%s308 + $0x1190] sm:$0xff]
        %v993 = vld [vmem:[%s308 + $0x1198] sm:$0xff]
        %v994 = vld [vmem:[%s308 + $0x11a0] sm:$0xff]
        %v995 = vld [vmem:[%s308 + $0x11a8] sm:$0xff]
        %v996 = vld [vmem:[%s308 + $0x11b0] sm:$0xff]
        %v997 = vld [vmem:[%s308 + $0x11b8] sm:$0xff]
        %v998 = vld [vmem:[%s308 + $0x11c0] sm:$0xff]
        %v999 = vld [vmem:[%s308 + $0x11c8] sm:$0xff]
        %v1000 = vld [vmem:[%s308 + $0x11d0] sm:$0xff]
        %v1001 = vld [vmem:[%s308 + $0x11d8] sm:$0xff]
        %v1002 = vld [vmem:[%s308 + $0x11e0] sm:$0xff]
        %v1003 = vld [vmem:[%s308 + $0x11e8] sm:$0xff]
        %v1004 = vld [vmem:[%s308 + $0x11f0] sm:$0xff]
        %v1005 = vld [vmem:[%s308 + $0x11f8] sm:$0xff]
        %v1042 = vunpack.c.l.b16 %v394
        %v1043 = vunpack.c.h.b16 %v394
        %v1044 = vunpack.c.l.b16 %v395
        %v1045 = vunpack.c.h.b16 %v395
        %v1046 = vunpack.c.l.b16 %v396
        %v1047 = vunpack.c.h.b16 %v396
        %v1048 = vunpack.c.l.b16 %v397
        %v1049 = vunpack.c.h.b16 %v397
        %v1050 = vunpack.c.l.b16 %v398
        %v1051 = vunpack.c.h.b16 %v398
        %v1052 = vunpack.c.l.b16 %v399
        %v1053 = vunpack.c.h.b16 %v399
        %v1054 = vunpack.c.l.b16 %v400
        %v1055 = vunpack.c.h.b16 %v400
        %v1056 = vunpack.c.l.b16 %v401
        %v1057 = vunpack.c.h.b16 %v401
        %v1058 = vunpack.c.l.b16 %v402
        %v1059 = vunpack.c.h.b16 %v402
        %v1060 = vunpack.c.l.b16 %v403
        %v1061 = vunpack.c.h.b16 %v403
        %v1062 = vunpack.c.l.b16 %v404
        %v1063 = vunpack.c.h.b16 %v404
        %v1064 = vunpack.c.l.b16 %v405
        %v1065 = vunpack.c.h.b16 %v405
        %v1066 = vunpack.c.l.b16 %v406
        %v1067 = vunpack.c.h.b16 %v406
        %v1068 = vunpack.c.l.b16 %v407
        %v1069 = vunpack.c.h.b16 %v407
        %v1070 = vunpack.c.l.b16 %v408
        %v1071 = vunpack.c.h.b16 %v408
        %v1072 = vunpack.c.l.b16 %v409
        %v1073 = vunpack.c.h.b16 %v409
        %v1074 = vunpack.c.l.b16 %v410
        %v1075 = vunpack.c.h.b16 %v410
        %v1076 = vunpack.c.l.b16 %v411
        %v1077 = vunpack.c.h.b16 %v411
        %v1078 = vunpack.c.l.b16 %v412
        %v1079 = vunpack.c.h.b16 %v412
        %v1080 = vunpack.c.l.b16 %v413
        %v1081 = vunpack.c.h.b16 %v413
        %v1082 = vunpack.c.l.b16 %v414
        %v1083 = vunpack.c.h.b16 %v414
        %v1084 = vunpack.c.l.b16 %v415
        %v1085 = vunpack.c.h.b16 %v415
        %v1086 = vunpack.c.l.b16 %v416
        %v1087 = vunpack.c.h.b16 %v416
        %v1088 = vunpack.c.l.b16 %v417
        %v1089 = vunpack.c.h.b16 %v417
        %v1090 = vunpack.c.l.b16 %v418
        %v1091 = vunpack.c.h.b16 %v418
        %v1092 = vunpack.c.l.b16 %v419
        %v1093 = vunpack.c.h.b16 %v419
        %v1094 = vunpack.c.l.b16 %v420
        %v1095 = vunpack.c.h.b16 %v420
        %v1096 = vunpack.c.l.b16 %v421
        %v1097 = vunpack.c.h.b16 %v421
        %v1098 = vunpack.c.l.b16 %v422
        %v1099 = vunpack.c.h.b16 %v422
        %v1100 = vunpack.c.l.b16 %v423
        %v1101 = vunpack.c.h.b16 %v423
        %v1102 = vunpack.c.l.b16 %v424
        %v1103 = vunpack.c.h.b16 %v424
        %v1104 = vunpack.c.l.b16 %v425
        %v1105 = vunpack.c.h.b16 %v425
        %v1106 = vunpack.c.l.b16 %v426
        %v1107 = vunpack.c.h.b16 %v426
        %v1108 = vunpack.c.l.b16 %v427
        %v1109 = vunpack.c.h.b16 %v427
        %v1110 = vunpack.c.l.b16 %v428
        %v1111 = vunpack.c.h.b16 %v428
        %v1112 = vunpack.c.l.b16 %v429
        %v1113 = vunpack.c.h.b16 %v429
        %v1114 = vpack.c.b16 %v1078, %v1042
        %v1115 = vpack.c.b16 %v1079, %v1043
        %v1116 = vpack.c.b16 %v1080, %v1044
        %v1117 = vpack.c.b16 %v1081, %v1045
        %v1118 = vpack.c.b16 %v1082, %v1046
        %v1119 = vpack.c.b16 %v1083, %v1047
        %v1120 = vpack.c.b16 %v1084, %v1048
        %v1121 = vpack.c.b16 %v1085, %v1049
        %v1122 = vpack.c.b16 %v1086, %v1050
        %v1123 = vpack.c.b16 %v1087, %v1051
        %v1124 = vpack.c.b16 %v1088, %v1052
        %v1125 = vpack.c.b16 %v1089, %v1053
        %v1126 = vpack.c.b16 %v1090, %v1054
        %v1127 = vpack.c.b16 %v1091, %v1055
        %v1128 = vpack.c.b16 %v1092, %v1056
        %v1129 = vpack.c.b16 %v1093, %v1057
        %v1130 = vpack.c.b16 %v1094, %v1058
        %v1131 = vpack.c.b16 %v1095, %v1059
        %v1132 = vpack.c.b16 %v1096, %v1060
        %v1133 = vpack.c.b16 %v1097, %v1061
        %v1134 = vpack.c.b16 %v1098, %v1062
        %v1135 = vpack.c.b16 %v1099, %v1063
        %v1136 = vpack.c.b16 %v1100, %v1064
        %v1137 = vpack.c.b16 %v1101, %v1065
        %v1138 = vpack.c.b16 %v1102, %v1066
        %v1139 = vpack.c.b16 %v1103, %v1067
        %v1140 = vpack.c.b16 %v1104, %v1068
        %v1141 = vpack.c.b16 %v1105, %v1069
        %v1142 = vpack.c.b16 %v1106, %v1070
        %v1143 = vpack.c.b16 %v1107, %v1071
        %v1144 = vpack.c.b16 %v1108, %v1072
        %v1145 = vpack.c.b16 %v1109, %v1073
        %v1146 = vpack.c.b16 %v1110, %v1074
        %v1147 = vpack.c.b16 %v1111, %v1075
        %v1148 = vpack.c.b16 %v1112, %v1076
        %v1149 = vpack.c.b16 %v1113, %v1077
        %v1762 = vunpack.c.l.b16 %v430
        %v1763 = vunpack.c.h.b16 %v430
        %v1764 = vunpack.c.l.b16 %v431
        %v1765 = vunpack.c.h.b16 %v431
        %v1766 = vunpack.c.l.b16 %v432
        %v1767 = vunpack.c.h.b16 %v432
        %v1768 = vunpack.c.l.b16 %v433
        %v1769 = vunpack.c.h.b16 %v433
        %v1770 = vunpack.c.l.b16 %v434
        %v1771 = vunpack.c.h.b16 %v434
        %v1772 = vunpack.c.l.b16 %v435
        %v1773 = vunpack.c.h.b16 %v435
        %v1774 = vunpack.c.l.b16 %v436
        %v1775 = vunpack.c.h.b16 %v436
        %v1776 = vunpack.c.l.b16 %v437
        %v1777 = vunpack.c.h.b16 %v437
        %v1778 = vunpack.c.l.b16 %v438
        %v1779 = vunpack.c.h.b16 %v438
        %v1780 = vunpack.c.l.b16 %v439
        %v1781 = vunpack.c.h.b16 %v439
        %v1782 = vunpack.c.l.b16 %v440
        %v1783 = vunpack.c.h.b16 %v440
        %v1784 = vunpack.c.l.b16 %v441
        %v1785 = vunpack.c.h.b16 %v441
        %v1786 = vunpack.c.l.b16 %v442
        %v1787 = vunpack.c.h.b16 %v442
        %v1788 = vunpack.c.l.b16 %v443
        %v1789 = vunpack.c.h.b16 %v443
        %v1790 = vunpack.c.l.b16 %v444
        %v1791 = vunpack.c.h.b16 %v444
        %v1792 = vunpack.c.l.b16 %v445
        %v1793 = vunpack.c.h.b16 %v445
        %v1794 = vunpack.c.l.b16 %v446
        %v1795 = vunpack.c.h.b16 %v446
        %v1796 = vunpack.c.l.b16 %v447
        %v1797 = vunpack.c.h.b16 %v447
        %v1798 = vunpack.c.l.b16 %v448
        %v1799 = vunpack.c.h.b16 %v448
        %v1800 = vunpack.c.l.b16 %v449
        %v1801 = vunpack.c.h.b16 %v449
        %v1802 = vunpack.c.l.b16 %v450
        %v1803 = vunpack.c.h.b16 %v450
        %v1804 = vunpack.c.l.b16 %v451
        %v1805 = vunpack.c.h.b16 %v451
        %v1806 = vunpack.c.l.b16 %v452
        %v1807 = vunpack.c.h.b16 %v452
        %v1808 = vunpack.c.l.b16 %v453
        %v1809 = vunpack.c.h.b16 %v453
        %v1810 = vunpack.c.l.b16 %v454
        %v1811 = vunpack.c.h.b16 %v454
        %v1812 = vunpack.c.l.b16 %v455
        %v1813 = vunpack.c.h.b16 %v455
        %v1814 = vunpack.c.l.b16 %v456
        %v1815 = vunpack.c.h.b16 %v456
        %v1816 = vunpack.c.l.b16 %v457
        %v1817 = vunpack.c.h.b16 %v457
        %v1818 = vunpack.c.l.b16 %v458
        %v1819 = vunpack.c.h.b16 %v458
        %v1820 = vunpack.c.l.b16 %v459
        %v1821 = vunpack.c.h.b16 %v459
        %v1822 = vunpack.c.l.b16 %v460
        %v1823 = vunpack.c.h.b16 %v460
        %v1824 = vunpack.c.l.b16 %v461
        %v1825 = vunpack.c.h.b16 %v461
        %v1826 = vunpack.c.l.b16 %v462
        %v1827 = vunpack.c.h.b16 %v462
        %v1828 = vunpack.c.l.b16 %v463
        %v1829 = vunpack.c.h.b16 %v463
        %v1830 = vunpack.c.l.b16 %v464
        %v1831 = vunpack.c.h.b16 %v464
        %v1832 = vunpack.c.l.b16 %v465
        %v1833 = vunpack.c.h.b16 %v465
        %v1834 = vunpack.c.l.b16 %v466
        %v1835 = vunpack.c.h.b16 %v466
        %v1836 = vunpack.c.l.b16 %v467
        %v1837 = vunpack.c.h.b16 %v467
        %v1838 = vunpack.c.l.b16 %v468
        %v1839 = vunpack.c.h.b16 %v468
        %v1840 = vunpack.c.l.b16 %v469
        %v1841 = vunpack.c.h.b16 %v469
        %v1842 = vunpack.c.l.b16 %v470
        %v1843 = vunpack.c.h.b16 %v470
        %v1844 = vunpack.c.l.b16 %v471
        %v1845 = vunpack.c.h.b16 %v471
        %v1846 = vunpack.c.l.b16 %v472
        %v1847 = vunpack.c.h.b16 %v472
        %v1848 = vunpack.c.l.b16 %v473
        %v1849 = vunpack.c.h.b16 %v473
        %v1850 = vunpack.c.l.b16 %v474
        %v1851 = vunpack.c.h.b16 %v474
        %v1852 = vunpack.c.l.b16 %v475
        %v1853 = vunpack.c.h.b16 %v475
        %v1854 = vunpack.c.l.b16 %v476
        %v1855 = vunpack.c.h.b16 %v476
        %v1856 = vunpack.c.l.b16 %v477
        %v1857 = vunpack.c.h.b16 %v477
        %v1858 = vunpack.c.l.b16 %v478
        %v1859 = vunpack.c.h.b16 %v478
        %v1860 = vunpack.c.l.b16 %v479
        %v1861 = vunpack.c.h.b16 %v479
        %v1862 = vunpack.c.l.b16 %v480
        %v1863 = vunpack.c.h.b16 %v480
        %v1864 = vunpack.c.l.b16 %v481
        %v1865 = vunpack.c.h.b16 %v481
        %v1866 = vunpack.c.l.b16 %v482
        %v1867 = vunpack.c.h.b16 %v482
        %v1868 = vunpack.c.l.b16 %v483
        %v1869 = vunpack.c.h.b16 %v483
        %v1870 = vunpack.c.l.b16 %v484
        %v1871 = vunpack.c.h.b16 %v484
        %v1872 = vunpack.c.l.b16 %v485
        %v1873 = vunpack.c.h.b16 %v485
        %v1874 = vunpack.c.l.b16 %v486
        %v1875 = vunpack.c.h.b16 %v486
        %v1876 = vunpack.c.l.b16 %v487
        %v1877 = vunpack.c.h.b16 %v487
        %v1878 = vunpack.c.l.b16 %v488
        %v1879 = vunpack.c.h.b16 %v488
        %v1880 = vunpack.c.l.b16 %v489
        %v1881 = vunpack.c.h.b16 %v489
        %v1882 = vunpack.c.l.b16 %v490
        %v1883 = vunpack.c.h.b16 %v490
        %v1884 = vunpack.c.l.b16 %v491
        %v1885 = vunpack.c.h.b16 %v491
        %v1886 = vunpack.c.l.b16 %v492
        %v1887 = vunpack.c.h.b16 %v492
        %v1888 = vunpack.c.l.b16 %v493
        %v1889 = vunpack.c.h.b16 %v493
        %v1890 = vunpack.c.l.b16 %v494
        %v1891 = vunpack.c.h.b16 %v494
        %v1892 = vunpack.c.l.b16 %v495
        %v1893 = vunpack.c.h.b16 %v495
        %v1894 = vunpack.c.l.b16 %v496
        %v1895 = vunpack.c.h.b16 %v496
        %v1896 = vunpack.c.l.b16 %v497
        %v1897 = vunpack.c.h.b16 %v497
        %v1898 = vunpack.c.l.b16 %v498
        %v1899 = vunpack.c.h.b16 %v498
        %v1900 = vunpack.c.l.b16 %v499
        %v1901 = vunpack.c.h.b16 %v499
        %v1902 = vunpack.c.l.b16 %v500
        %v1903 = vunpack.c.h.b16 %v500
        %v1904 = vunpack.c.l.b16 %v501
        %v1905 = vunpack.c.h.b16 %v501
        %v1906 = vunpack.c.l.b16 %v502
        %v1907 = vunpack.c.h.b16 %v502
        %v1908 = vunpack.c.l.b16 %v503
        %v1909 = vunpack.c.h.b16 %v503
        %v1910 = vunpack.c.l.b16 %v504
        %v1911 = vunpack.c.h.b16 %v504
        %v1912 = vunpack.c.l.b16 %v505
        %v1913 = vunpack.c.h.b16 %v505
        %v1914 = vunpack.c.l.b16 %v506
        %v1915 = vunpack.c.h.b16 %v506
        %v1916 = vunpack.c.l.b16 %v507
        %v1917 = vunpack.c.h.b16 %v507
        %v1918 = vunpack.c.l.b16 %v508
        %v1919 = vunpack.c.h.b16 %v508
        %v1920 = vunpack.c.l.b16 %v509
        %v1921 = vunpack.c.h.b16 %v509
        %v1922 = vunpack.c.l.b16 %v510
        %v1923 = vunpack.c.h.b16 %v510
        %v1924 = vunpack.c.l.b16 %v511
        %v1925 = vunpack.c.h.b16 %v511
        %v1926 = vunpack.c.l.b16 %v512
        %v1927 = vunpack.c.h.b16 %v512
        %v1928 = vunpack.c.l.b16 %v513
        %v1929 = vunpack.c.h.b16 %v513
        %v1930 = vunpack.c.l.b16 %v514
        %v1931 = vunpack.c.h.b16 %v514
        %v1932 = vunpack.c.l.b16 %v515
        %v1933 = vunpack.c.h.b16 %v515
        %v1934 = vunpack.c.l.b16 %v516
        %v1935 = vunpack.c.h.b16 %v516
        %v1936 = vunpack.c.l.b16 %v517
        %v1937 = vunpack.c.h.b16 %v517
        %v1938 = vunpack.c.l.b16 %v518
        %v1939 = vunpack.c.h.b16 %v518
        %v1940 = vunpack.c.l.b16 %v519
        %v1941 = vunpack.c.h.b16 %v519
        %v1942 = vunpack.c.l.b16 %v520
        %v1943 = vunpack.c.h.b16 %v520
        %v1944 = vunpack.c.l.b16 %v521
        %v1945 = vunpack.c.h.b16 %v521
        %v1946 = vunpack.c.l.b16 %v522
        %v1947 = vunpack.c.h.b16 %v522
        %v1948 = vunpack.c.l.b16 %v523
        %v1949 = vunpack.c.h.b16 %v523
        %v1950 = vunpack.c.l.b16 %v524
        %v1951 = vunpack.c.h.b16 %v524
        %v1952 = vunpack.c.l.b16 %v525
        %v1953 = vunpack.c.h.b16 %v525
        %v1954 = vunpack.c.l.b16 %v526
        %v1955 = vunpack.c.h.b16 %v526
        %v1956 = vunpack.c.l.b16 %v527
        %v1957 = vunpack.c.h.b16 %v527
        %v1958 = vunpack.c.l.b16 %v528
        %v1959 = vunpack.c.h.b16 %v528
        %v1960 = vunpack.c.l.b16 %v529
        %v1961 = vunpack.c.h.b16 %v529
        %v1962 = vunpack.c.l.b16 %v530
        %v1963 = vunpack.c.h.b16 %v530
        %v1964 = vunpack.c.l.b16 %v531
        %v1965 = vunpack.c.h.b16 %v531
        %v1966 = vunpack.c.l.b16 %v532
        %v1967 = vunpack.c.h.b16 %v532
        %v1968 = vunpack.c.l.b16 %v533
        %v1969 = vunpack.c.h.b16 %v533
        %v1970 = vunpack.c.l.b16 %v534
        %v1971 = vunpack.c.h.b16 %v534
        %v1972 = vunpack.c.l.b16 %v535
        %v1973 = vunpack.c.h.b16 %v535
        %v1974 = vunpack.c.l.b16 %v536
        %v1975 = vunpack.c.h.b16 %v536
        %v1976 = vunpack.c.l.b16 %v537
        %v1977 = vunpack.c.h.b16 %v537
        %v1978 = vunpack.c.l.b16 %v538
        %v1979 = vunpack.c.h.b16 %v538
        %v1980 = vunpack.c.l.b16 %v539
        %v1981 = vunpack.c.h.b16 %v539
        %v1982 = vunpack.c.l.b16 %v540
        %v1983 = vunpack.c.h.b16 %v540
        %v1984 = vunpack.c.l.b16 %v541
        %v1985 = vunpack.c.h.b16 %v541
        %v1986 = vunpack.c.l.b16 %v542
        %v1987 = vunpack.c.h.b16 %v542
        %v1988 = vunpack.c.l.b16 %v543
        %v1989 = vunpack.c.h.b16 %v543
        %v1990 = vunpack.c.l.b16 %v544
        %v1991 = vunpack.c.h.b16 %v544
        %v1992 = vunpack.c.l.b16 %v545
        %v1993 = vunpack.c.h.b16 %v545
        %v1994 = vunpack.c.l.b16 %v546
        %v1995 = vunpack.c.h.b16 %v546
        %v1996 = vunpack.c.l.b16 %v547
        %v1997 = vunpack.c.h.b16 %v547
        %v1998 = vunpack.c.l.b16 %v548
        %v1999 = vunpack.c.h.b16 %v548
        %v2000 = vunpack.c.l.b16 %v549
        %v2001 = vunpack.c.h.b16 %v549
        %v2002 = vunpack.c.l.b16 %v550
        %v2003 = vunpack.c.h.b16 %v550
        %v2004 = vunpack.c.l.b16 %v551
        %v2005 = vunpack.c.h.b16 %v551
        %v2006 = vunpack.c.l.b16 %v552
        %v2007 = vunpack.c.h.b16 %v552
        %v2008 = vunpack.c.l.b16 %v553
        %v2009 = vunpack.c.h.b16 %v553
        %v2010 = vunpack.c.l.b16 %v554
        %v2011 = vunpack.c.h.b16 %v554
        %v2012 = vunpack.c.l.b16 %v555
        %v2013 = vunpack.c.h.b16 %v555
        %v2014 = vunpack.c.l.b16 %v556
        %v2015 = vunpack.c.h.b16 %v556
        %v2016 = vunpack.c.l.b16 %v557
        %v2017 = vunpack.c.h.b16 %v557
        %v2018 = vunpack.c.l.b16 %v558
        %v2019 = vunpack.c.h.b16 %v558
        %v2020 = vunpack.c.l.b16 %v559
        %v2021 = vunpack.c.h.b16 %v559
        %v2022 = vunpack.c.l.b16 %v560
        %v2023 = vunpack.c.h.b16 %v560
        %v2024 = vunpack.c.l.b16 %v561
        %v2025 = vunpack.c.h.b16 %v561
        %v2026 = vunpack.c.l.b16 %v562
        %v2027 = vunpack.c.h.b16 %v562
        %v2028 = vunpack.c.l.b16 %v563
        %v2029 = vunpack.c.h.b16 %v563
        %v2030 = vunpack.c.l.b16 %v564
        %v2031 = vunpack.c.h.b16 %v564
        %v2032 = vunpack.c.l.b16 %v565
        %v2033 = vunpack.c.h.b16 %v565
        %v2034 = vunpack.c.l.b16 %v566
        %v2035 = vunpack.c.h.b16 %v566
        %v2036 = vunpack.c.l.b16 %v567
        %v2037 = vunpack.c.h.b16 %v567
        %v2038 = vunpack.c.l.b16 %v568
        %v2039 = vunpack.c.h.b16 %v568
        %v2040 = vunpack.c.l.b16 %v569
        %v2041 = vunpack.c.h.b16 %v569
        %v2042 = vunpack.c.l.b16 %v570
        %v2043 = vunpack.c.h.b16 %v570
        %v2044 = vunpack.c.l.b16 %v571
        %v2045 = vunpack.c.h.b16 %v571
        %v2046 = vunpack.c.l.b16 %v572
        %v2047 = vunpack.c.h.b16 %v572
        %v2048 = vunpack.c.l.b16 %v573
        %v2049 = vunpack.c.h.b16 %v573
        %v2050 = vunpack.c.l.b16 %v574
        %v2051 = vunpack.c.h.b16 %v574
        %v2052 = vunpack.c.l.b16 %v575
        %v2053 = vunpack.c.h.b16 %v575
        %v2054 = vunpack.c.l.b16 %v576
        %v2055 = vunpack.c.h.b16 %v576
        %v2056 = vunpack.c.l.b16 %v577
        %v2057 = vunpack.c.h.b16 %v577
        %v2058 = vunpack.c.l.b16 %v578
        %v2059 = vunpack.c.h.b16 %v578
        %v2060 = vunpack.c.l.b16 %v579
        %v2061 = vunpack.c.h.b16 %v579
        %v2062 = vunpack.c.l.b16 %v580
        %v2063 = vunpack.c.h.b16 %v580
        %v2064 = vunpack.c.l.b16 %v581
        %v2065 = vunpack.c.h.b16 %v581
        %v2066 = vunpack.c.l.b16 %v582
        %v2067 = vunpack.c.h.b16 %v582
        %v2068 = vunpack.c.l.b16 %v583
        %v2069 = vunpack.c.h.b16 %v583
        %v2070 = vunpack.c.l.b16 %v584
        %v2071 = vunpack.c.h.b16 %v584
        %v2072 = vunpack.c.l.b16 %v585
        %v2073 = vunpack.c.h.b16 %v585
        %v2074 = vunpack.c.l.b16 %v586
        %v2075 = vunpack.c.h.b16 %v586
        %v2076 = vunpack.c.l.b16 %v587
        %v2077 = vunpack.c.h.b16 %v587
        %v2078 = vunpack.c.l.b16 %v588
        %v2079 = vunpack.c.h.b16 %v588
        %v2080 = vunpack.c.l.b16 %v589
        %v2081 = vunpack.c.h.b16 %v589
        %v2082 = vunpack.c.l.b16 %v590
        %v2083 = vunpack.c.h.b16 %v590
        %v2084 = vunpack.c.l.b16 %v591
        %v2085 = vunpack.c.h.b16 %v591
        %v2086 = vunpack.c.l.b16 %v592
        %v2087 = vunpack.c.h.b16 %v592
        %v2088 = vunpack.c.l.b16 %v593
        %v2089 = vunpack.c.h.b16 %v593
        %v2090 = vunpack.c.l.b16 %v594
        %v2091 = vunpack.c.h.b16 %v594
        %v2092 = vunpack.c.l.b16 %v595
        %v2093 = vunpack.c.h.b16 %v595
        %v2094 = vunpack.c.l.b16 %v596
        %v2095 = vunpack.c.h.b16 %v596
        %v2096 = vunpack.c.l.b16 %v597
        %v2097 = vunpack.c.h.b16 %v597
        %v2098 = vunpack.c.l.b16 %v598
        %v2099 = vunpack.c.h.b16 %v598
        %v2100 = vunpack.c.l.b16 %v599
        %v2101 = vunpack.c.h.b16 %v599
        %v2102 = vunpack.c.l.b16 %v600
        %v2103 = vunpack.c.h.b16 %v600
        %v2104 = vunpack.c.l.b16 %v601
        %v2105 = vunpack.c.h.b16 %v601
        %v2106 = vunpack.c.l.b16 %v602
        %v2107 = vunpack.c.h.b16 %v602
        %v2108 = vunpack.c.l.b16 %v603
        %v2109 = vunpack.c.h.b16 %v603
        %v2110 = vunpack.c.l.b16 %v604
        %v2111 = vunpack.c.h.b16 %v604
        %v2112 = vunpack.c.l.b16 %v605
        %v2113 = vunpack.c.h.b16 %v605
        %v2114 = vunpack.c.l.b16 %v606
        %v2115 = vunpack.c.h.b16 %v606
        %v2116 = vunpack.c.l.b16 %v607
        %v2117 = vunpack.c.h.b16 %v607
        %v2118 = vunpack.c.l.b16 %v608
        %v2119 = vunpack.c.h.b16 %v608
        %v2120 = vunpack.c.l.b16 %v609
        %v2121 = vunpack.c.h.b16 %v609
        %v2122 = vunpack.c.l.b16 %v610
        %v2123 = vunpack.c.h.b16 %v610
        %v2124 = vunpack.c.l.b16 %v611
        %v2125 = vunpack.c.h.b16 %v611
        %v2126 = vunpack.c.l.b16 %v612
        %v2127 = vunpack.c.h.b16 %v612
        %v2128 = vunpack.c.l.b16 %v613
        %v2129 = vunpack.c.h.b16 %v613
        %v2130 = vunpack.c.l.b16 %v614
        %v2131 = vunpack.c.h.b16 %v614
        %v2132 = vunpack.c.l.b16 %v615
        %v2133 = vunpack.c.h.b16 %v615
        %v2134 = vunpack.c.l.b16 %v616
        %v2135 = vunpack.c.h.b16 %v616
        %v2136 = vunpack.c.l.b16 %v617
        %v2137 = vunpack.c.h.b16 %v617
        %v2138 = vunpack.c.l.b16 %v618
        %v2139 = vunpack.c.h.b16 %v618
        %v2140 = vunpack.c.l.b16 %v619
        %v2141 = vunpack.c.h.b16 %v619
        %v2142 = vunpack.c.l.b16 %v620
        %v2143 = vunpack.c.h.b16 %v620
        %v2144 = vunpack.c.l.b16 %v621
        %v2145 = vunpack.c.h.b16 %v621
        %v2146 = vunpack.c.l.b16 %v622
        %v2147 = vunpack.c.h.b16 %v622
        %v2148 = vunpack.c.l.b16 %v623
        %v2149 = vunpack.c.h.b16 %v623
        %v2150 = vunpack.c.l.b16 %v624
        %v2151 = vunpack.c.h.b16 %v624
        %v2152 = vunpack.c.l.b16 %v625
        %v2153 = vunpack.c.h.b16 %v625
        %v2154 = vunpack.c.l.b16 %v626
        %v2155 = vunpack.c.h.b16 %v626
        %v2156 = vunpack.c.l.b16 %v627
        %v2157 = vunpack.c.h.b16 %v627
        %v2158 = vunpack.c.l.b16 %v628
        %v2159 = vunpack.c.h.b16 %v628
        %v2160 = vunpack.c.l.b16 %v629
        %v2161 = vunpack.c.h.b16 %v629
        %v2162 = vunpack.c.l.b16 %v630
        %v2163 = vunpack.c.h.b16 %v630
        %v2164 = vunpack.c.l.b16 %v631
        %v2165 = vunpack.c.h.b16 %v631
        %v2166 = vunpack.c.l.b16 %v632
        %v2167 = vunpack.c.h.b16 %v632
        %v2168 = vunpack.c.l.b16 %v633
        %v2169 = vunpack.c.h.b16 %v633
        %v2170 = vunpack.c.l.b16 %v634
        %v2171 = vunpack.c.h.b16 %v634
        %v2172 = vunpack.c.l.b16 %v635
        %v2173 = vunpack.c.h.b16 %v635
        %v2174 = vunpack.c.l.b16 %v636
        %v2175 = vunpack.c.h.b16 %v636
        %v2176 = vunpack.c.l.b16 %v637
        %v2177 = vunpack.c.h.b16 %v637
        %v2178 = vunpack.c.l.b16 %v638
        %v2179 = vunpack.c.h.b16 %v638
        %v2180 = vunpack.c.l.b16 %v639
        %v2181 = vunpack.c.h.b16 %v639
        %v2182 = vunpack.c.l.b16 %v640
        %v2183 = vunpack.c.h.b16 %v640
        %v2184 = vunpack.c.l.b16 %v641
        %v2185 = vunpack.c.h.b16 %v641
        %v2186 = vunpack.c.l.b16 %v642
        %v2187 = vunpack.c.h.b16 %v642
        %v2188 = vunpack.c.l.b16 %v643
        %v2189 = vunpack.c.h.b16 %v643
        %v2190 = vunpack.c.l.b16 %v644
        %v2191 = vunpack.c.h.b16 %v644
        %v2192 = vunpack.c.l.b16 %v645
        %v2193 = vunpack.c.h.b16 %v645
        %v2194 = vunpack.c.l.b16 %v646
        %v2195 = vunpack.c.h.b16 %v646
        %v2196 = vunpack.c.l.b16 %v647
        %v2197 = vunpack.c.h.b16 %v647
        %v2198 = vunpack.c.l.b16 %v648
        %v2199 = vunpack.c.h.b16 %v648
        %v2200 = vunpack.c.l.b16 %v649
        %v2201 = vunpack.c.h.b16 %v649
        %v2202 = vunpack.c.l.b16 %v650
        %v2203 = vunpack.c.h.b16 %v650
        %v2204 = vunpack.c.l.b16 %v651
        %v2205 = vunpack.c.h.b16 %v651
        %v2206 = vunpack.c.l.b16 %v652
        %v2207 = vunpack.c.h.b16 %v652
        %v2208 = vunpack.c.l.b16 %v653
        %v2209 = vunpack.c.h.b16 %v653
        %v2210 = vunpack.c.l.b16 %v654
        %v2211 = vunpack.c.h.b16 %v654
        %v2212 = vunpack.c.l.b16 %v655
        %v2213 = vunpack.c.h.b16 %v655
        %v2214 = vunpack.c.l.b16 %v656
        %v2215 = vunpack.c.h.b16 %v656
        %v2216 = vunpack.c.l.b16 %v657
        %v2217 = vunpack.c.h.b16 %v657
        %v2218 = vunpack.c.l.b16 %v658
        %v2219 = vunpack.c.h.b16 %v658
        %v2220 = vunpack.c.l.b16 %v659
        %v2221 = vunpack.c.h.b16 %v659
        %v2222 = vunpack.c.l.b16 %v660
        %v2223 = vunpack.c.h.b16 %v660
        %v2224 = vunpack.c.l.b16 %v661
        %v2225 = vunpack.c.h.b16 %v661
        %v2226 = vunpack.c.l.b16 %v662
        %v2227 = vunpack.c.h.b16 %v662
        %v2228 = vunpack.c.l.b16 %v663
        %v2229 = vunpack.c.h.b16 %v663
        %v2230 = vunpack.c.l.b16 %v664
        %v2231 = vunpack.c.h.b16 %v664
        %v2232 = vunpack.c.l.b16 %v665
        %v2233 = vunpack.c.h.b16 %v665
        %v2234 = vunpack.c.l.b16 %v666
        %v2235 = vunpack.c.h.b16 %v666
        %v2236 = vunpack.c.l.b16 %v667
        %v2237 = vunpack.c.h.b16 %v667
        %v2238 = vunpack.c.l.b16 %v668
        %v2239 = vunpack.c.h.b16 %v668
        %v2240 = vunpack.c.l.b16 %v669
        %v2241 = vunpack.c.h.b16 %v669
        %v2242 = vunpack.c.l.b16 %v670
        %v2243 = vunpack.c.h.b16 %v670
        %v2244 = vunpack.c.l.b16 %v671
        %v2245 = vunpack.c.h.b16 %v671
        %v2246 = vunpack.c.l.b16 %v672
        %v2247 = vunpack.c.h.b16 %v672
        %v2248 = vunpack.c.l.b16 %v673
        %v2249 = vunpack.c.h.b16 %v673
        %v2250 = vunpack.c.l.b16 %v674
        %v2251 = vunpack.c.h.b16 %v674
        %v2252 = vunpack.c.l.b16 %v675
        %v2253 = vunpack.c.h.b16 %v675
        %v2254 = vunpack.c.l.b16 %v676
        %v2255 = vunpack.c.h.b16 %v676
        %v2256 = vunpack.c.l.b16 %v677
        %v2257 = vunpack.c.h.b16 %v677
        %v2258 = vunpack.c.l.b16 %v678
        %v2259 = vunpack.c.h.b16 %v678
        %v2260 = vunpack.c.l.b16 %v679
        %v2261 = vunpack.c.h.b16 %v679
        %v2262 = vunpack.c.l.b16 %v680
        %v2263 = vunpack.c.h.b16 %v680
        %v2264 = vunpack.c.l.b16 %v681
        %v2265 = vunpack.c.h.b16 %v681
        %v2266 = vunpack.c.l.b16 %v682
        %v2267 = vunpack.c.h.b16 %v682
        %v2268 = vunpack.c.l.b16 %v683
        %v2269 = vunpack.c.h.b16 %v683
        %v2270 = vunpack.c.l.b16 %v684
        %v2271 = vunpack.c.h.b16 %v684
        %v2272 = vunpack.c.l.b16 %v685
        %v2273 = vunpack.c.h.b16 %v685
        %v2274 = vunpack.c.l.b16 %v686
        %v2275 = vunpack.c.h.b16 %v686
        %v2276 = vunpack.c.l.b16 %v687
        %v2277 = vunpack.c.h.b16 %v687
        %v2278 = vunpack.c.l.b16 %v688
        %v2279 = vunpack.c.h.b16 %v688
        %v2280 = vunpack.c.l.b16 %v689
        %v2281 = vunpack.c.h.b16 %v689
        %v2282 = vunpack.c.l.b16 %v690
        %v2283 = vunpack.c.h.b16 %v690
        %v2284 = vunpack.c.l.b16 %v691
        %v2285 = vunpack.c.h.b16 %v691
        %v2286 = vunpack.c.l.b16 %v692
        %v2287 = vunpack.c.h.b16 %v692
        %v2288 = vunpack.c.l.b16 %v693
        %v2289 = vunpack.c.h.b16 %v693
        %v2290 = vunpack.c.l.b16 %v694
        %v2291 = vunpack.c.h.b16 %v694
        %v2292 = vunpack.c.l.b16 %v695
        %v2293 = vunpack.c.h.b16 %v695
        %v2294 = vunpack.c.l.b16 %v696
        %v2295 = vunpack.c.h.b16 %v696
        %v2296 = vunpack.c.l.b16 %v697
        %v2297 = vunpack.c.h.b16 %v697
        %v2298 = vunpack.c.l.b16 %v698
        %v2299 = vunpack.c.h.b16 %v698
        %v2300 = vunpack.c.l.b16 %v699
        %v2301 = vunpack.c.h.b16 %v699
        %v2302 = vunpack.c.l.b16 %v700
        %v2303 = vunpack.c.h.b16 %v700
        %v2304 = vunpack.c.l.b16 %v701
        %v2305 = vunpack.c.h.b16 %v701
        %v2306 = vunpack.c.l.b16 %v702
        %v2307 = vunpack.c.h.b16 %v702
        %v2308 = vunpack.c.l.b16 %v703
        %v2309 = vunpack.c.h.b16 %v703
        %v2310 = vunpack.c.l.b16 %v704
        %v2311 = vunpack.c.h.b16 %v704
        %v2312 = vunpack.c.l.b16 %v705
        %v2313 = vunpack.c.h.b16 %v705
        %v2314 = vunpack.c.l.b16 %v706
        %v2315 = vunpack.c.h.b16 %v706
        %v2316 = vunpack.c.l.b16 %v707
        %v2317 = vunpack.c.h.b16 %v707
        %v2318 = vunpack.c.l.b16 %v708
        %v2319 = vunpack.c.h.b16 %v708
        %v2320 = vunpack.c.l.b16 %v709
        %v2321 = vunpack.c.h.b16 %v709
        %v2322 = vunpack.c.l.b16 %v710
        %v2323 = vunpack.c.h.b16 %v710
        %v2324 = vunpack.c.l.b16 %v711
        %v2325 = vunpack.c.h.b16 %v711
        %v2326 = vunpack.c.l.b16 %v712
        %v2327 = vunpack.c.h.b16 %v712
        %v2328 = vunpack.c.l.b16 %v713
        %v2329 = vunpack.c.h.b16 %v713
        %v2330 = vunpack.c.l.b16 %v714
        %v2331 = vunpack.c.h.b16 %v714
        %v2332 = vunpack.c.l.b16 %v715
        %v2333 = vunpack.c.h.b16 %v715
        %v2334 = vunpack.c.l.b16 %v716
        %v2335 = vunpack.c.h.b16 %v716
        %v2336 = vunpack.c.l.b16 %v717
        %v2337 = vunpack.c.h.b16 %v717
        %v2338 = vunpack.c.l.b16 %v718
        %v2339 = vunpack.c.h.b16 %v718
        %v2340 = vunpack.c.l.b16 %v719
        %v2341 = vunpack.c.h.b16 %v719
        %v2342 = vunpack.c.l.b16 %v720
        %v2343 = vunpack.c.h.b16 %v720
        %v2344 = vunpack.c.l.b16 %v721
        %v2345 = vunpack.c.h.b16 %v721
        %v2346 = vunpack.c.l.b16 %v722
        %v2347 = vunpack.c.h.b16 %v722
        %v2348 = vunpack.c.l.b16 %v723
        %v2349 = vunpack.c.h.b16 %v723
        %v2350 = vunpack.c.l.b16 %v724
        %v2351 = vunpack.c.h.b16 %v724
        %v2352 = vunpack.c.l.b16 %v725
        %v2353 = vunpack.c.h.b16 %v725
        %v2354 = vunpack.c.l.b16 %v726
        %v2355 = vunpack.c.h.b16 %v726
        %v2356 = vunpack.c.l.b16 %v727
        %v2357 = vunpack.c.h.b16 %v727
        %v2358 = vunpack.c.l.b16 %v728
        %v2359 = vunpack.c.h.b16 %v728
        %v2360 = vunpack.c.l.b16 %v729
        %v2361 = vunpack.c.h.b16 %v729
        %v2362 = vunpack.c.l.b16 %v730
        %v2363 = vunpack.c.h.b16 %v730
        %v2364 = vunpack.c.l.b16 %v731
        %v2365 = vunpack.c.h.b16 %v731
        %v2366 = vunpack.c.l.b16 %v732
        %v2367 = vunpack.c.h.b16 %v732
        %v2368 = vunpack.c.l.b16 %v733
        %v2369 = vunpack.c.h.b16 %v733
        %v2370 = vunpack.c.l.b16 %v734
        %v2371 = vunpack.c.h.b16 %v734
        %v2372 = vunpack.c.l.b16 %v735
        %v2373 = vunpack.c.h.b16 %v735
        %v2374 = vunpack.c.l.b16 %v736
        %v2375 = vunpack.c.h.b16 %v736
        %v2376 = vunpack.c.l.b16 %v737
        %v2377 = vunpack.c.h.b16 %v737
        %v2378 = vunpack.c.l.b16 %v738
        %v2379 = vunpack.c.h.b16 %v738
        %v2380 = vunpack.c.l.b16 %v739
        %v2381 = vunpack.c.h.b16 %v739
        %v2382 = vunpack.c.l.b16 %v740
        %v2383 = vunpack.c.h.b16 %v740
        %v2384 = vunpack.c.l.b16 %v741
        %v2385 = vunpack.c.h.b16 %v741
        %v2386 = vunpack.c.l.b16 %v742
        %v2387 = vunpack.c.h.b16 %v742
        %v2388 = vunpack.c.l.b16 %v743
        %v2389 = vunpack.c.h.b16 %v743
        %v2390 = vunpack.c.l.b16 %v744
        %v2391 = vunpack.c.h.b16 %v744
        %v2392 = vunpack.c.l.b16 %v745
        %v2393 = vunpack.c.h.b16 %v745
        %v2394 = vunpack.c.l.b16 %v746
        %v2395 = vunpack.c.h.b16 %v746
        %v2396 = vunpack.c.l.b16 %v747
        %v2397 = vunpack.c.h.b16 %v747
        %v2398 = vunpack.c.l.b16 %v748
        %v2399 = vunpack.c.h.b16 %v748
        %v2400 = vunpack.c.l.b16 %v749
        %v2401 = vunpack.c.h.b16 %v749
        %v2402 = vunpack.c.l.b16 %v750
        %v2403 = vunpack.c.h.b16 %v750
        %v2404 = vunpack.c.l.b16 %v751
        %v2405 = vunpack.c.h.b16 %v751
        %v2406 = vunpack.c.l.b16 %v752
        %v2407 = vunpack.c.h.b16 %v752
        %v2408 = vunpack.c.l.b16 %v753
        %v2409 = vunpack.c.h.b16 %v753
        %v2410 = vunpack.c.l.b16 %v754
        %v2411 = vunpack.c.h.b16 %v754
        %v2412 = vunpack.c.l.b16 %v755
        %v2413 = vunpack.c.h.b16 %v755
        %v2414 = vunpack.c.l.b16 %v756
        %v2415 = vunpack.c.h.b16 %v756
        %v2416 = vunpack.c.l.b16 %v757
        %v2417 = vunpack.c.h.b16 %v757
        %v2418 = vunpack.c.l.b16 %v758
        %v2419 = vunpack.c.h.b16 %v758
        %v2420 = vunpack.c.l.b16 %v759
        %v2421 = vunpack.c.h.b16 %v759
        %v2422 = vunpack.c.l.b16 %v760
        %v2423 = vunpack.c.h.b16 %v760
        %v2424 = vunpack.c.l.b16 %v761
        %v2425 = vunpack.c.h.b16 %v761
        %v2426 = vunpack.c.l.b16 %v762
        %v2427 = vunpack.c.h.b16 %v762
        %v2428 = vunpack.c.l.b16 %v763
        %v2429 = vunpack.c.h.b16 %v763
        %v2430 = vunpack.c.l.b16 %v764
        %v2431 = vunpack.c.h.b16 %v764
        %v2432 = vunpack.c.l.b16 %v765
        %v2433 = vunpack.c.h.b16 %v765
        %v2434 = vunpack.c.l.b16 %v766
        %v2435 = vunpack.c.h.b16 %v766
        %v2436 = vunpack.c.l.b16 %v767
        %v2437 = vunpack.c.h.b16 %v767
        %v2438 = vunpack.c.l.b16 %v768
        %v2439 = vunpack.c.h.b16 %v768
        %v2440 = vunpack.c.l.b16 %v769
        %v2441 = vunpack.c.h.b16 %v769
        %v2442 = vunpack.c.l.b16 %v770
        %v2443 = vunpack.c.h.b16 %v770
        %v2444 = vunpack.c.l.b16 %v771
        %v2445 = vunpack.c.h.b16 %v771
        %v2446 = vunpack.c.l.b16 %v772
        %v2447 = vunpack.c.h.b16 %v772
        %v2448 = vunpack.c.l.b16 %v773
        %v2449 = vunpack.c.h.b16 %v773
        %v2450 = vunpack.c.l.b16 %v774
        %v2451 = vunpack.c.h.b16 %v774
        %v2452 = vunpack.c.l.b16 %v775
        %v2453 = vunpack.c.h.b16 %v775
        %v2454 = vunpack.c.l.b16 %v776
        %v2455 = vunpack.c.h.b16 %v776
        %v2456 = vunpack.c.l.b16 %v777
        %v2457 = vunpack.c.h.b16 %v777
        %v2458 = vunpack.c.l.b16 %v778
        %v2459 = vunpack.c.h.b16 %v778
        %v2460 = vunpack.c.l.b16 %v779
        %v2461 = vunpack.c.h.b16 %v779
        %v2462 = vunpack.c.l.b16 %v780
        %v2463 = vunpack.c.h.b16 %v780
        %v2464 = vunpack.c.l.b16 %v781
        %v2465 = vunpack.c.h.b16 %v781
        %v2466 = vunpack.c.l.b16 %v782
        %v2467 = vunpack.c.h.b16 %v782
        %v2468 = vunpack.c.l.b16 %v783
        %v2469 = vunpack.c.h.b16 %v783
        %v2470 = vunpack.c.l.b16 %v784
        %v2471 = vunpack.c.h.b16 %v784
        %v2472 = vunpack.c.l.b16 %v785
        %v2473 = vunpack.c.h.b16 %v785
        %v2474 = vunpack.c.l.b16 %v786
        %v2475 = vunpack.c.h.b16 %v786
        %v2476 = vunpack.c.l.b16 %v787
        %v2477 = vunpack.c.h.b16 %v787
        %v2478 = vunpack.c.l.b16 %v788
        %v2479 = vunpack.c.h.b16 %v788
        %v2480 = vunpack.c.l.b16 %v789
        %v2481 = vunpack.c.h.b16 %v789
        %v2482 = vunpack.c.l.b16 %v790
        %v2483 = vunpack.c.h.b16 %v790
        %v2484 = vunpack.c.l.b16 %v791
        %v2485 = vunpack.c.h.b16 %v791
        %v2486 = vunpack.c.l.b16 %v792
        %v2487 = vunpack.c.h.b16 %v792
        %v2488 = vunpack.c.l.b16 %v793
        %v2489 = vunpack.c.h.b16 %v793
        %v2490 = vunpack.c.l.b16 %v794
        %v2491 = vunpack.c.h.b16 %v794
        %v2492 = vunpack.c.l.b16 %v795
        %v2493 = vunpack.c.h.b16 %v795
        %v2494 = vunpack.c.l.b16 %v796
        %v2495 = vunpack.c.h.b16 %v796
        %v2496 = vunpack.c.l.b16 %v797
        %v2497 = vunpack.c.h.b16 %v797
        %v2498 = vunpack.c.l.b16 %v798
        %v2499 = vunpack.c.h.b16 %v798
        %v2500 = vunpack.c.l.b16 %v799
        %v2501 = vunpack.c.h.b16 %v799
        %v2502 = vunpack.c.l.b16 %v800
        %v2503 = vunpack.c.h.b16 %v800
        %v2504 = vunpack.c.l.b16 %v801
        %v2505 = vunpack.c.h.b16 %v801
        %v2506 = vunpack.c.l.b16 %v802
        %v2507 = vunpack.c.h.b16 %v802
        %v2508 = vunpack.c.l.b16 %v803
        %v2509 = vunpack.c.h.b16 %v803
        %v2510 = vunpack.c.l.b16 %v804
        %v2511 = vunpack.c.h.b16 %v804
        %v2512 = vunpack.c.l.b16 %v805
        %v2513 = vunpack.c.h.b16 %v805
        %v2514 = vunpack.c.l.b16 %v806
        %v2515 = vunpack.c.h.b16 %v806
        %v2516 = vunpack.c.l.b16 %v807
        %v2517 = vunpack.c.h.b16 %v807
        %v2518 = vunpack.c.l.b16 %v808
        %v2519 = vunpack.c.h.b16 %v808
        %v2520 = vunpack.c.l.b16 %v809
        %v2521 = vunpack.c.h.b16 %v809
        %v2522 = vunpack.c.l.b16 %v810
        %v2523 = vunpack.c.h.b16 %v810
        %v2524 = vunpack.c.l.b16 %v811
        %v2525 = vunpack.c.h.b16 %v811
        %v2526 = vunpack.c.l.b16 %v812
        %v2527 = vunpack.c.h.b16 %v812
        %v2528 = vunpack.c.l.b16 %v813
        %v2529 = vunpack.c.h.b16 %v813
        %v2530 = vunpack.c.l.b16 %v814
        %v2531 = vunpack.c.h.b16 %v814
        %v2532 = vunpack.c.l.b16 %v815
        %v2533 = vunpack.c.h.b16 %v815
        %v2534 = vunpack.c.l.b16 %v816
        %v2535 = vunpack.c.h.b16 %v816
        %v2536 = vunpack.c.l.b16 %v817
        %v2537 = vunpack.c.h.b16 %v817
        %v2538 = vunpack.c.l.b16 %v818
        %v2539 = vunpack.c.h.b16 %v818
        %v2540 = vunpack.c.l.b16 %v819
        %v2541 = vunpack.c.h.b16 %v819
        %v2542 = vunpack.c.l.b16 %v820
        %v2543 = vunpack.c.h.b16 %v820
        %v2544 = vunpack.c.l.b16 %v821
        %v2545 = vunpack.c.h.b16 %v821
        %v2546 = vunpack.c.l.b16 %v822
        %v2547 = vunpack.c.h.b16 %v822
        %v2548 = vunpack.c.l.b16 %v823
        %v2549 = vunpack.c.h.b16 %v823
        %v2550 = vunpack.c.l.b16 %v824
        %v2551 = vunpack.c.h.b16 %v824
        %v2552 = vunpack.c.l.b16 %v825
        %v2553 = vunpack.c.h.b16 %v825
        %v2554 = vunpack.c.l.b16 %v826
        %v2555 = vunpack.c.h.b16 %v826
        %v2556 = vunpack.c.l.b16 %v827
        %v2557 = vunpack.c.h.b16 %v827
        %v2558 = vunpack.c.l.b16 %v828
        %v2559 = vunpack.c.h.b16 %v828
        %v2560 = vunpack.c.l.b16 %v829
        %v2561 = vunpack.c.h.b16 %v829
        %v2562 = vunpack.c.l.b16 %v830
        %v2563 = vunpack.c.h.b16 %v830
        %v2564 = vunpack.c.l.b16 %v831
        %v2565 = vunpack.c.h.b16 %v831
        %v2566 = vunpack.c.l.b16 %v832
        %v2567 = vunpack.c.h.b16 %v832
        %v2568 = vunpack.c.l.b16 %v833
        %v2569 = vunpack.c.h.b16 %v833
        %v2570 = vunpack.c.l.b16 %v834
        %v2571 = vunpack.c.h.b16 %v834
        %v2572 = vunpack.c.l.b16 %v835
        %v2573 = vunpack.c.h.b16 %v835
        %v2574 = vunpack.c.l.b16 %v836
        %v2575 = vunpack.c.h.b16 %v836
        %v2576 = vunpack.c.l.b16 %v837
        %v2577 = vunpack.c.h.b16 %v837
        %v2578 = vunpack.c.l.b16 %v838
        %v2579 = vunpack.c.h.b16 %v838
        %v2580 = vunpack.c.l.b16 %v839
        %v2581 = vunpack.c.h.b16 %v839
        %v2582 = vunpack.c.l.b16 %v840
        %v2583 = vunpack.c.h.b16 %v840
        %v2584 = vunpack.c.l.b16 %v841
        %v2585 = vunpack.c.h.b16 %v841
        %v2586 = vunpack.c.l.b16 %v842
        %v2587 = vunpack.c.h.b16 %v842
        %v2588 = vunpack.c.l.b16 %v843
        %v2589 = vunpack.c.h.b16 %v843
        %v2590 = vunpack.c.l.b16 %v844
        %v2591 = vunpack.c.h.b16 %v844
        %v2592 = vunpack.c.l.b16 %v845
        %v2593 = vunpack.c.h.b16 %v845
        %v2594 = vunpack.c.l.b16 %v846
        %v2595 = vunpack.c.h.b16 %v846
        %v2596 = vunpack.c.l.b16 %v847
        %v2597 = vunpack.c.h.b16 %v847
        %v2598 = vunpack.c.l.b16 %v848
        %v2599 = vunpack.c.h.b16 %v848
        %v2600 = vunpack.c.l.b16 %v849
        %v2601 = vunpack.c.h.b16 %v849
        %v2602 = vunpack.c.l.b16 %v850
        %v2603 = vunpack.c.h.b16 %v850
        %v2604 = vunpack.c.l.b16 %v851
        %v2605 = vunpack.c.h.b16 %v851
        %v2606 = vunpack.c.l.b16 %v852
        %v2607 = vunpack.c.h.b16 %v852
        %v2608 = vunpack.c.l.b16 %v853
        %v2609 = vunpack.c.h.b16 %v853
        %v2610 = vunpack.c.l.b16 %v854
        %v2611 = vunpack.c.h.b16 %v854
        %v2612 = vunpack.c.l.b16 %v855
        %v2613 = vunpack.c.h.b16 %v855
        %v2614 = vunpack.c.l.b16 %v856
        %v2615 = vunpack.c.h.b16 %v856
        %v2616 = vunpack.c.l.b16 %v857
        %v2617 = vunpack.c.h.b16 %v857
        %v2618 = vunpack.c.l.b16 %v858
        %v2619 = vunpack.c.h.b16 %v858
        %v2620 = vunpack.c.l.b16 %v859
        %v2621 = vunpack.c.h.b16 %v859
        %v2622 = vunpack.c.l.b16 %v860
        %v2623 = vunpack.c.h.b16 %v860
        %v2624 = vunpack.c.l.b16 %v861
        %v2625 = vunpack.c.h.b16 %v861
        %v2626 = vunpack.c.l.b16 %v862
        %v2627 = vunpack.c.h.b16 %v862
        %v2628 = vunpack.c.l.b16 %v863
        %v2629 = vunpack.c.h.b16 %v863
        %v2630 = vunpack.c.l.b16 %v864
        %v2631 = vunpack.c.h.b16 %v864
        %v2632 = vunpack.c.l.b16 %v865
        %v2633 = vunpack.c.h.b16 %v865
        %v2634 = vunpack.c.l.b16 %v866
        %v2635 = vunpack.c.h.b16 %v866
        %v2636 = vunpack.c.l.b16 %v867
        %v2637 = vunpack.c.h.b16 %v867
        %v2638 = vunpack.c.l.b16 %v868
        %v2639 = vunpack.c.h.b16 %v868
        %v2640 = vunpack.c.l.b16 %v869
        %v2641 = vunpack.c.h.b16 %v869
        %v2642 = vunpack.c.l.b16 %v870
        %v2643 = vunpack.c.h.b16 %v870
        %v2644 = vunpack.c.l.b16 %v871
        %v2645 = vunpack.c.h.b16 %v871
        %v2646 = vunpack.c.l.b16 %v872
        %v2647 = vunpack.c.h.b16 %v872
        %v2648 = vunpack.c.l.b16 %v873
        %v2649 = vunpack.c.h.b16 %v873
        %v2650 = vunpack.c.l.b16 %v874
        %v2651 = vunpack.c.h.b16 %v874
        %v2652 = vunpack.c.l.b16 %v875
        %v2653 = vunpack.c.h.b16 %v875
        %v2654 = vunpack.c.l.b16 %v876
        %v2655 = vunpack.c.h.b16 %v876
        %v2656 = vunpack.c.l.b16 %v877
        %v2657 = vunpack.c.h.b16 %v877
        %v2658 = vunpack.c.l.b16 %v878
        %v2659 = vunpack.c.h.b16 %v878
        %v2660 = vunpack.c.l.b16 %v879
        %v2661 = vunpack.c.h.b16 %v879
        %v2662 = vunpack.c.l.b16 %v880
        %v2663 = vunpack.c.h.b16 %v880
        %v2664 = vunpack.c.l.b16 %v881
        %v2665 = vunpack.c.h.b16 %v881
        %v2666 = vunpack.c.l.b16 %v882
        %v2667 = vunpack.c.h.b16 %v882
        %v2668 = vunpack.c.l.b16 %v883
        %v2669 = vunpack.c.h.b16 %v883
        %v2670 = vunpack.c.l.b16 %v884
        %v2671 = vunpack.c.h.b16 %v884
        %v2672 = vunpack.c.l.b16 %v885
        %v2673 = vunpack.c.h.b16 %v885
        %v2674 = vunpack.c.l.b16 %v886
        %v2675 = vunpack.c.h.b16 %v886
        %v2676 = vunpack.c.l.b16 %v887
        %v2677 = vunpack.c.h.b16 %v887
        %v2678 = vunpack.c.l.b16 %v888
        %v2679 = vunpack.c.h.b16 %v888
        %v2680 = vunpack.c.l.b16 %v889
        %v2681 = vunpack.c.h.b16 %v889
        %v2682 = vunpack.c.l.b16 %v890
        %v2683 = vunpack.c.h.b16 %v890
        %v2684 = vunpack.c.l.b16 %v891
        %v2685 = vunpack.c.h.b16 %v891
        %v2686 = vunpack.c.l.b16 %v892
        %v2687 = vunpack.c.h.b16 %v892
        %v2688 = vunpack.c.l.b16 %v893
        %v2689 = vunpack.c.h.b16 %v893
        %v2690 = vunpack.c.l.b16 %v894
        %v2691 = vunpack.c.h.b16 %v894
        %v2692 = vunpack.c.l.b16 %v895
        %v2693 = vunpack.c.h.b16 %v895
        %v2694 = vunpack.c.l.b16 %v896
        %v2695 = vunpack.c.h.b16 %v896
        %v2696 = vunpack.c.l.b16 %v897
        %v2697 = vunpack.c.h.b16 %v897
        %v2698 = vunpack.c.l.b16 %v898
        %v2699 = vunpack.c.h.b16 %v898
        %v2700 = vunpack.c.l.b16 %v899
        %v2701 = vunpack.c.h.b16 %v899
        %v2702 = vunpack.c.l.b16 %v900
        %v2703 = vunpack.c.h.b16 %v900
        %v2704 = vunpack.c.l.b16 %v901
        %v2705 = vunpack.c.h.b16 %v901
        %v2706 = vunpack.c.l.b16 %v902
        %v2707 = vunpack.c.h.b16 %v902
        %v2708 = vunpack.c.l.b16 %v903
        %v2709 = vunpack.c.h.b16 %v903
        %v2710 = vunpack.c.l.b16 %v904
        %v2711 = vunpack.c.h.b16 %v904
        %v2712 = vunpack.c.l.b16 %v905
        %v2713 = vunpack.c.h.b16 %v905
        %v2714 = vunpack.c.l.b16 %v906
        %v2715 = vunpack.c.h.b16 %v906
        %v2716 = vunpack.c.l.b16 %v907
        %v2717 = vunpack.c.h.b16 %v907
        %v2718 = vunpack.c.l.b16 %v908
        %v2719 = vunpack.c.h.b16 %v908
        %v2720 = vunpack.c.l.b16 %v909
        %v2721 = vunpack.c.h.b16 %v909
        %v2722 = vunpack.c.l.b16 %v910
        %v2723 = vunpack.c.h.b16 %v910
        %v2724 = vunpack.c.l.b16 %v911
        %v2725 = vunpack.c.h.b16 %v911
        %v2726 = vunpack.c.l.b16 %v912
        %v2727 = vunpack.c.h.b16 %v912
        %v2728 = vunpack.c.l.b16 %v913
        %v2729 = vunpack.c.h.b16 %v913
        %v2730 = vunpack.c.l.b16 %v914
        %v2731 = vunpack.c.h.b16 %v914
        %v2732 = vunpack.c.l.b16 %v915
        %v2733 = vunpack.c.h.b16 %v915
        %v2734 = vunpack.c.l.b16 %v916
        %v2735 = vunpack.c.h.b16 %v916
        %v2736 = vunpack.c.l.b16 %v917
        %v2737 = vunpack.c.h.b16 %v917
        %v2738 = vunpack.c.l.b16 %v918
        %v2739 = vunpack.c.h.b16 %v918
        %v2740 = vunpack.c.l.b16 %v919
        %v2741 = vunpack.c.h.b16 %v919
        %v2742 = vunpack.c.l.b16 %v920
        %v2743 = vunpack.c.h.b16 %v920
        %v2744 = vunpack.c.l.b16 %v921
        %v2745 = vunpack.c.h.b16 %v921
        %v2746 = vunpack.c.l.b16 %v922
        %v2747 = vunpack.c.h.b16 %v922
        %v2748 = vunpack.c.l.b16 %v923
        %v2749 = vunpack.c.h.b16 %v923
        %v2750 = vunpack.c.l.b16 %v924
        %v2751 = vunpack.c.h.b16 %v924
        %v2752 = vunpack.c.l.b16 %v925
        %v2753 = vunpack.c.h.b16 %v925
        %v2754 = vunpack.c.l.b16 %v926
        %v2755 = vunpack.c.h.b16 %v926
        %v2756 = vunpack.c.l.b16 %v927
        %v2757 = vunpack.c.h.b16 %v927
        %v2758 = vunpack.c.l.b16 %v928
        %v2759 = vunpack.c.h.b16 %v928
        %v2760 = vunpack.c.l.b16 %v929
        %v2761 = vunpack.c.h.b16 %v929
        %v2762 = vunpack.c.l.b16 %v930
        %v2763 = vunpack.c.h.b16 %v930
        %v2764 = vunpack.c.l.b16 %v931
        %v2765 = vunpack.c.h.b16 %v931
        %v2766 = vunpack.c.l.b16 %v932
        %v2767 = vunpack.c.h.b16 %v932
        %v2768 = vunpack.c.l.b16 %v933
        %v2769 = vunpack.c.h.b16 %v933
        %v2770 = vunpack.c.l.b16 %v934
        %v2771 = vunpack.c.h.b16 %v934
        %v2772 = vunpack.c.l.b16 %v935
        %v2773 = vunpack.c.h.b16 %v935
        %v2774 = vunpack.c.l.b16 %v936
        %v2775 = vunpack.c.h.b16 %v936
        %v2776 = vunpack.c.l.b16 %v937
        %v2777 = vunpack.c.h.b16 %v937
        %v2778 = vunpack.c.l.b16 %v938
        %v2779 = vunpack.c.h.b16 %v938
        %v2780 = vunpack.c.l.b16 %v939
        %v2781 = vunpack.c.h.b16 %v939
        %v2782 = vunpack.c.l.b16 %v940
        %v2783 = vunpack.c.h.b16 %v940
        %v2784 = vunpack.c.l.b16 %v941
        %v2785 = vunpack.c.h.b16 %v941
        %v2786 = vunpack.c.l.b16 %v942
        %v2787 = vunpack.c.h.b16 %v942
        %v2788 = vunpack.c.l.b16 %v943
        %v2789 = vunpack.c.h.b16 %v943
        %v2790 = vunpack.c.l.b16 %v944
        %v2791 = vunpack.c.h.b16 %v944
        %v2792 = vunpack.c.l.b16 %v945
        %v2793 = vunpack.c.h.b16 %v945
        %v2794 = vunpack.c.l.b16 %v946
        %v2795 = vunpack.c.h.b16 %v946
        %v2796 = vunpack.c.l.b16 %v947
        %v2797 = vunpack.c.h.b16 %v947
        %v2798 = vunpack.c.l.b16 %v948
        %v2799 = vunpack.c.h.b16 %v948
        %v2800 = vunpack.c.l.b16 %v949
        %v2801 = vunpack.c.h.b16 %v949
        %v2802 = vunpack.c.l.b16 %v950
        %v2803 = vunpack.c.h.b16 %v950
        %v2804 = vunpack.c.l.b16 %v951
        %v2805 = vunpack.c.h.b16 %v951
        %v2806 = vunpack.c.l.b16 %v952
        %v2807 = vunpack.c.h.b16 %v952
        %v2808 = vunpack.c.l.b16 %v953
        %v2809 = vunpack.c.h.b16 %v953
        %v2810 = vunpack.c.l.b16 %v954
        %v2811 = vunpack.c.h.b16 %v954
        %v2812 = vunpack.c.l.b16 %v955
        %v2813 = vunpack.c.h.b16 %v955
        %v2814 = vunpack.c.l.b16 %v956
        %v2815 = vunpack.c.h.b16 %v956
        %v2816 = vunpack.c.l.b16 %v957
        %v2817 = vunpack.c.h.b16 %v957
        %v2818 = vunpack.c.l.b16 %v958
        %v2819 = vunpack.c.h.b16 %v958
        %v2820 = vunpack.c.l.b16 %v959
        %v2821 = vunpack.c.h.b16 %v959
        %v2822 = vunpack.c.l.b16 %v960
        %v2823 = vunpack.c.h.b16 %v960
        %v2824 = vunpack.c.l.b16 %v961
        %v2825 = vunpack.c.h.b16 %v961
        %v2826 = vunpack.c.l.b16 %v962
        %v2827 = vunpack.c.h.b16 %v962
        %v2828 = vunpack.c.l.b16 %v963
        %v2829 = vunpack.c.h.b16 %v963
        %v2830 = vunpack.c.l.b16 %v964
        %v2831 = vunpack.c.h.b16 %v964
        %v2832 = vunpack.c.l.b16 %v965
        %v2833 = vunpack.c.h.b16 %v965
        %v2834 = vunpack.c.l.b16 %v966
        %v2835 = vunpack.c.h.b16 %v966
        %v2836 = vunpack.c.l.b16 %v967
        %v2837 = vunpack.c.h.b16 %v967
        %v2838 = vunpack.c.l.b16 %v968
        %v2839 = vunpack.c.h.b16 %v968
        %v2840 = vunpack.c.l.b16 %v969
        %v2841 = vunpack.c.h.b16 %v969
        %v2842 = vunpack.c.l.b16 %v970
        %v2843 = vunpack.c.h.b16 %v970
        %v2844 = vunpack.c.l.b16 %v971
        %v2845 = vunpack.c.h.b16 %v971
        %v2846 = vunpack.c.l.b16 %v972
        %v2847 = vunpack.c.h.b16 %v972
        %v2848 = vunpack.c.l.b16 %v973
        %v2849 = vunpack.c.h.b16 %v973
        %v2850 = vunpack.c.l.b16 %v974
        %v2851 = vunpack.c.h.b16 %v974
        %v2852 = vunpack.c.l.b16 %v975
        %v2853 = vunpack.c.h.b16 %v975
        %v2854 = vunpack.c.l.b16 %v976
        %v2855 = vunpack.c.h.b16 %v976
        %v2856 = vunpack.c.l.b16 %v977
        %v2857 = vunpack.c.h.b16 %v977
        %v2858 = vunpack.c.l.b16 %v978
        %v2859 = vunpack.c.h.b16 %v978
        %v2860 = vunpack.c.l.b16 %v979
        %v2861 = vunpack.c.h.b16 %v979
        %v2862 = vunpack.c.l.b16 %v980
        %v2863 = vunpack.c.h.b16 %v980
        %v2864 = vunpack.c.l.b16 %v981
        %v2865 = vunpack.c.h.b16 %v981
        %v2866 = vunpack.c.l.b16 %v982
        %v2867 = vunpack.c.h.b16 %v982
        %v2868 = vunpack.c.l.b16 %v983
        %v2869 = vunpack.c.h.b16 %v983
        %v2870 = vunpack.c.l.b16 %v984
        %v2871 = vunpack.c.h.b16 %v984
        %v2872 = vunpack.c.l.b16 %v985
        %v2873 = vunpack.c.h.b16 %v985
        %v2874 = vunpack.c.l.b16 %v986
        %v2875 = vunpack.c.h.b16 %v986
        %v2876 = vunpack.c.l.b16 %v987
        %v2877 = vunpack.c.h.b16 %v987
        %v2878 = vunpack.c.l.b16 %v988
        %v2879 = vunpack.c.h.b16 %v988
        %v2880 = vunpack.c.l.b16 %v989
        %v2881 = vunpack.c.h.b16 %v989
        %v2882 = vunpack.c.l.b16 %v990
        %v2883 = vunpack.c.h.b16 %v990
        %v2884 = vunpack.c.l.b16 %v991
        %v2885 = vunpack.c.h.b16 %v991
        %v2886 = vunpack.c.l.b16 %v992
        %v2887 = vunpack.c.h.b16 %v992
        %v2888 = vunpack.c.l.b16 %v993
        %v2889 = vunpack.c.h.b16 %v993
        %v2890 = vunpack.c.l.b16 %v994
        %v2891 = vunpack.c.h.b16 %v994
        %v2892 = vunpack.c.l.b16 %v995
        %v2893 = vunpack.c.h.b16 %v995
        %v2894 = vunpack.c.l.b16 %v996
        %v2895 = vunpack.c.h.b16 %v996
        %v2896 = vunpack.c.l.b16 %v997
        %v2897 = vunpack.c.h.b16 %v997
        %v2898 = vunpack.c.l.b16 %v998
        %v2899 = vunpack.c.h.b16 %v998
        %v2900 = vunpack.c.l.b16 %v999
        %v2901 = vunpack.c.h.b16 %v999
        %v2902 = vunpack.c.l.b16 %v1000
        %v2903 = vunpack.c.h.b16 %v1000
        %v2904 = vunpack.c.l.b16 %v1001
        %v2905 = vunpack.c.h.b16 %v1001
        %v2906 = vunpack.c.l.b16 %v1002
        %v2907 = vunpack.c.h.b16 %v1002
        %v2908 = vunpack.c.l.b16 %v1003
        %v2909 = vunpack.c.h.b16 %v1003
        %v2910 = vunpack.c.l.b16 %v1004
        %v2911 = vunpack.c.h.b16 %v1004
        %v2912 = vunpack.c.l.b16 %v1005
        %v2913 = vunpack.c.h.b16 %v1005
        %v2914 = vpack.c.b16 %v1764, %v1762
        %v2915 = vpack.c.b16 %v1765, %v1763
        %v2916 = vpack.c.b16 %v1768, %v1766
        %v2917 = vpack.c.b16 %v1769, %v1767
        %v2918 = vpack.c.b16 %v1772, %v1770
        %v2919 = vpack.c.b16 %v1773, %v1771
        %v2920 = vpack.c.b16 %v1776, %v1774
        %v2921 = vpack.c.b16 %v1777, %v1775
        %v2922 = vpack.c.b16 %v1780, %v1778
        %v2923 = vpack.c.b16 %v1781, %v1779
        %v2924 = vpack.c.b16 %v1784, %v1782
        %v2925 = vpack.c.b16 %v1785, %v1783
        %v2926 = vpack.c.b16 %v1788, %v1786
        %v2927 = vpack.c.b16 %v1789, %v1787
        %v2928 = vpack.c.b16 %v1792, %v1790
        %v2929 = vpack.c.b16 %v1793, %v1791
        %v2930 = vpack.c.b16 %v1796, %v1794
        %v2931 = vpack.c.b16 %v1797, %v1795
        %v2932 = vpack.c.b16 %v1800, %v1798
        %v2933 = vpack.c.b16 %v1801, %v1799
        %v2934 = vpack.c.b16 %v1804, %v1802
        %v2935 = vpack.c.b16 %v1805, %v1803
        %v2936 = vpack.c.b16 %v1808, %v1806
        %v2937 = vpack.c.b16 %v1809, %v1807
        %v2938 = vpack.c.b16 %v1812, %v1810
        %v2939 = vpack.c.b16 %v1813, %v1811
        %v2940 = vpack.c.b16 %v1816, %v1814
        %v2941 = vpack.c.b16 %v1817, %v1815
        %v2942 = vpack.c.b16 %v1820, %v1818
        %v2943 = vpack.c.b16 %v1821, %v1819
        %v2944 = vpack.c.b16 %v1824, %v1822
        %v2945 = vpack.c.b16 %v1825, %v1823
        %v2946 = vpack.c.b16 %v1828, %v1826
        %v2947 = vpack.c.b16 %v1829, %v1827
        %v2948 = vpack.c.b16 %v1832, %v1830
        %v2949 = vpack.c.b16 %v1833, %v1831
        %v2950 = vpack.c.b16 %v1836, %v1834
        %v2951 = vpack.c.b16 %v1837, %v1835
        %v2952 = vpack.c.b16 %v1840, %v1838
        %v2953 = vpack.c.b16 %v1841, %v1839
        %v2954 = vpack.c.b16 %v1844, %v1842
        %v2955 = vpack.c.b16 %v1845, %v1843
        %v2956 = vpack.c.b16 %v1848, %v1846
        %v2957 = vpack.c.b16 %v1849, %v1847
        %v2958 = vpack.c.b16 %v1852, %v1850
        %v2959 = vpack.c.b16 %v1853, %v1851
        %v2960 = vpack.c.b16 %v1856, %v1854
        %v2961 = vpack.c.b16 %v1857, %v1855
        %v2962 = vpack.c.b16 %v1860, %v1858
        %v2963 = vpack.c.b16 %v1861, %v1859
        %v2964 = vpack.c.b16 %v1864, %v1862
        %v2965 = vpack.c.b16 %v1865, %v1863
        %v2966 = vpack.c.b16 %v1868, %v1866
        %v2967 = vpack.c.b16 %v1869, %v1867
        %v2968 = vpack.c.b16 %v1872, %v1870
        %v2969 = vpack.c.b16 %v1873, %v1871
        %v2970 = vpack.c.b16 %v1876, %v1874
        %v2971 = vpack.c.b16 %v1877, %v1875
        %v2972 = vpack.c.b16 %v1880, %v1878
        %v2973 = vpack.c.b16 %v1881, %v1879
        %v2974 = vpack.c.b16 %v1884, %v1882
        %v2975 = vpack.c.b16 %v1885, %v1883
        %v2976 = vpack.c.b16 %v1888, %v1886
        %v2977 = vpack.c.b16 %v1889, %v1887
        %v2978 = vpack.c.b16 %v1892, %v1890
        %v2979 = vpack.c.b16 %v1893, %v1891
        %v2980 = vpack.c.b16 %v1896, %v1894
        %v2981 = vpack.c.b16 %v1897, %v1895
        %v2982 = vpack.c.b16 %v1900, %v1898
        %v2983 = vpack.c.b16 %v1901, %v1899
        %v2984 = vpack.c.b16 %v1904, %v1902
        %v2985 = vpack.c.b16 %v1905, %v1903
        %v2986 = vpack.c.b16 %v1908, %v1906
        %v2987 = vpack.c.b16 %v1909, %v1907
        %v2988 = vpack.c.b16 %v1912, %v1910
        %v2989 = vpack.c.b16 %v1913, %v1911
        %v2990 = vpack.c.b16 %v1916, %v1914
        %v2991 = vpack.c.b16 %v1917, %v1915
        %v2992 = vpack.c.b16 %v1920, %v1918
        %v2993 = vpack.c.b16 %v1921, %v1919
        %v2994 = vpack.c.b16 %v1924, %v1922
        %v2995 = vpack.c.b16 %v1925, %v1923
        %v2996 = vpack.c.b16 %v1928, %v1926
        %v2997 = vpack.c.b16 %v1929, %v1927
        %v2998 = vpack.c.b16 %v1932, %v1930
        %v2999 = vpack.c.b16 %v1933, %v1931
        %v3000 = vpack.c.b16 %v1936, %v1934
        %v3001 = vpack.c.b16 %v1937, %v1935
        %v3002 = vpack.c.b16 %v1940, %v1938
        %v3003 = vpack.c.b16 %v1941, %v1939
        %v3004 = vpack.c.b16 %v1944, %v1942
        %v3005 = vpack.c.b16 %v1945, %v1943
        %v3006 = vpack.c.b16 %v1948, %v1946
        %v3007 = vpack.c.b16 %v1949, %v1947
        %v3008 = vpack.c.b16 %v1952, %v1950
        %v3009 = vpack.c.b16 %v1953, %v1951
        %v3010 = vpack.c.b16 %v1956, %v1954
        %v3011 = vpack.c.b16 %v1957, %v1955
        %v3012 = vpack.c.b16 %v1960, %v1958
        %v3013 = vpack.c.b16 %v1961, %v1959
        %v3014 = vpack.c.b16 %v1964, %v1962
        %v3015 = vpack.c.b16 %v1965, %v1963
        %v3016 = vpack.c.b16 %v1968, %v1966
        %v3017 = vpack.c.b16 %v1969, %v1967
        %v3018 = vpack.c.b16 %v1972, %v1970
        %v3019 = vpack.c.b16 %v1973, %v1971
        %v3020 = vpack.c.b16 %v1976, %v1974
        %v3021 = vpack.c.b16 %v1977, %v1975
        %v3022 = vpack.c.b16 %v1980, %v1978
        %v3023 = vpack.c.b16 %v1981, %v1979
        %v3024 = vpack.c.b16 %v1984, %v1982
        %v3025 = vpack.c.b16 %v1985, %v1983
        %v3026 = vpack.c.b16 %v1988, %v1986
        %v3027 = vpack.c.b16 %v1989, %v1987
        %v3028 = vpack.c.b16 %v1992, %v1990
        %v3029 = vpack.c.b16 %v1993, %v1991
        %v3030 = vpack.c.b16 %v1996, %v1994
        %v3031 = vpack.c.b16 %v1997, %v1995
        %v3032 = vpack.c.b16 %v2000, %v1998
        %v3033 = vpack.c.b16 %v2001, %v1999
        %v3034 = vpack.c.b16 %v2004, %v2002
        %v3035 = vpack.c.b16 %v2005, %v2003
        %v3036 = vpack.c.b16 %v2008, %v2006
        %v3037 = vpack.c.b16 %v2009, %v2007
        %v3038 = vpack.c.b16 %v2012, %v2010
        %v3039 = vpack.c.b16 %v2013, %v2011
        %v3040 = vpack.c.b16 %v2016, %v2014
        %v3041 = vpack.c.b16 %v2017, %v2015
        %v3042 = vpack.c.b16 %v2020, %v2018
        %v3043 = vpack.c.b16 %v2021, %v2019
        %v3044 = vpack.c.b16 %v2024, %v2022
        %v3045 = vpack.c.b16 %v2025, %v2023
        %v3046 = vpack.c.b16 %v2028, %v2026
        %v3047 = vpack.c.b16 %v2029, %v2027
        %v3048 = vpack.c.b16 %v2032, %v2030
        %v3049 = vpack.c.b16 %v2033, %v2031
        %v3050 = vpack.c.b16 %v2036, %v2034
        %v3051 = vpack.c.b16 %v2037, %v2035
        %v3052 = vpack.c.b16 %v2040, %v2038
        %v3053 = vpack.c.b16 %v2041, %v2039
        %v3054 = vpack.c.b16 %v2044, %v2042
        %v3055 = vpack.c.b16 %v2045, %v2043
        %v3056 = vpack.c.b16 %v2048, %v2046
        %v3057 = vpack.c.b16 %v2049, %v2047
        %v3058 = vpack.c.b16 %v2052, %v2050
        %v3059 = vpack.c.b16 %v2053, %v2051
        %v3060 = vpack.c.b16 %v2056, %v2054
        %v3061 = vpack.c.b16 %v2057, %v2055
        %v3062 = vpack.c.b16 %v2060, %v2058
        %v3063 = vpack.c.b16 %v2061, %v2059
        %v3064 = vpack.c.b16 %v2064, %v2062
        %v3065 = vpack.c.b16 %v2065, %v2063
        %v3066 = vpack.c.b16 %v2068, %v2066
        %v3067 = vpack.c.b16 %v2069, %v2067
        %v3068 = vpack.c.b16 %v2072, %v2070
        %v3069 = vpack.c.b16 %v2073, %v2071
        %v3070 = vpack.c.b16 %v2076, %v2074
        %v3071 = vpack.c.b16 %v2077, %v2075
        %v3072 = vpack.c.b16 %v2080, %v2078
        %v3073 = vpack.c.b16 %v2081, %v2079
        %v3074 = vpack.c.b16 %v2084, %v2082
        %v3075 = vpack.c.b16 %v2085, %v2083
        %v3076 = vpack.c.b16 %v2088, %v2086
        %v3077 = vpack.c.b16 %v2089, %v2087
        %v3078 = vpack.c.b16 %v2092, %v2090
        %v3079 = vpack.c.b16 %v2093, %v2091
        %v3080 = vpack.c.b16 %v2096, %v2094
        %v3081 = vpack.c.b16 %v2097, %v2095
        %v3082 = vpack.c.b16 %v2100, %v2098
        %v3083 = vpack.c.b16 %v2101, %v2099
        %v3084 = vpack.c.b16 %v2104, %v2102
        %v3085 = vpack.c.b16 %v2105, %v2103
        %v3086 = vpack.c.b16 %v2108, %v2106
        %v3087 = vpack.c.b16 %v2109, %v2107
        %v3088 = vpack.c.b16 %v2112, %v2110
        %v3089 = vpack.c.b16 %v2113, %v2111
        %v3090 = vpack.c.b16 %v2116, %v2114
        %v3091 = vpack.c.b16 %v2117, %v2115
        %v3092 = vpack.c.b16 %v2120, %v2118
        %v3093 = vpack.c.b16 %v2121, %v2119
        %v3094 = vpack.c.b16 %v2124, %v2122
        %v3095 = vpack.c.b16 %v2125, %v2123
        %v3096 = vpack.c.b16 %v2128, %v2126
        %v3097 = vpack.c.b16 %v2129, %v2127
        %v3098 = vpack.c.b16 %v2132, %v2130
        %v3099 = vpack.c.b16 %v2133, %v2131
        %v3100 = vpack.c.b16 %v2136, %v2134
        %v3101 = vpack.c.b16 %v2137, %v2135
        %v3102 = vpack.c.b16 %v2140, %v2138
        %v3103 = vpack.c.b16 %v2141, %v2139
        %v3104 = vpack.c.b16 %v2144, %v2142
        %v3105 = vpack.c.b16 %v2145, %v2143
        %v3106 = vpack.c.b16 %v2148, %v2146
        %v3107 = vpack.c.b16 %v2149, %v2147
        %v3108 = vpack.c.b16 %v2152, %v2150
        %v3109 = vpack.c.b16 %v2153, %v2151
        %v3110 = vpack.c.b16 %v2156, %v2154
        %v3111 = vpack.c.b16 %v2157, %v2155
        %v3112 = vpack.c.b16 %v2160, %v2158
        %v3113 = vpack.c.b16 %v2161, %v2159
        %v3114 = vpack.c.b16 %v2164, %v2162
        %v3115 = vpack.c.b16 %v2165, %v2163
        %v3116 = vpack.c.b16 %v2168, %v2166
        %v3117 = vpack.c.b16 %v2169, %v2167
        %v3118 = vpack.c.b16 %v2172, %v2170
        %v3119 = vpack.c.b16 %v2173, %v2171
        %v3120 = vpack.c.b16 %v2176, %v2174
        %v3121 = vpack.c.b16 %v2177, %v2175
        %v3122 = vpack.c.b16 %v2180, %v2178
        %v3123 = vpack.c.b16 %v2181, %v2179
        %v3124 = vpack.c.b16 %v2184, %v2182
        %v3125 = vpack.c.b16 %v2185, %v2183
        %v3126 = vpack.c.b16 %v2188, %v2186
        %v3127 = vpack.c.b16 %v2189, %v2187
        %v3128 = vpack.c.b16 %v2192, %v2190
        %v3129 = vpack.c.b16 %v2193, %v2191
        %v3130 = vpack.c.b16 %v2196, %v2194
        %v3131 = vpack.c.b16 %v2197, %v2195
        %v3132 = vpack.c.b16 %v2200, %v2198
        %v3133 = vpack.c.b16 %v2201, %v2199
        %v3134 = vpack.c.b16 %v2204, %v2202
        %v3135 = vpack.c.b16 %v2205, %v2203
        %v3136 = vpack.c.b16 %v2208, %v2206
        %v3137 = vpack.c.b16 %v2209, %v2207
        %v3138 = vpack.c.b16 %v2212, %v2210
        %v3139 = vpack.c.b16 %v2213, %v2211
        %v3140 = vpack.c.b16 %v2216, %v2214
        %v3141 = vpack.c.b16 %v2217, %v2215
        %v3142 = vpack.c.b16 %v2220, %v2218
        %v3143 = vpack.c.b16 %v2221, %v2219
        %v3144 = vpack.c.b16 %v2224, %v2222
        %v3145 = vpack.c.b16 %v2225, %v2223
        %v3146 = vpack.c.b16 %v2228, %v2226
        %v3147 = vpack.c.b16 %v2229, %v2227
        %v3148 = vpack.c.b16 %v2232, %v2230
        %v3149 = vpack.c.b16 %v2233, %v2231
        %v3150 = vpack.c.b16 %v2236, %v2234
        %v3151 = vpack.c.b16 %v2237, %v2235
        %v3152 = vpack.c.b16 %v2240, %v2238
        %v3153 = vpack.c.b16 %v2241, %v2239
        %v3154 = vpack.c.b16 %v2244, %v2242
        %v3155 = vpack.c.b16 %v2245, %v2243
        %v3156 = vpack.c.b16 %v2248, %v2246
        %v3157 = vpack.c.b16 %v2249, %v2247
        %v3158 = vpack.c.b16 %v2252, %v2250
        %v3159 = vpack.c.b16 %v2253, %v2251
        %v3160 = vpack.c.b16 %v2256, %v2254
        %v3161 = vpack.c.b16 %v2257, %v2255
        %v3162 = vpack.c.b16 %v2260, %v2258
        %v3163 = vpack.c.b16 %v2261, %v2259
        %v3164 = vpack.c.b16 %v2264, %v2262
        %v3165 = vpack.c.b16 %v2265, %v2263
        %v3166 = vpack.c.b16 %v2268, %v2266
        %v3167 = vpack.c.b16 %v2269, %v2267
        %v3168 = vpack.c.b16 %v2272, %v2270
        %v3169 = vpack.c.b16 %v2273, %v2271
        %v3170 = vpack.c.b16 %v2276, %v2274
        %v3171 = vpack.c.b16 %v2277, %v2275
        %v3172 = vpack.c.b16 %v2280, %v2278
        %v3173 = vpack.c.b16 %v2281, %v2279
        %v3174 = vpack.c.b16 %v2284, %v2282
        %v3175 = vpack.c.b16 %v2285, %v2283
        %v3176 = vpack.c.b16 %v2288, %v2286
        %v3177 = vpack.c.b16 %v2289, %v2287
        %v3178 = vpack.c.b16 %v2292, %v2290
        %v3179 = vpack.c.b16 %v2293, %v2291
        %v3180 = vpack.c.b16 %v2296, %v2294
        %v3181 = vpack.c.b16 %v2297, %v2295
        %v3182 = vpack.c.b16 %v2300, %v2298
        %v3183 = vpack.c.b16 %v2301, %v2299
        %v3184 = vpack.c.b16 %v2304, %v2302
        %v3185 = vpack.c.b16 %v2305, %v2303
        %v3186 = vpack.c.b16 %v2308, %v2306
        %v3187 = vpack.c.b16 %v2309, %v2307
        %v3188 = vpack.c.b16 %v2312, %v2310
        %v3189 = vpack.c.b16 %v2313, %v2311
        %v3190 = vpack.c.b16 %v2316, %v2314
        %v3191 = vpack.c.b16 %v2317, %v2315
        %v3192 = vpack.c.b16 %v2320, %v2318
        %v3193 = vpack.c.b16 %v2321, %v2319
        %v3194 = vpack.c.b16 %v2324, %v2322
        %v3195 = vpack.c.b16 %v2325, %v2323
        %v3196 = vpack.c.b16 %v2328, %v2326
        %v3197 = vpack.c.b16 %v2329, %v2327
        %v3198 = vpack.c.b16 %v2332, %v2330
        %v3199 = vpack.c.b16 %v2333, %v2331
        %v3200 = vpack.c.b16 %v2336, %v2334
        %v3201 = vpack.c.b16 %v2337, %v2335
        %v3202 = vpack.c.b16 %v2340, %v2338
        %v3203 = vpack.c.b16 %v2341, %v2339
        %v3204 = vpack.c.b16 %v2344, %v2342
        %v3205 = vpack.c.b16 %v2345, %v2343
        %v3206 = vpack.c.b16 %v2348, %v2346
        %v3207 = vpack.c.b16 %v2349, %v2347
        %v3208 = vpack.c.b16 %v2352, %v2350
        %v3209 = vpack.c.b16 %v2353, %v2351
        %v3210 = vpack.c.b16 %v2356, %v2354
        %v3211 = vpack.c.b16 %v2357, %v2355
        %v3212 = vpack.c.b16 %v2360, %v2358
        %v3213 = vpack.c.b16 %v2361, %v2359
        %v3214 = vpack.c.b16 %v2364, %v2362
        %v3215 = vpack.c.b16 %v2365, %v2363
        %v3216 = vpack.c.b16 %v2368, %v2366
        %v3217 = vpack.c.b16 %v2369, %v2367
        %v3218 = vpack.c.b16 %v2372, %v2370
        %v3219 = vpack.c.b16 %v2373, %v2371
        %v3220 = vpack.c.b16 %v2376, %v2374
        %v3221 = vpack.c.b16 %v2377, %v2375
        %v3222 = vpack.c.b16 %v2380, %v2378
        %v3223 = vpack.c.b16 %v2381, %v2379
        %v3224 = vpack.c.b16 %v2384, %v2382
        %v3225 = vpack.c.b16 %v2385, %v2383
        %v3226 = vpack.c.b16 %v2388, %v2386
        %v3227 = vpack.c.b16 %v2389, %v2387
        %v3228 = vpack.c.b16 %v2392, %v2390
        %v3229 = vpack.c.b16 %v2393, %v2391
        %v3230 = vpack.c.b16 %v2396, %v2394
        %v3231 = vpack.c.b16 %v2397, %v2395
        %v3232 = vpack.c.b16 %v2400, %v2398
        %v3233 = vpack.c.b16 %v2401, %v2399
        %v3234 = vpack.c.b16 %v2404, %v2402
        %v3235 = vpack.c.b16 %v2405, %v2403
        %v3236 = vpack.c.b16 %v2408, %v2406
        %v3237 = vpack.c.b16 %v2409, %v2407
        %v3238 = vpack.c.b16 %v2412, %v2410
        %v3239 = vpack.c.b16 %v2413, %v2411
        %v3240 = vpack.c.b16 %v2416, %v2414
        %v3241 = vpack.c.b16 %v2417, %v2415
        %v3242 = vpack.c.b16 %v2420, %v2418
        %v3243 = vpack.c.b16 %v2421, %v2419
        %v3244 = vpack.c.b16 %v2424, %v2422
        %v3245 = vpack.c.b16 %v2425, %v2423
        %v3246 = vpack.c.b16 %v2428, %v2426
        %v3247 = vpack.c.b16 %v2429, %v2427
        %v3248 = vpack.c.b16 %v2432, %v2430
        %v3249 = vpack.c.b16 %v2433, %v2431
        %v3250 = vpack.c.b16 %v2436, %v2434
        %v3251 = vpack.c.b16 %v2437, %v2435
        %v3252 = vpack.c.b16 %v2440, %v2438
        %v3253 = vpack.c.b16 %v2441, %v2439
        %v3254 = vpack.c.b16 %v2444, %v2442
        %v3255 = vpack.c.b16 %v2445, %v2443
        %v3256 = vpack.c.b16 %v2448, %v2446
        %v3257 = vpack.c.b16 %v2449, %v2447
        %v3258 = vpack.c.b16 %v2452, %v2450
        %v3259 = vpack.c.b16 %v2453, %v2451
        %v3260 = vpack.c.b16 %v2456, %v2454
        %v3261 = vpack.c.b16 %v2457, %v2455
        %v3262 = vpack.c.b16 %v2460, %v2458
        %v3263 = vpack.c.b16 %v2461, %v2459
        %v3264 = vpack.c.b16 %v2464, %v2462
        %v3265 = vpack.c.b16 %v2465, %v2463
        %v3266 = vpack.c.b16 %v2468, %v2466
        %v3267 = vpack.c.b16 %v2469, %v2467
        %v3268 = vpack.c.b16 %v2472, %v2470
        %v3269 = vpack.c.b16 %v2473, %v2471
        %v3270 = vpack.c.b16 %v2476, %v2474
        %v3271 = vpack.c.b16 %v2477, %v2475
        %v3272 = vpack.c.b16 %v2480, %v2478
        %v3273 = vpack.c.b16 %v2481, %v2479
        %v3274 = vpack.c.b16 %v2484, %v2482
        %v3275 = vpack.c.b16 %v2485, %v2483
        %v3276 = vpack.c.b16 %v2488, %v2486
        %v3277 = vpack.c.b16 %v2489, %v2487
        %v3278 = vpack.c.b16 %v2492, %v2490
        %v3279 = vpack.c.b16 %v2493, %v2491
        %v3280 = vpack.c.b16 %v2496, %v2494
        %v3281 = vpack.c.b16 %v2497, %v2495
        %v3282 = vpack.c.b16 %v2500, %v2498
        %v3283 = vpack.c.b16 %v2501, %v2499
        %v3284 = vpack.c.b16 %v2504, %v2502
        %v3285 = vpack.c.b16 %v2505, %v2503
        %v3286 = vpack.c.b16 %v2508, %v2506
        %v3287 = vpack.c.b16 %v2509, %v2507
        %v3288 = vpack.c.b16 %v2512, %v2510
        %v3289 = vpack.c.b16 %v2513, %v2511
        %v3290 = vpack.c.b16 %v2516, %v2514
        %v3291 = vpack.c.b16 %v2517, %v2515
        %v3292 = vpack.c.b16 %v2520, %v2518
        %v3293 = vpack.c.b16 %v2521, %v2519
        %v3294 = vpack.c.b16 %v2524, %v2522
        %v3295 = vpack.c.b16 %v2525, %v2523
        %v3296 = vpack.c.b16 %v2528, %v2526
        %v3297 = vpack.c.b16 %v2529, %v2527
        %v3298 = vpack.c.b16 %v2532, %v2530
        %v3299 = vpack.c.b16 %v2533, %v2531
        %v3300 = vpack.c.b16 %v2536, %v2534
        %v3301 = vpack.c.b16 %v2537, %v2535
        %v3302 = vpack.c.b16 %v2540, %v2538
        %v3303 = vpack.c.b16 %v2541, %v2539
        %v3304 = vpack.c.b16 %v2544, %v2542
        %v3305 = vpack.c.b16 %v2545, %v2543
        %v3306 = vpack.c.b16 %v2548, %v2546
        %v3307 = vpack.c.b16 %v2549, %v2547
        %v3308 = vpack.c.b16 %v2552, %v2550
        %v3309 = vpack.c.b16 %v2553, %v2551
        %v3310 = vpack.c.b16 %v2556, %v2554
        %v3311 = vpack.c.b16 %v2557, %v2555
        %v3312 = vpack.c.b16 %v2560, %v2558
        %v3313 = vpack.c.b16 %v2561, %v2559
        %v3314 = vpack.c.b16 %v2564, %v2562
        %v3315 = vpack.c.b16 %v2565, %v2563
        %v3316 = vpack.c.b16 %v2568, %v2566
        %v3317 = vpack.c.b16 %v2569, %v2567
        %v3318 = vpack.c.b16 %v2572, %v2570
        %v3319 = vpack.c.b16 %v2573, %v2571
        %v3320 = vpack.c.b16 %v2576, %v2574
        %v3321 = vpack.c.b16 %v2577, %v2575
        %v3322 = vpack.c.b16 %v2580, %v2578
        %v3323 = vpack.c.b16 %v2581, %v2579
        %v3324 = vpack.c.b16 %v2584, %v2582
        %v3325 = vpack.c.b16 %v2585, %v2583
        %v3326 = vpack.c.b16 %v2588, %v2586
        %v3327 = vpack.c.b16 %v2589, %v2587
        %v3328 = vpack.c.b16 %v2592, %v2590
        %v3329 = vpack.c.b16 %v2593, %v2591
        %v3330 = vpack.c.b16 %v2596, %v2594
        %v3331 = vpack.c.b16 %v2597, %v2595
        %v3332 = vpack.c.b16 %v2600, %v2598
        %v3333 = vpack.c.b16 %v2601, %v2599
        %v3334 = vpack.c.b16 %v2604, %v2602
        %v3335 = vpack.c.b16 %v2605, %v2603
        %v3336 = vpack.c.b16 %v2608, %v2606
        %v3337 = vpack.c.b16 %v2609, %v2607
        %v3338 = vpack.c.b16 %v2612, %v2610
        %v3339 = vpack.c.b16 %v2613, %v2611
        %v3340 = vpack.c.b16 %v2616, %v2614
        %v3341 = vpack.c.b16 %v2617, %v2615
        %v3342 = vpack.c.b16 %v2620, %v2618
        %v3343 = vpack.c.b16 %v2621, %v2619
        %v3344 = vpack.c.b16 %v2624, %v2622
        %v3345 = vpack.c.b16 %v2625, %v2623
        %v3346 = vpack.c.b16 %v2628, %v2626
        %v3347 = vpack.c.b16 %v2629, %v2627
        %v3348 = vpack.c.b16 %v2632, %v2630
        %v3349 = vpack.c.b16 %v2633, %v2631
        %v3350 = vpack.c.b16 %v2636, %v2634
        %v3351 = vpack.c.b16 %v2637, %v2635
        %v3352 = vpack.c.b16 %v2640, %v2638
        %v3353 = vpack.c.b16 %v2641, %v2639
        %v3354 = vpack.c.b16 %v2644, %v2642
        %v3355 = vpack.c.b16 %v2645, %v2643
        %v3356 = vpack.c.b16 %v2648, %v2646
        %v3357 = vpack.c.b16 %v2649, %v2647
        %v3358 = vpack.c.b16 %v2652, %v2650
        %v3359 = vpack.c.b16 %v2653, %v2651
        %v3360 = vpack.c.b16 %v2656, %v2654
        %v3361 = vpack.c.b16 %v2657, %v2655
        %v3362 = vpack.c.b16 %v2660, %v2658
        %v3363 = vpack.c.b16 %v2661, %v2659
        %v3364 = vpack.c.b16 %v2664, %v2662
        %v3365 = vpack.c.b16 %v2665, %v2663
        %v3366 = vpack.c.b16 %v2668, %v2666
        %v3367 = vpack.c.b16 %v2669, %v2667
        %v3368 = vpack.c.b16 %v2672, %v2670
        %v3369 = vpack.c.b16 %v2673, %v2671
        %v3370 = vpack.c.b16 %v2676, %v2674
        %v3371 = vpack.c.b16 %v2677, %v2675
        %v3372 = vpack.c.b16 %v2680, %v2678
        %v3373 = vpack.c.b16 %v2681, %v2679
        %v3374 = vpack.c.b16 %v2684, %v2682
        %v3375 = vpack.c.b16 %v2685, %v2683
        %v3376 = vpack.c.b16 %v2688, %v2686
        %v3377 = vpack.c.b16 %v2689, %v2687
        %v3378 = vpack.c.b16 %v2692, %v2690
        %v3379 = vpack.c.b16 %v2693, %v2691
        %v3380 = vpack.c.b16 %v2696, %v2694
        %v3381 = vpack.c.b16 %v2697, %v2695
        %v3382 = vpack.c.b16 %v2700, %v2698
        %v3383 = vpack.c.b16 %v2701, %v2699
        %v3384 = vpack.c.b16 %v2704, %v2702
        %v3385 = vpack.c.b16 %v2705, %v2703
        %v3386 = vpack.c.b16 %v2708, %v2706
        %v3387 = vpack.c.b16 %v2709, %v2707
        %v3388 = vpack.c.b16 %v2712, %v2710
        %v3389 = vpack.c.b16 %v2713, %v2711
        %v3390 = vpack.c.b16 %v2716, %v2714
        %v3391 = vpack.c.b16 %v2717, %v2715
        %v3392 = vpack.c.b16 %v2720, %v2718
        %v3393 = vpack.c.b16 %v2721, %v2719
        %v3394 = vpack.c.b16 %v2724, %v2722
        %v3395 = vpack.c.b16 %v2725, %v2723
        %v3396 = vpack.c.b16 %v2728, %v2726
        %v3397 = vpack.c.b16 %v2729, %v2727
        %v3398 = vpack.c.b16 %v2732, %v2730
        %v3399 = vpack.c.b16 %v2733, %v2731
        %v3400 = vpack.c.b16 %v2736, %v2734
        %v3401 = vpack.c.b16 %v2737, %v2735
        %v3402 = vpack.c.b16 %v2740, %v2738
        %v3403 = vpack.c.b16 %v2741, %v2739
        %v3404 = vpack.c.b16 %v2744, %v2742
        %v3405 = vpack.c.b16 %v2745, %v2743
        %v3406 = vpack.c.b16 %v2748, %v2746
        %v3407 = vpack.c.b16 %v2749, %v2747
        %v3408 = vpack.c.b16 %v2752, %v2750
        %v3409 = vpack.c.b16 %v2753, %v2751
        %v3410 = vpack.c.b16 %v2756, %v2754
        %v3411 = vpack.c.b16 %v2757, %v2755
        %v3412 = vpack.c.b16 %v2760, %v2758
        %v3413 = vpack.c.b16 %v2761, %v2759
        %v3414 = vpack.c.b16 %v2764, %v2762
        %v3415 = vpack.c.b16 %v2765, %v2763
        %v3416 = vpack.c.b16 %v2768, %v2766
        %v3417 = vpack.c.b16 %v2769, %v2767
        %v3418 = vpack.c.b16 %v2772, %v2770
        %v3419 = vpack.c.b16 %v2773, %v2771
        %v3420 = vpack.c.b16 %v2776, %v2774
        %v3421 = vpack.c.b16 %v2777, %v2775
        %v3422 = vpack.c.b16 %v2780, %v2778
        %v3423 = vpack.c.b16 %v2781, %v2779
        %v3424 = vpack.c.b16 %v2784, %v2782
        %v3425 = vpack.c.b16 %v2785, %v2783
        %v3426 = vpack.c.b16 %v2788, %v2786
        %v3427 = vpack.c.b16 %v2789, %v2787
        %v3428 = vpack.c.b16 %v2792, %v2790
        %v3429 = vpack.c.b16 %v2793, %v2791
        %v3430 = vpack.c.b16 %v2796, %v2794
        %v3431 = vpack.c.b16 %v2797, %v2795
        %v3432 = vpack.c.b16 %v2800, %v2798
        %v3433 = vpack.c.b16 %v2801, %v2799
        %v3434 = vpack.c.b16 %v2804, %v2802
        %v3435 = vpack.c.b16 %v2805, %v2803
        %v3436 = vpack.c.b16 %v2808, %v2806
        %v3437 = vpack.c.b16 %v2809, %v2807
        %v3438 = vpack.c.b16 %v2812, %v2810
        %v3439 = vpack.c.b16 %v2813, %v2811
        %v3440 = vpack.c.b16 %v2816, %v2814
        %v3441 = vpack.c.b16 %v2817, %v2815
        %v3442 = vpack.c.b16 %v2820, %v2818
        %v3443 = vpack.c.b16 %v2821, %v2819
        %v3444 = vpack.c.b16 %v2824, %v2822
        %v3445 = vpack.c.b16 %v2825, %v2823
        %v3446 = vpack.c.b16 %v2828, %v2826
        %v3447 = vpack.c.b16 %v2829, %v2827
        %v3448 = vpack.c.b16 %v2832, %v2830
        %v3449 = vpack.c.b16 %v2833, %v2831
        %v3450 = vpack.c.b16 %v2836, %v2834
        %v3451 = vpack.c.b16 %v2837, %v2835
        %v3452 = vpack.c.b16 %v2840, %v2838
        %v3453 = vpack.c.b16 %v2841, %v2839
        %v3454 = vpack.c.b16 %v2844, %v2842
        %v3455 = vpack.c.b16 %v2845, %v2843
        %v3456 = vpack.c.b16 %v2848, %v2846
        %v3457 = vpack.c.b16 %v2849, %v2847
        %v3458 = vpack.c.b16 %v2852, %v2850
        %v3459 = vpack.c.b16 %v2853, %v2851
        %v3460 = vpack.c.b16 %v2856, %v2854
        %v3461 = vpack.c.b16 %v2857, %v2855
        %v3462 = vpack.c.b16 %v2860, %v2858
        %v3463 = vpack.c.b16 %v2861, %v2859
        %v3464 = vpack.c.b16 %v2864, %v2862
        %v3465 = vpack.c.b16 %v2865, %v2863
        %v3466 = vpack.c.b16 %v2868, %v2866
        %v3467 = vpack.c.b16 %v2869, %v2867
        %v3468 = vpack.c.b16 %v2872, %v2870
        %v3469 = vpack.c.b16 %v2873, %v2871
        %v3470 = vpack.c.b16 %v2876, %v2874
        %v3471 = vpack.c.b16 %v2877, %v2875
        %v3472 = vpack.c.b16 %v2880, %v2878
        %v3473 = vpack.c.b16 %v2881, %v2879
        %v3474 = vpack.c.b16 %v2884, %v2882
        %v3475 = vpack.c.b16 %v2885, %v2883
        %v3476 = vpack.c.b16 %v2888, %v2886
        %v3477 = vpack.c.b16 %v2889, %v2887
        %v3478 = vpack.c.b16 %v2892, %v2890
        %v3479 = vpack.c.b16 %v2893, %v2891
        %v3480 = vpack.c.b16 %v2896, %v2894
        %v3481 = vpack.c.b16 %v2897, %v2895
        %v3482 = vpack.c.b16 %v2900, %v2898
        %v3483 = vpack.c.b16 %v2901, %v2899
        %v3484 = vpack.c.b16 %v2904, %v2902
        %v3485 = vpack.c.b16 %v2905, %v2903
        %v3486 = vpack.c.b16 %v2908, %v2906
        %v3487 = vpack.c.b16 %v2909, %v2907
        %v3488 = vpack.c.b16 %v2912, %v2910
        %v3489 = vpack.c.b16 %v2913, %v2911
        %4066 = vmatprep.subr.bf16.mxu0 %v2915
        %4067 = vmatpush1.bf16.msra.mxu0 %v2914
        %4068 = vmatprep.subr.bf16.mxu0 %v2917
        %4069 = vmatpush1.bf16.msra.mxu0 %v2916
        %4070 = vmatprep.subr.bf16.mxu0 %v2919
        %4071 = vmatpush1.bf16.msra.mxu0 %v2918
        %4072 = vmatprep.subr.bf16.mxu0 %v2921
        %4073 = vmatpush1.bf16.msra.mxu0 %v2920
        %4074 = vmatprep.subr.bf16.mxu0 %v2923
        %4075 = vmatpush1.bf16.msra.mxu0 %v2922
        %4076 = vmatprep.subr.bf16.mxu0 %v2925
        %4077 = vmatpush1.bf16.msra.mxu0 %v2924
        %4078 = vmatprep.subr.bf16.mxu0 %v2927
        %4079 = vmatpush1.bf16.msra.mxu0 %v2926
        %4080 = vmatprep.subr.bf16.mxu0 %v2929
        %4081 = vmatpush1.bf16.msra.mxu0 %v2928
        %4082 = vmatprep.subr.bf16.mxu0 %v2931
        %4083 = vmatpush1.bf16.msra.mxu0 %v2930
        %4084 = vmatprep.subr.bf16.mxu0 %v2933
        %4085 = vmatpush1.bf16.msra.mxu0 %v2932
        %4086 = vmatprep.subr.bf16.mxu0 %v2935
        %4087 = vmatpush1.bf16.msra.mxu0 %v2934
        %4088 = vmatprep.subr.bf16.mxu0 %v2937
        %4089 = vmatpush1.bf16.msra.mxu0 %v2936
        %4090 = vmatprep.subr.bf16.mxu0 %v2939
        %4091 = vmatpush1.bf16.msra.mxu0 %v2938
        %4092 = vmatprep.subr.bf16.mxu0 %v2941
        %4093 = vmatpush1.bf16.msra.mxu0 %v2940
        %4094 = vmatprep.subr.bf16.mxu0 %v2943
        %4095 = vmatpush1.bf16.msra.mxu0 %v2942
        %4096 = vmatprep.subr.bf16.mxu0 %v2945
        %4097 = vmatpush1.bf16.msra.mxu0 %v2944
        %4098 = vmatprep.mubr.bf16.mxu0 %v1115
        %4099 = vmatmul.mubr.bf16.gmra.mrb[0].mxu0 %v1114
        %v4100 = vpop.f32.mrb[0].mxu0
        %v4101 = vadd.f32 0.0, %v4100
        %v4102 = vpop.f32.mrb[0].mxu0
        %v4103 = vadd.f32 0.0, %v4102
        %v4104 = vpop.f32.mrb[0].mxu0
        %v4105 = vadd.f32 0.0, %v4104
        %v4106 = vpop.f32.mrb[0].mxu0
        %v4107 = vadd.f32 0.0, %v4106
        %4108 = vdwg.mxu0
        %4109 = vmatprep.subr.bf16.mxu0 %v2947
        %4110 = vmatpush1.bf16.msra.mxu0 %v2946
        %4111 = vmatprep.subr.bf16.mxu0 %v2949
        %4112 = vmatpush1.bf16.msra.mxu0 %v2948
        %4113 = vmatprep.subr.bf16.mxu0 %v2951
        %4114 = vmatpush1.bf16.msra.mxu0 %v2950
        %4115 = vmatprep.subr.bf16.mxu0 %v2953
        %4116 = vmatpush1.bf16.msra.mxu0 %v2952
        %4117 = vmatprep.subr.bf16.mxu0 %v2955
        %4118 = vmatpush1.bf16.msra.mxu0 %v2954
        %4119 = vmatprep.subr.bf16.mxu0 %v2957
        %4120 = vmatpush1.bf16.msra.mxu0 %v2956
        %4121 = vmatprep.subr.bf16.mxu0 %v2959
        %4122 = vmatpush1.bf16.msra.mxu0 %v2958
        %4123 = vmatprep.subr.bf16.mxu0 %v2961
        %4124 = vmatpush1.bf16.msra.mxu0 %v2960
        %4125 = vmatprep.subr.bf16.mxu0 %v2963
        %4126 = vmatpush1.bf16.msra.mxu0 %v2962
        %4127 = vmatprep.subr.bf16.mxu0 %v2965
        %4128 = vmatpush1.bf16.msra.mxu0 %v2964
        %4129 = vmatprep.subr.bf16.mxu0 %v2967
        %4130 = vmatpush1.bf16.msra.mxu0 %v2966
        %4131 = vmatprep.subr.bf16.mxu0 %v2969
        %4132 = vmatpush1.bf16.msra.mxu0 %v2968
        %4133 = vmatprep.subr.bf16.mxu0 %v2971
        %4134 = vmatpush1.bf16.msra.mxu0 %v2970
        %4135 = vmatprep.subr.bf16.mxu0 %v2973
        %4136 = vmatpush1.bf16.msra.mxu0 %v2972
        %4137 = vmatprep.subr.bf16.mxu0 %v2975
        %4138 = vmatpush1.bf16.msra.mxu0 %v2974
        %4139 = vmatprep.subr.bf16.mxu0 %v2977
        %4140 = vmatpush1.bf16.msra.mxu0 %v2976
        %4141 = vmatprep.mubr.bf16.mxu0 %v1117
        %4142 = vmatmul.mubr.bf16.gmra.mrb[0].mxu0 %v1116
        %v4143 = vpop.f32.mrb[0].mxu0
        %v4144 = vadd.f32 %v4101, %v4143
        %v4145 = vpop.f32.mrb[0].mxu0
        %v4146 = vadd.f32 %v4103, %v4145
        %v4147 = vpop.f32.mrb[0].mxu0
        %v4148 = vadd.f32 %v4105, %v4147
        %v4149 = vpop.f32.mrb[0].mxu0
        %v4150 = vadd.f32 %v4107, %v4149
        %4151 = vdwg.mxu0
        %4152 = vmatprep.subr.bf16.mxu0 %v2979
        %4153 = vmatpush1.bf16.msra.mxu0 %v2978
        %4154 = vmatprep.subr.bf16.mxu0 %v2981
        %4155 = vmatpush1.bf16.msra.mxu0 %v2980
        %4156 = vmatprep.subr.bf16.mxu0 %v2983
        %4157 = vmatpush1.bf16.msra.mxu0 %v2982
        %4158 = vmatprep.subr.bf16.mxu0 %v2985
        %4159 = vmatpush1.bf16.msra.mxu0 %v2984
        %4160 = vmatprep.subr.bf16.mxu0 %v2987
        %4161 = vmatpush1.bf16.msra.mxu0 %v2986
        %4162 = vmatprep.subr.bf16.mxu0 %v2989
        %4163 = vmatpush1.bf16.msra.mxu0 %v2988
        %4164 = vmatprep.subr.bf16.mxu0 %v2991
        %4165 = vmatpush1.bf16.msra.mxu0 %v2990
        %4166 = vmatprep.subr.bf16.mxu0 %v2993
        %4167 = vmatpush1.bf16.msra.mxu0 %v2992
        %4168 = vmatprep.subr.bf16.mxu0 %v2995
        %4169 = vmatpush1.bf16.msra.mxu0 %v2994
        %4170 = vmatprep.subr.bf16.mxu0 %v2997
        %4171 = vmatpush1.bf16.msra.mxu0 %v2996
        %4172 = vmatprep.subr.bf16.mxu0 %v2999
        %4173 = vmatpush1.bf16.msra.mxu0 %v2998
        %4174 = vmatprep.subr.bf16.mxu0 %v3001
        %4175 = vmatpush1.bf16.msra.mxu0 %v3000
        %4176 = vmatprep.subr.bf16.mxu0 %v3003
        %4177 = vmatpush1.bf16.msra.mxu0 %v3002
        %4178 = vmatprep.subr.bf16.mxu0 %v3005
        %4179 = vmatpush1.bf16.msra.mxu0 %v3004
        %4180 = vmatprep.subr.bf16.mxu0 %v3007
        %4181 = vmatpush1.bf16.msra.mxu0 %v3006
        %4182 = vmatprep.subr.bf16.mxu0 %v3009
        %4183 = vmatpush1.bf16.msra.mxu0 %v3008
        %4184 = vmatprep.mubr.bf16.mxu0 %v1119
        %4185 = vmatmul.mubr.bf16.gmra.mrb[0].mxu0 %v1118
        %v4186 = vpop.f32.mrb[0].mxu0
        %v4187 = vadd.f32 %v4144, %v4186
        %v4188 = vpop.f32.mrb[0].mxu0
        %v4189 = vadd.f32 %v4146, %v4188
        %v4190 = vpop.f32.mrb[0].mxu0
        %v4191 = vadd.f32 %v4148, %v4190
        %v4192 = vpop.f32.mrb[0].mxu0
        %v4193 = vadd.f32 %v4150, %v4192
        %4194 = vdwg.mxu0
        %4195 = vmatprep.subr.bf16.mxu0 %v3011
        %4196 = vmatpush1.bf16.msra.mxu0 %v3010
        %4197 = vmatprep.subr.bf16.mxu0 %v3013
        %4198 = vmatpush1.bf16.msra.mxu0 %v3012
        %4199 = vmatprep.subr.bf16.mxu0 %v3015
        %4200 = vmatpush1.bf16.msra.mxu0 %v3014
        %4201 = vmatprep.subr.bf16.mxu0 %v3017
        %4202 = vmatpush1.bf16.msra.mxu0 %v3016
        %4203 = vmatprep.subr.bf16.mxu0 %v3019
        %4204 = vmatpush1.bf16.msra.mxu0 %v3018
        %4205 = vmatprep.subr.bf16.mxu0 %v3021
        %4206 = vmatpush1.bf16.msra.mxu0 %v3020
        %4207 = vmatprep.subr.bf16.mxu0 %v3023
        %4208 = vmatpush1.bf16.msra.mxu0 %v3022
        %4209 = vmatprep.subr.bf16.mxu0 %v3025
        %4210 = vmatpush1.bf16.msra.mxu0 %v3024
        %4211 = vmatprep.subr.bf16.mxu0 %v3027
        %4212 = vmatpush1.bf16.msra.mxu0 %v3026
        %4213 = vmatprep.subr.bf16.mxu0 %v3029
        %4214 = vmatpush1.bf16.msra.mxu0 %v3028
        %4215 = vmatprep.subr.bf16.mxu0 %v3031
        %4216 = vmatpush1.bf16.msra.mxu0 %v3030
        %4217 = vmatprep.subr.bf16.mxu0 %v3033
        %4218 = vmatpush1.bf16.msra.mxu0 %v3032
        %4219 = vmatprep.subr.bf16.mxu0 %v3035
        %4220 = vmatpush1.bf16.msra.mxu0 %v3034
        %4221 = vmatprep.subr.bf16.mxu0 %v3037
        %4222 = vmatpush1.bf16.msra.mxu0 %v3036
        %4223 = vmatprep.subr.bf16.mxu0 %v3039
        %4224 = vmatpush1.bf16.msra.mxu0 %v3038
        %4225 = vmatprep.subr.bf16.mxu0 %v3041
        %4226 = vmatpush1.bf16.msra.mxu0 %v3040
        %4227 = vmatprep.mubr.bf16.mxu0 %v1121
        %4228 = vmatmul.mubr.bf16.gmra.mrb[0].mxu0 %v1120
        %v4229 = vpop.f32.mrb[0].mxu0
        %v4230 = vadd.f32 %v4187, %v4229
        %v4231 = vpop.f32.mrb[0].mxu0
        %v4232 = vadd.f32 %v4189, %v4231
        %v4233 = vpop.f32.mrb[0].mxu0
        %v4234 = vadd.f32 %v4191, %v4233
        %v4235 = vpop.f32.mrb[0].mxu0
        %v4236 = vadd.f32 %v4193, %v4235
        %4237 = vdwg.mxu0
        %4238 = vmatprep.subr.bf16.mxu0 %v3043
        %4239 = vmatpush1.bf16.msra.mxu0 %v3042
        %4240 = vmatprep.subr.bf16.mxu0 %v3045
        %4241 = vmatpush1.bf16.msra.mxu0 %v3044
        %4242 = vmatprep.subr.bf16.mxu0 %v3047
        %4243 = vmatpush1.bf16.msra.mxu0 %v3046
        %4244 = vmatprep.subr.bf16.mxu0 %v3049
        %4245 = vmatpush1.bf16.msra.mxu0 %v3048
        %4246 = vmatprep.subr.bf16.mxu0 %v3051
        %4247 = vmatpush1.bf16.msra.mxu0 %v3050
        %4248 = vmatprep.subr.bf16.mxu0 %v3053
        %4249 = vmatpush1.bf16.msra.mxu0 %v3052
        %4250 = vmatprep.subr.bf16.mxu0 %v3055
        %4251 = vmatpush1.bf16.msra.mxu0 %v3054
        %4252 = vmatprep.subr.bf16.mxu0 %v3057
        %4253 = vmatpush1.bf16.msra.mxu0 %v3056
        %4254 = vmatprep.subr.bf16.mxu0 %v3059
        %4255 = vmatpush1.bf16.msra.mxu0 %v3058
        %4256 = vmatprep.subr.bf16.mxu0 %v3061
        %4257 = vmatpush1.bf16.msra.mxu0 %v3060
        %4258 = vmatprep.subr.bf16.mxu0 %v3063
        %4259 = vmatpush1.bf16.msra.mxu0 %v3062
        %4260 = vmatprep.subr.bf16.mxu0 %v3065
        %4261 = vmatpush1.bf16.msra.mxu0 %v3064
        %4262 = vmatprep.subr.bf16.mxu0 %v3067
        %4263 = vmatpush1.bf16.msra.mxu0 %v3066
        %4264 = vmatprep.subr.bf16.mxu0 %v3069
        %4265 = vmatpush1.bf16.msra.mxu0 %v3068
        %4266 = vmatprep.subr.bf16.mxu0 %v3071
        %4267 = vmatpush1.bf16.msra.mxu0 %v3070
        %4268 = vmatprep.subr.bf16.mxu0 %v3073
        %4269 = vmatpush1.bf16.msra.mxu0 %v3072
        %4270 = vmatprep.mubr.bf16.mxu0 %v1123
        %4271 = vmatmul.mubr.bf16.gmra.mrb[0].mxu0 %v1122
        %v4272 = vpop.f32.mrb[0].mxu0
        %v4273 = vadd.f32 %v4230, %v4272
        %v4274 = vpop.f32.mrb[0].mxu0
        %v4275 = vadd.f32 %v4232, %v4274
        %v4276 = vpop.f32.mrb[0].mxu0
        %v4277 = vadd.f32 %v4234, %v4276
        %v4278 = vpop.f32.mrb[0].mxu0
        %v4279 = vadd.f32 %v4236, %v4278
        %4280 = vdwg.mxu0
        %4281 = vmatprep.subr.bf16.mxu0 %v3075
        %4282 = vmatpush1.bf16.msra.mxu0 %v3074
        %4283 = vmatprep.subr.bf16.mxu0 %v3077
        %4284 = vmatpush1.bf16.msra.mxu0 %v3076
        %4285 = vmatprep.subr.bf16.mxu0 %v3079
        %4286 = vmatpush1.bf16.msra.mxu0 %v3078
        %4287 = vmatprep.subr.bf16.mxu0 %v3081
        %4288 = vmatpush1.bf16.msra.mxu0 %v3080
        %4289 = vmatprep.subr.bf16.mxu0 %v3083
        %4290 = vmatpush1.bf16.msra.mxu0 %v3082
        %4291 = vmatprep.subr.bf16.mxu0 %v3085
        %4292 = vmatpush1.bf16.msra.mxu0 %v3084
        %4293 = vmatprep.subr.bf16.mxu0 %v3087
        %4294 = vmatpush1.bf16.msra.mxu0 %v3086
        %4295 = vmatprep.subr.bf16.mxu0 %v3089
        %4296 = vmatpush1.bf16.msra.mxu0 %v3088
        %4297 = vmatprep.subr.bf16.mxu0 %v3091
        %4298 = vmatpush1.bf16.msra.mxu0 %v3090
        %4299 = vmatprep.subr.bf16.mxu0 %v3093
        %4300 = vmatpush1.bf16.msra.mxu0 %v3092
        %4301 = vmatprep.subr.bf16.mxu0 %v3095
        %4302 = vmatpush1.bf16.msra.mxu0 %v3094
        %4303 = vmatprep.subr.bf16.mxu0 %v3097
        %4304 = vmatpush1.bf16.msra.mxu0 %v3096
        %4305 = vmatprep.subr.bf16.mxu0 %v3099
        %4306 = vmatpush1.bf16.msra.mxu0 %v3098
        %4307 = vmatprep.subr.bf16.mxu0 %v3101
        %4308 = vmatpush1.bf16.msra.mxu0 %v3100
        %4309 = vmatprep.subr.bf16.mxu0 %v3103
        %4310 = vmatpush1.bf16.msra.mxu0 %v3102
        %4311 = vmatprep.subr.bf16.mxu0 %v3105
        %4312 = vmatpush1.bf16.msra.mxu0 %v3104
        %4313 = vmatprep.mubr.bf16.mxu0 %v1125
        %4314 = vmatmul.mubr.bf16.gmra.mrb[0].mxu0 %v1124
        %v4315 = vpop.f32.mrb[0].mxu0
        %v4316 = vadd.f32 %v4273, %v4315
        %v4317 = vpop.f32.mrb[0].mxu0
        %v4318 = vadd.f32 %v4275, %v4317
        %v4319 = vpop.f32.mrb[0].mxu0
        %v4320 = vadd.f32 %v4277, %v4319
        %v4321 = vpop.f32.mrb[0].mxu0
        %v4322 = vadd.f32 %v4279, %v4321
        %4323 = vdwg.mxu0
        %4324 = vmatprep.subr.bf16.mxu0 %v3107
        %4325 = vmatpush1.bf16.msra.mxu0 %v3106
        %4326 = vmatprep.subr.bf16.mxu0 %v3109
        %4327 = vmatpush1.bf16.msra.mxu0 %v3108
        %4328 = vmatprep.subr.bf16.mxu0 %v3111
        %4329 = vmatpush1.bf16.msra.mxu0 %v3110
        %4330 = vmatprep.subr.bf16.mxu0 %v3113
        %4331 = vmatpush1.bf16.msra.mxu0 %v3112
        %4332 = vmatprep.subr.bf16.mxu0 %v3115
        %4333 = vmatpush1.bf16.msra.mxu0 %v3114
        %4334 = vmatprep.subr.bf16.mxu0 %v3117
        %4335 = vmatpush1.bf16.msra.mxu0 %v3116
        %4336 = vmatprep.subr.bf16.mxu0 %v3119
        %4337 = vmatpush1.bf16.msra.mxu0 %v3118
        %4338 = vmatprep.subr.bf16.mxu0 %v3121
        %4339 = vmatpush1.bf16.msra.mxu0 %v3120
        %4340 = vmatprep.subr.bf16.mxu0 %v3123
        %4341 = vmatpush1.bf16.msra.mxu0 %v3122
        %4342 = vmatprep.subr.bf16.mxu0 %v3125
        %4343 = vmatpush1.bf16.msra.mxu0 %v3124
        %4344 = vmatprep.subr.bf16.mxu0 %v3127
        %4345 = vmatpush1.bf16.msra.mxu0 %v3126
        %4346 = vmatprep.subr.bf16.mxu0 %v3129
        %4347 = vmatpush1.bf16.msra.mxu0 %v3128
        %4348 = vmatprep.subr.bf16.mxu0 %v3131
        %4349 = vmatpush1.bf16.msra.mxu0 %v3130
        %4350 = vmatprep.subr.bf16.mxu0 %v3133
        %4351 = vmatpush1.bf16.msra.mxu0 %v3132
        %4352 = vmatprep.subr.bf16.mxu0 %v3135
        %4353 = vmatpush1.bf16.msra.mxu0 %v3134
        %4354 = vmatprep.subr.bf16.mxu0 %v3137
        %4355 = vmatpush1.bf16.msra.mxu0 %v3136
        %4356 = vmatprep.mubr.bf16.mxu0 %v1127
        %4357 = vmatmul.mubr.bf16.gmra.mrb[0].mxu0 %v1126
        %v4358 = vpop.f32.mrb[0].mxu0
        %v4359 = vadd.f32 %v4316, %v4358
        %v4360 = vpop.f32.mrb[0].mxu0
        %v4361 = vadd.f32 %v4318, %v4360
        %v4362 = vpop.f32.mrb[0].mxu0
        %v4363 = vadd.f32 %v4320, %v4362
        %v4364 = vpop.f32.mrb[0].mxu0
        %v4365 = vadd.f32 %v4322, %v4364
        %4366 = vdwg.mxu0
        %4367 = vmatprep.subr.bf16.mxu0 %v3139
        %4368 = vmatpush1.bf16.msra.mxu0 %v3138
        %4369 = vmatprep.subr.bf16.mxu0 %v3141
        %4370 = vmatpush1.bf16.msra.mxu0 %v3140
        %4371 = vmatprep.subr.bf16.mxu0 %v3143
        %4372 = vmatpush1.bf16.msra.mxu0 %v3142
        %4373 = vmatprep.subr.bf16.mxu0 %v3145
        %4374 = vmatpush1.bf16.msra.mxu0 %v3144
        %4375 = vmatprep.subr.bf16.mxu0 %v3147
        %4376 = vmatpush1.bf16.msra.mxu0 %v3146
        %4377 = vmatprep.subr.bf16.mxu0 %v3149
        %4378 = vmatpush1.bf16.msra.mxu0 %v3148
        %4379 = vmatprep.subr.bf16.mxu0 %v3151
        %4380 = vmatpush1.bf16.msra.mxu0 %v3150
        %4381 = vmatprep.subr.bf16.mxu0 %v3153
        %4382 = vmatpush1.bf16.msra.mxu0 %v3152
        %4383 = vmatprep.subr.bf16.mxu0 %v3155
        %4384 = vmatpush1.bf16.msra.mxu0 %v3154
        %4385 = vmatprep.subr.bf16.mxu0 %v3157
        %4386 = vmatpush1.bf16.msra.mxu0 %v3156
        %4387 = vmatprep.subr.bf16.mxu0 %v3159
        %4388 = vmatpush1.bf16.msra.mxu0 %v3158
        %4389 = vmatprep.subr.bf16.mxu0 %v3161
        %4390 = vmatpush1.bf16.msra.mxu0 %v3160
        %4391 = vmatprep.subr.bf16.mxu0 %v3163
        %4392 = vmatpush1.bf16.msra.mxu0 %v3162
        %4393 = vmatprep.subr.bf16.mxu0 %v3165
        %4394 = vmatpush1.bf16.msra.mxu0 %v3164
        %4395 = vmatprep.subr.bf16.mxu0 %v3167
        %4396 = vmatpush1.bf16.msra.mxu0 %v3166
        %4397 = vmatprep.subr.bf16.mxu0 %v3169
        %4398 = vmatpush1.bf16.msra.mxu0 %v3168
        %4399 = vmatprep.mubr.bf16.mxu0 %v1129
        %4400 = vmatmul.mubr.bf16.gmra.mrb[0].mxu0 %v1128
        %v4401 = vpop.f32.mrb[0].mxu0
        %v4402 = vadd.f32 %v4359, %v4401
        %v4403 = vpop.f32.mrb[0].mxu0
        %v4404 = vadd.f32 %v4361, %v4403
        %v4405 = vpop.f32.mrb[0].mxu0
        %v4406 = vadd.f32 %v4363, %v4405
        %v4407 = vpop.f32.mrb[0].mxu0
        %v4408 = vadd.f32 %v4365, %v4407
        %4409 = vdwg.mxu0
        %4410 = vmatprep.subr.bf16.mxu0 %v3171
        %4411 = vmatpush1.bf16.msra.mxu0 %v3170
        %4412 = vmatprep.subr.bf16.mxu0 %v3173
        %4413 = vmatpush1.bf16.msra.mxu0 %v3172
        %4414 = vmatprep.subr.bf16.mxu0 %v3175
        %4415 = vmatpush1.bf16.msra.mxu0 %v3174
        %4416 = vmatprep.subr.bf16.mxu0 %v3177
        %4417 = vmatpush1.bf16.msra.mxu0 %v3176
        %4418 = vmatprep.subr.bf16.mxu0 %v3179
        %4419 = vmatpush1.bf16.msra.mxu0 %v3178
        %4420 = vmatprep.subr.bf16.mxu0 %v3181
        %4421 = vmatpush1.bf16.msra.mxu0 %v3180
        %4422 = vmatprep.subr.bf16.mxu0 %v3183
        %4423 = vmatpush1.bf16.msra.mxu0 %v3182
        %4424 = vmatprep.subr.bf16.mxu0 %v3185
        %4425 = vmatpush1.bf16.msra.mxu0 %v3184
        %4426 = vmatprep.subr.bf16.mxu0 %v3187
        %4427 = vmatpush1.bf16.msra.mxu0 %v3186
        %4428 = vmatprep.subr.bf16.mxu0 %v3189
        %4429 = vmatpush1.bf16.msra.mxu0 %v3188
        %4430 = vmatprep.subr.bf16.mxu0 %v3191
        %4431 = vmatpush1.bf16.msra.mxu0 %v3190
        %4432 = vmatprep.subr.bf16.mxu0 %v3193
        %4433 = vmatpush1.bf16.msra.mxu0 %v3192
        %4434 = vmatprep.subr.bf16.mxu0 %v3195
        %4435 = vmatpush1.bf16.msra.mxu0 %v3194
        %4436 = vmatprep.subr.bf16.mxu0 %v3197
        %4437 = vmatpush1.bf16.msra.mxu0 %v3196
        %4438 = vmatprep.subr.bf16.mxu0 %v3199
        %4439 = vmatpush1.bf16.msra.mxu0 %v3198
        %4440 = vmatprep.subr.bf16.mxu0 %v3201
        %4441 = vmatpush1.bf16.msra.mxu0 %v3200
        %4442 = vmatprep.mubr.bf16.mxu0 %v1131
        %4443 = vmatmul.mubr.bf16.gmra.mrb[0].mxu0 %v1130
        %v4444 = vpop.f32.mrb[0].mxu0
        %v4445 = vadd.f32 %v4402, %v4444
        %v4446 = vpop.f32.mrb[0].mxu0
        %v4447 = vadd.f32 %v4404, %v4446
        %v4448 = vpop.f32.mrb[0].mxu0
        %v4449 = vadd.f32 %v4406, %v4448
        %v4450 = vpop.f32.mrb[0].mxu0
        %v4451 = vadd.f32 %v4408, %v4450
        %4452 = vdwg.mxu0
        %4453 = vmatprep.subr.bf16.mxu0 %v3203
        %4454 = vmatpush1.bf16.msra.mxu0 %v3202
        %4455 = vmatprep.subr.bf16.mxu0 %v3205
        %4456 = vmatpush1.bf16.msra.mxu0 %v3204
        %4457 = vmatprep.subr.bf16.mxu0 %v3207
        %4458 = vmatpush1.bf16.msra.mxu0 %v3206
        %4459 = vmatprep.subr.bf16.mxu0 %v3209
        %4460 = vmatpush1.bf16.msra.mxu0 %v3208
        %4461 = vmatprep.subr.bf16.mxu0 %v3211
        %4462 = vmatpush1.bf16.msra.mxu0 %v3210
        %4463 = vmatprep.subr.bf16.mxu0 %v3213
        %4464 = vmatpush1.bf16.msra.mxu0 %v3212
        %4465 = vmatprep.subr.bf16.mxu0 %v3215
        %4466 = vmatpush1.bf16.msra.mxu0 %v3214
        %4467 = vmatprep.subr.bf16.mxu0 %v3217
        %4468 = vmatpush1.bf16.msra.mxu0 %v3216
        %4469 = vmatprep.subr.bf16.mxu0 %v3219
        %4470 = vmatpush1.bf16.msra.mxu0 %v3218
        %4471 = vmatprep.subr.bf16.mxu0 %v3221
        %4472 = vmatpush1.bf16.msra.mxu0 %v3220
        %4473 = vmatprep.subr.bf16.mxu0 %v3223
        %4474 = vmatpush1.bf16.msra.mxu0 %v3222
        %4475 = vmatprep.subr.bf16.mxu0 %v3225
        %4476 = vmatpush1.bf16.msra.mxu0 %v3224
        %4477 = vmatprep.subr.bf16.mxu0 %v3227
        %4478 = vmatpush1.bf16.msra.mxu0 %v3226
        %4479 = vmatprep.subr.bf16.mxu0 %v3229
        %4480 = vmatpush1.bf16.msra.mxu0 %v3228
        %4481 = vmatprep.subr.bf16.mxu0 %v3231
        %4482 = vmatpush1.bf16.msra.mxu0 %v3230
        %4483 = vmatprep.subr.bf16.mxu0 %v3233
        %4484 = vmatpush1.bf16.msra.mxu0 %v3232
        %4485 = vmatprep.mubr.bf16.mxu0 %v1133
        %4486 = vmatmul.mubr.bf16.gmra.mrb[0].mxu0 %v1132
        %v4487 = vpop.f32.mrb[0].mxu0
        %v4488 = vadd.f32 %v4445, %v4487
        %v4489 = vpop.f32.mrb[0].mxu0
        %v4490 = vadd.f32 %v4447, %v4489
        %v4491 = vpop.f32.mrb[0].mxu0
        %v4492 = vadd.f32 %v4449, %v4491
        %v4493 = vpop.f32.mrb[0].mxu0
        %v4494 = vadd.f32 %v4451, %v4493
        %4495 = vdwg.mxu0
        %4496 = vmatprep.subr.bf16.mxu0 %v3235
        %4497 = vmatpush1.bf16.msra.mxu0 %v3234
        %4498 = vmatprep.subr.bf16.mxu0 %v3237
        %4499 = vmatpush1.bf16.msra.mxu0 %v3236
        %4500 = vmatprep.subr.bf16.mxu0 %v3239
        %4501 = vmatpush1.bf16.msra.mxu0 %v3238
        %4502 = vmatprep.subr.bf16.mxu0 %v3241
        %4503 = vmatpush1.bf16.msra.mxu0 %v3240
        %4504 = vmatprep.subr.bf16.mxu0 %v3243
        %4505 = vmatpush1.bf16.msra.mxu0 %v3242
        %4506 = vmatprep.subr.bf16.mxu0 %v3245
        %4507 = vmatpush1.bf16.msra.mxu0 %v3244
        %4508 = vmatprep.subr.bf16.mxu0 %v3247
        %4509 = vmatpush1.bf16.msra.mxu0 %v3246
        %4510 = vmatprep.subr.bf16.mxu0 %v3249
        %4511 = vmatpush1.bf16.msra.mxu0 %v3248
        %4512 = vmatprep.subr.bf16.mxu0 %v3251
        %4513 = vmatpush1.bf16.msra.mxu0 %v3250
        %4514 = vmatprep.subr.bf16.mxu0 %v3253
        %4515 = vmatpush1.bf16.msra.mxu0 %v3252
        %4516 = vmatprep.subr.bf16.mxu0 %v3255
        %4517 = vmatpush1.bf16.msra.mxu0 %v3254
        %4518 = vmatprep.subr.bf16.mxu0 %v3257
        %4519 = vmatpush1.bf16.msra.mxu0 %v3256
        %4520 = vmatprep.subr.bf16.mxu0 %v3259
        %4521 = vmatpush1.bf16.msra.mxu0 %v3258
        %4522 = vmatprep.subr.bf16.mxu0 %v3261
        %4523 = vmatpush1.bf16.msra.mxu0 %v3260
        %4524 = vmatprep.subr.bf16.mxu0 %v3263
        %4525 = vmatpush1.bf16.msra.mxu0 %v3262
        %4526 = vmatprep.subr.bf16.mxu0 %v3265
        %4527 = vmatpush1.bf16.msra.mxu0 %v3264
        %4528 = vmatprep.mubr.bf16.mxu0 %v1135
        %4529 = vmatmul.mubr.bf16.gmra.mrb[0].mxu0 %v1134
        %v4530 = vpop.f32.mrb[0].mxu0
        %v4531 = vadd.f32 %v4488, %v4530
        %v4532 = vpop.f32.mrb[0].mxu0
        %v4533 = vadd.f32 %v4490, %v4532
        %v4534 = vpop.f32.mrb[0].mxu0
        %v4535 = vadd.f32 %v4492, %v4534
        %v4536 = vpop.f32.mrb[0].mxu0
        %v4537 = vadd.f32 %v4494, %v4536
        %4538 = vdwg.mxu0
        %4539 = vmatprep.subr.bf16.mxu0 %v3267
        %4540 = vmatpush1.bf16.msra.mxu0 %v3266
        %4541 = vmatprep.subr.bf16.mxu0 %v3269
        %4542 = vmatpush1.bf16.msra.mxu0 %v3268
        %4543 = vmatprep.subr.bf16.mxu0 %v3271
        %4544 = vmatpush1.bf16.msra.mxu0 %v3270
        %4545 = vmatprep.subr.bf16.mxu0 %v3273
        %4546 = vmatpush1.bf16.msra.mxu0 %v3272
        %4547 = vmatprep.subr.bf16.mxu0 %v3275
        %4548 = vmatpush1.bf16.msra.mxu0 %v3274
        %4549 = vmatprep.subr.bf16.mxu0 %v3277
        %4550 = vmatpush1.bf16.msra.mxu0 %v3276
        %4551 = vmatprep.subr.bf16.mxu0 %v3279
        %4552 = vmatpush1.bf16.msra.mxu0 %v3278
        %4553 = vmatprep.subr.bf16.mxu0 %v3281
        %4554 = vmatpush1.bf16.msra.mxu0 %v3280
        %4555 = vmatprep.subr.bf16.mxu0 %v3283
        %4556 = vmatpush1.bf16.msra.mxu0 %v3282
        %4557 = vmatprep.subr.bf16.mxu0 %v3285
        %4558 = vmatpush1.bf16.msra.mxu0 %v3284
        %4559 = vmatprep.subr.bf16.mxu0 %v3287
        %4560 = vmatpush1.bf16.msra.mxu0 %v3286
        %4561 = vmatprep.subr.bf16.mxu0 %v3289
        %4562 = vmatpush1.bf16.msra.mxu0 %v3288
        %4563 = vmatprep.subr.bf16.mxu0 %v3291
        %4564 = vmatpush1.bf16.msra.mxu0 %v3290
        %4565 = vmatprep.subr.bf16.mxu0 %v3293
        %4566 = vmatpush1.bf16.msra.mxu0 %v3292
        %4567 = vmatprep.subr.bf16.mxu0 %v3295
        %4568 = vmatpush1.bf16.msra.mxu0 %v3294
        %4569 = vmatprep.subr.bf16.mxu0 %v3297
        %4570 = vmatpush1.bf16.msra.mxu0 %v3296
        %4571 = vmatprep.mubr.bf16.mxu0 %v1137
        %4572 = vmatmul.mubr.bf16.gmra.mrb[0].mxu0 %v1136
        %v4573 = vpop.f32.mrb[0].mxu0
        %v4574 = vadd.f32 %v4531, %v4573
        %v4575 = vpop.f32.mrb[0].mxu0
        %v4576 = vadd.f32 %v4533, %v4575
        %v4577 = vpop.f32.mrb[0].mxu0
        %v4578 = vadd.f32 %v4535, %v4577
        %v4579 = vpop.f32.mrb[0].mxu0
        %v4580 = vadd.f32 %v4537, %v4579
        %4581 = vdwg.mxu0
        %4582 = vmatprep.subr.bf16.mxu0 %v3299
        %4583 = vmatpush1.bf16.msra.mxu0 %v3298
        %4584 = vmatprep.subr.bf16.mxu0 %v3301
        %4585 = vmatpush1.bf16.msra.mxu0 %v3300
        %4586 = vmatprep.subr.bf16.mxu0 %v3303
        %4587 = vmatpush1.bf16.msra.mxu0 %v3302
        %4588 = vmatprep.subr.bf16.mxu0 %v3305
        %4589 = vmatpush1.bf16.msra.mxu0 %v3304
        %4590 = vmatprep.subr.bf16.mxu0 %v3307
        %4591 = vmatpush1.bf16.msra.mxu0 %v3306
        %4592 = vmatprep.subr.bf16.mxu0 %v3309
        %4593 = vmatpush1.bf16.msra.mxu0 %v3308
        %4594 = vmatprep.subr.bf16.mxu0 %v3311
        %4595 = vmatpush1.bf16.msra.mxu0 %v3310
        %4596 = vmatprep.subr.bf16.mxu0 %v3313
        %4597 = vmatpush1.bf16.msra.mxu0 %v3312
        %4598 = vmatprep.subr.bf16.mxu0 %v3315
        %4599 = vmatpush1.bf16.msra.mxu0 %v3314
        %4600 = vmatprep.subr.bf16.mxu0 %v3317
        %4601 = vmatpush1.bf16.msra.mxu0 %v3316
        %4602 = vmatprep.subr.bf16.mxu0 %v3319
        %4603 = vmatpush1.bf16.msra.mxu0 %v3318
        %4604 = vmatprep.subr.bf16.mxu0 %v3321
        %4605 = vmatpush1.bf16.msra.mxu0 %v3320
        %4606 = vmatprep.subr.bf16.mxu0 %v3323
        %4607 = vmatpush1.bf16.msra.mxu0 %v3322
        %4608 = vmatprep.subr.bf16.mxu0 %v3325
        %4609 = vmatpush1.bf16.msra.mxu0 %v3324
        %4610 = vmatprep.subr.bf16.mxu0 %v3327
        %4611 = vmatpush1.bf16.msra.mxu0 %v3326
        %4612 = vmatprep.subr.bf16.mxu0 %v3329
        %4613 = vmatpush1.bf16.msra.mxu0 %v3328
        %4614 = vmatprep.mubr.bf16.mxu0 %v1139
        %4615 = vmatmul.mubr.bf16.gmra.mrb[0].mxu0 %v1138
        %v4616 = vpop.f32.mrb[0].mxu0
        %v4617 = vadd.f32 %v4574, %v4616
        %v4618 = vpop.f32.mrb[0].mxu0
        %v4619 = vadd.f32 %v4576, %v4618
        %v4620 = vpop.f32.mrb[0].mxu0
        %v4621 = vadd.f32 %v4578, %v4620
        %v4622 = vpop.f32.mrb[0].mxu0
        %v4623 = vadd.f32 %v4580, %v4622
        %4624 = vdwg.mxu0
        %4625 = vmatprep.subr.bf16.mxu0 %v3331
        %4626 = vmatpush1.bf16.msra.mxu0 %v3330
        %4627 = vmatprep.subr.bf16.mxu0 %v3333
        %4628 = vmatpush1.bf16.msra.mxu0 %v3332
        %4629 = vmatprep.subr.bf16.mxu0 %v3335
        %4630 = vmatpush1.bf16.msra.mxu0 %v3334
        %4631 = vmatprep.subr.bf16.mxu0 %v3337
        %4632 = vmatpush1.bf16.msra.mxu0 %v3336
        %4633 = vmatprep.subr.bf16.mxu0 %v3339
        %4634 = vmatpush1.bf16.msra.mxu0 %v3338
        %4635 = vmatprep.subr.bf16.mxu0 %v3341
        %4636 = vmatpush1.bf16.msra.mxu0 %v3340
        %4637 = vmatprep.subr.bf16.mxu0 %v3343
        %4638 = vmatpush1.bf16.msra.mxu0 %v3342
        %4639 = vmatprep.subr.bf16.mxu0 %v3345
        %4640 = vmatpush1.bf16.msra.mxu0 %v3344
        %4641 = vmatprep.subr.bf16.mxu0 %v3347
        %4642 = vmatpush1.bf16.msra.mxu0 %v3346
        %4643 = vmatprep.subr.bf16.mxu0 %v3349
        %4644 = vmatpush1.bf16.msra.mxu0 %v3348
        %4645 = vmatprep.subr.bf16.mxu0 %v3351
        %4646 = vmatpush1.bf16.msra.mxu0 %v3350
        %4647 = vmatprep.subr.bf16.mxu0 %v3353
        %4648 = vmatpush1.bf16.msra.mxu0 %v3352
        %4649 = vmatprep.subr.bf16.mxu0 %v3355
        %4650 = vmatpush1.bf16.msra.mxu0 %v3354
        %4651 = vmatprep.subr.bf16.mxu0 %v3357
        %4652 = vmatpush1.bf16.msra.mxu0 %v3356
        %4653 = vmatprep.subr.bf16.mxu0 %v3359
        %4654 = vmatpush1.bf16.msra.mxu0 %v3358
        %4655 = vmatprep.subr.bf16.mxu0 %v3361
        %4656 = vmatpush1.bf16.msra.mxu0 %v3360
        %4657 = vmatprep.mubr.bf16.mxu0 %v1141
        %4658 = vmatmul.mubr.bf16.gmra.mrb[0].mxu0 %v1140
        %v4659 = vpop.f32.mrb[0].mxu0
        %v4660 = vadd.f32 %v4617, %v4659
        %v4661 = vpop.f32.mrb[0].mxu0
        %v4662 = vadd.f32 %v4619, %v4661
        %v4663 = vpop.f32.mrb[0].mxu0
        %v4664 = vadd.f32 %v4621, %v4663
        %v4665 = vpop.f32.mrb[0].mxu0
        %v4666 = vadd.f32 %v4623, %v4665
        %4667 = vdwg.mxu0
        %4668 = vmatprep.subr.bf16.mxu0 %v3363
        %4669 = vmatpush1.bf16.msra.mxu0 %v3362
        %4670 = vmatprep.subr.bf16.mxu0 %v3365
        %4671 = vmatpush1.bf16.msra.mxu0 %v3364
        %4672 = vmatprep.subr.bf16.mxu0 %v3367
        %4673 = vmatpush1.bf16.msra.mxu0 %v3366
        %4674 = vmatprep.subr.bf16.mxu0 %v3369
        %4675 = vmatpush1.bf16.msra.mxu0 %v3368
        %4676 = vmatprep.subr.bf16.mxu0 %v3371
        %4677 = vmatpush1.bf16.msra.mxu0 %v3370
        %4678 = vmatprep.subr.bf16.mxu0 %v3373
        %4679 = vmatpush1.bf16.msra.mxu0 %v3372
        %4680 = vmatprep.subr.bf16.mxu0 %v3375
        %4681 = vmatpush1.bf16.msra.mxu0 %v3374
        %4682 = vmatprep.subr.bf16.mxu0 %v3377
        %4683 = vmatpush1.bf16.msra.mxu0 %v3376
        %4684 = vmatprep.subr.bf16.mxu0 %v3379
        %4685 = vmatpush1.bf16.msra.mxu0 %v3378
        %4686 = vmatprep.subr.bf16.mxu0 %v3381
        %4687 = vmatpush1.bf16.msra.mxu0 %v3380
        %4688 = vmatprep.subr.bf16.mxu0 %v3383
        %4689 = vmatpush1.bf16.msra.mxu0 %v3382
        %4690 = vmatprep.subr.bf16.mxu0 %v3385
        %4691 = vmatpush1.bf16.msra.mxu0 %v3384
        %4692 = vmatprep.subr.bf16.mxu0 %v3387
        %4693 = vmatpush1.bf16.msra.mxu0 %v3386
        %4694 = vmatprep.subr.bf16.mxu0 %v3389
        %4695 = vmatpush1.bf16.msra.mxu0 %v3388
        %4696 = vmatprep.subr.bf16.mxu0 %v3391
        %4697 = vmatpush1.bf16.msra.mxu0 %v3390
        %4698 = vmatprep.subr.bf16.mxu0 %v3393
        %4699 = vmatpush1.bf16.msra.mxu0 %v3392
        %4700 = vmatprep.mubr.bf16.mxu0 %v1143
        %4701 = vmatmul.mubr.bf16.gmra.mrb[0].mxu0 %v1142
        %v4702 = vpop.f32.mrb[0].mxu0
        %v4703 = vadd.f32 %v4660, %v4702
        %v4704 = vpop.f32.mrb[0].mxu0
        %v4705 = vadd.f32 %v4662, %v4704
        %v4706 = vpop.f32.mrb[0].mxu0
        %v4707 = vadd.f32 %v4664, %v4706
        %v4708 = vpop.f32.mrb[0].mxu0
        %v4709 = vadd.f32 %v4666, %v4708
        %4710 = vdwg.mxu0
        %4711 = vmatprep.subr.bf16.mxu0 %v3395
        %4712 = vmatpush1.bf16.msra.mxu0 %v3394
        %4713 = vmatprep.subr.bf16.mxu0 %v3397
        %4714 = vmatpush1.bf16.msra.mxu0 %v3396
        %4715 = vmatprep.subr.bf16.mxu0 %v3399
        %4716 = vmatpush1.bf16.msra.mxu0 %v3398
        %4717 = vmatprep.subr.bf16.mxu0 %v3401
        %4718 = vmatpush1.bf16.msra.mxu0 %v3400
        %4719 = vmatprep.subr.bf16.mxu0 %v3403
        %4720 = vmatpush1.bf16.msra.mxu0 %v3402
        %4721 = vmatprep.subr.bf16.mxu0 %v3405
        %4722 = vmatpush1.bf16.msra.mxu0 %v3404
        %4723 = vmatprep.subr.bf16.mxu0 %v3407
        %4724 = vmatpush1.bf16.msra.mxu0 %v3406
        %4725 = vmatprep.subr.bf16.mxu0 %v3409
        %4726 = vmatpush1.bf16.msra.mxu0 %v3408
        %4727 = vmatprep.subr.bf16.mxu0 %v3411
        %4728 = vmatpush1.bf16.msra.mxu0 %v3410
        %4729 = vmatprep.subr.bf16.mxu0 %v3413
        %4730 = vmatpush1.bf16.msra.mxu0 %v3412
        %4731 = vmatprep.subr.bf16.mxu0 %v3415
        %4732 = vmatpush1.bf16.msra.mxu0 %v3414
        %4733 = vmatprep.subr.bf16.mxu0 %v3417
        %4734 = vmatpush1.bf16.msra.mxu0 %v3416
        %4735 = vmatprep.subr.bf16.mxu0 %v3419
        %4736 = vmatpush1.bf16.msra.mxu0 %v3418
        %4737 = vmatprep.subr.bf16.mxu0 %v3421
        %4738 = vmatpush1.bf16.msra.mxu0 %v3420
        %4739 = vmatprep.subr.bf16.mxu0 %v3423
        %4740 = vmatpush1.bf16.msra.mxu0 %v3422
        %4741 = vmatprep.subr.bf16.mxu0 %v3425
        %4742 = vmatpush1.bf16.msra.mxu0 %v3424
        %4743 = vmatprep.mubr.bf16.mxu0 %v1145
        %4744 = vmatmul.mubr.bf16.gmra.mrb[0].mxu0 %v1144
        %v4745 = vpop.f32.mrb[0].mxu0
        %v4746 = vadd.f32 %v4703, %v4745
        %v4747 = vpop.f32.mrb[0].mxu0
        %v4748 = vadd.f32 %v4705, %v4747
        %v4749 = vpop.f32.mrb[0].mxu0
        %v4750 = vadd.f32 %v4707, %v4749
        %v4751 = vpop.f32.mrb[0].mxu0
        %v4752 = vadd.f32 %v4709, %v4751
        %4753 = vdwg.mxu0
        %4754 = vmatprep.subr.bf16.mxu0 %v3427
        %4755 = vmatpush1.bf16.msra.mxu0 %v3426
        %4756 = vmatprep.subr.bf16.mxu0 %v3429
        %4757 = vmatpush1.bf16.msra.mxu0 %v3428
        %4758 = vmatprep.subr.bf16.mxu0 %v3431
        %4759 = vmatpush1.bf16.msra.mxu0 %v3430
        %4760 = vmatprep.subr.bf16.mxu0 %v3433
        %4761 = vmatpush1.bf16.msra.mxu0 %v3432
        %4762 = vmatprep.subr.bf16.mxu0 %v3435
        %4763 = vmatpush1.bf16.msra.mxu0 %v3434
        %4764 = vmatprep.subr.bf16.mxu0 %v3437
        %4765 = vmatpush1.bf16.msra.mxu0 %v3436
        %4766 = vmatprep.subr.bf16.mxu0 %v3439
        %4767 = vmatpush1.bf16.msra.mxu0 %v3438
        %4768 = vmatprep.subr.bf16.mxu0 %v3441
        %4769 = vmatpush1.bf16.msra.mxu0 %v3440
        %4770 = vmatprep.subr.bf16.mxu0 %v3443
        %4771 = vmatpush1.bf16.msra.mxu0 %v3442
        %4772 = vmatprep.subr.bf16.mxu0 %v3445
        %4773 = vmatpush1.bf16.msra.mxu0 %v3444
        %4774 = vmatprep.subr.bf16.mxu0 %v3447
        %4775 = vmatpush1.bf16.msra.mxu0 %v3446
        %4776 = vmatprep.subr.bf16.mxu0 %v3449
        %4777 = vmatpush1.bf16.msra.mxu0 %v3448
        %4778 = vmatprep.subr.bf16.mxu0 %v3451
        %4779 = vmatpush1.bf16.msra.mxu0 %v3450
        %4780 = vmatprep.subr.bf16.mxu0 %v3453
        %4781 = vmatpush1.bf16.msra.mxu0 %v3452
        %4782 = vmatprep.subr.bf16.mxu0 %v3455
        %4783 = vmatpush1.bf16.msra.mxu0 %v3454
        %4784 = vmatprep.subr.bf16.mxu0 %v3457
        %4785 = vmatpush1.bf16.msra.mxu0 %v3456
        %4786 = vmatprep.mubr.bf16.mxu0 %v1147
        %4787 = vmatmul.mubr.bf16.gmra.mrb[0].mxu0 %v1146
        %v4788 = vpop.f32.mrb[0].mxu0
        %v4789 = vadd.f32 %v4746, %v4788
        %v4790 = vpop.f32.mrb[0].mxu0
        %v4791 = vadd.f32 %v4748, %v4790
        %v4792 = vpop.f32.mrb[0].mxu0
        %v4793 = vadd.f32 %v4750, %v4792
        %v4794 = vpop.f32.mrb[0].mxu0
        %v4795 = vadd.f32 %v4752, %v4794
        %4796 = vdwg.mxu0
        %4797 = vmatprep.subr.bf16.mxu0 %v3459
        %4798 = vmatpush1.bf16.msra.mxu0 %v3458
        %4799 = vmatprep.subr.bf16.mxu0 %v3461
        %4800 = vmatpush1.bf16.msra.mxu0 %v3460
        %4801 = vmatprep.subr.bf16.mxu0 %v3463
        %4802 = vmatpush1.bf16.msra.mxu0 %v3462
        %4803 = vmatprep.subr.bf16.mxu0 %v3465
        %4804 = vmatpush1.bf16.msra.mxu0 %v3464
        %4805 = vmatprep.subr.bf16.mxu0 %v3467
        %4806 = vmatpush1.bf16.msra.mxu0 %v3466
        %4807 = vmatprep.subr.bf16.mxu0 %v3469
        %4808 = vmatpush1.bf16.msra.mxu0 %v3468
        %4809 = vmatprep.subr.bf16.mxu0 %v3471
        %4810 = vmatpush1.bf16.msra.mxu0 %v3470
        %4811 = vmatprep.subr.bf16.mxu0 %v3473
        %4812 = vmatpush1.bf16.msra.mxu0 %v3472
        %4813 = vmatprep.subr.bf16.mxu0 %v3475
        %4814 = vmatpush1.bf16.msra.mxu0 %v3474
        %4815 = vmatprep.subr.bf16.mxu0 %v3477
        %4816 = vmatpush1.bf16.msra.mxu0 %v3476
        %4817 = vmatprep.subr.bf16.mxu0 %v3479
        %4818 = vmatpush1.bf16.msra.mxu0 %v3478
        %4819 = vmatprep.subr.bf16.mxu0 %v3481
        %4820 = vmatpush1.bf16.msra.mxu0 %v3480
        %4821 = vmatprep.subr.bf16.mxu0 %v3483
        %4822 = vmatpush1.bf16.msra.mxu0 %v3482
        %4823 = vmatprep.subr.bf16.mxu0 %v3485
        %4824 = vmatpush1.bf16.msra.mxu0 %v3484
        %4825 = vmatprep.subr.bf16.mxu0 %v3487
        %4826 = vmatpush1.bf16.msra.mxu0 %v3486
        %4827 = vmatprep.subr.bf16.mxu0 %v3489
        %4828 = vmatpush1.bf16.msra.mxu0 %v3488
        %4829 = vmatprep.mubr.bf16.mxu0 %v1149
        %4830 = vmatmul.mubr.bf16.gmra.mrb[0].mxu0 %v1148
        %v4831 = vpop.f32.mrb[0].mxu0
        %v4832 = vadd.f32 %v4789, %v4831
        %v4833 = vpop.f32.mrb[0].mxu0
        %v4834 = vadd.f32 %v4791, %v4833
        %v4835 = vpop.f32.mrb[0].mxu0
        %v4836 = vadd.f32 %v4793, %v4835
        %v4837 = vpop.f32.mrb[0].mxu0
        %v4838 = vadd.f32 %v4795, %v4837
        %4839 = vdwg.mxu0
        %v4840 = vadd.f32 %v4832, %v4836
        %v4841 = vrot.slane %v4840, 4
        %v4842 = vadd.f32 %v4840, %v4841
        %v4843 = vrot.slane %v4842, 2
        %v4844 = vadd.f32 %v4842, %v4843
        %v4845 = vrot.slane %v4844, 1
        %v4846 = vadd.f32 %v4844, %v4845
        %v4847 = vadd.f32 %v4834, %v4838
        %v4848 = vrot.slane %v4847, 4
        %v4849 = vadd.f32 %v4847, %v4848
        %v4850 = vrot.slane %v4849, 2
        %v4851 = vadd.f32 %v4849, %v4850
        %v4852 = vrot.slane %v4851, 1
        %v4853 = vadd.f32 %v4851, %v4852
        %v4854 = vrcp.pop 16.0
        %v4855 = vmul.f32 %v4846, %v4854
        %v4856 = vmul.f32 %v4853, %v4854
        %v4857 = vsub.f32 %v4832, %v4855
        %v4858 = vsub.f32 %v4834, %v4856
        %v4859 = vsub.f32 %v4836, %v4855
        %v4860 = vsub.f32 %v4838, %v4856
        %v4861 = vmul.f32 %v4857, %v4857
        %v4862 = vmul.f32 %v4858, %v4858
        %v4863 = vmul.f32 %v4859, %v4859
        %v4864 = vmul.f32 %v4860, %v4860
        %v4865 = vadd.f32 %v4861, %v4863
        %v4866 = vrot.slane %v4865, 4
        %v4867 = vadd.f32 %v4865, %v4866
        %v4868 = vrot.slane %v4867, 2
        %v4869 = vadd.f32 %v4867, %v4868
        %v4870 = vrot.slane %v4869, 1
        %v4871 = vadd.f32 %v4869, %v4870
        %v4872 = vadd.f32 %v4862, %v4864
        %v4873 = vrot.slane %v4872, 4
        %v4874 = vadd.f32 %v4872, %v4873
        %v4875 = vrot.slane %v4874, 2
        %v4876 = vadd.f32 %v4874, %v4875
        %v4877 = vrot.slane %v4876, 1
        %v4878 = vadd.f32 %v4876, %v4877
        %v4879 = vmul.f32 %v4871, %v4854
        %v4880 = vmul.f32 %v4878, %v4854
        %v4881 = vld [vmem:[%s317] sm:$0x3]
        %v4882 = vadd.f32 %v4879, 1e-05
        %v4883 = vadd.f32 %v4880, 1e-05
        %v4884 = vrsqrt.pop %v4882
        %v4885 = vrsqrt.pop %v4883
        %v4888 = vcombine.low %v4884, %v4885
        %v4890 = vunpack.c.l.s4 1966171168
        %v4891 = vunpack.c.0.s8 %v4890
        %v4892 = vlaneseq
        %v4893 = vshrl.u32 %v4892, 7
        %v4894 = vsub.s32 %v4891, %v4893
        %v4895 = vrot.slane %v4888, %v4894
        %v4897 = vunpack.c.l.s4 1966171168
        %v4898 = vunpack.c.0.s8 %v4897
        %v4899 = vlaneseq
        %v4900 = vshrl.u32 %v4899, 7
        %v4901 = vsub.s32 %v4898, %v4900
        %v4902 = vrot.slane %v4895, %v4901
        %v4904 = vmul.f32 %v4881, %v4902
        %v4906 = vlaneseq
        %v4907 = vshrl.u32 %v4906, 7
        %v4908 = vsub.s32 0, %v4907
        %v4909 = vrot.slane %v4904, %v4908
        %v4910 = vlaneseq
        %v4911 = vshrl.u32 %v4910, 7
        %v4912 = vsub.s32 1, %v4911
        %v4913 = vrot.slane %v4904, %v4912
        %v4916 = vmul.f32 %v4857, %v4909
        %v4917 = vmul.f32 %v4858, %v4913
        %v4918 = vmul.f32 %v4859, %v4909
        %v4919 = vmul.f32 %v4860, %v4913
        %v4920 = vld [vmem:[%s326] sm:$0x3]
        %v4922 = vlaneseq
        %v4923 = vshrl.u32 %v4922, 7
        %v4924 = vsub.s32 0, %v4923
        %v4925 = vrot.slane %v4920, %v4924
        %v4926 = vlaneseq
        %v4927 = vshrl.u32 %v4926, 7
        %v4928 = vsub.s32 1, %v4927
        %v4929 = vrot.slane %v4920, %v4928
        %v4932 = vadd.f32 %v4916, %v4925
        %v4933 = vadd.f32 %v4917, %v4929
        %v4934 = vadd.f32 %v4918, %v4925
        %v4935 = vadd.f32 %v4919, %v4929
        %v4936 = vld [vmem:[%s385] sm:$0xff]
        %v4937 = vld [vmem:[%s385 + $0x8] sm:$0xff]
        %v4938 = vld [vmem:[%s385 + $0x10] sm:$0xff]
        %v4939 = vld [vmem:[%s385 + $0x18] sm:$0xff]
        %v4940 = vpack.c.bf16 %v4934, %v4932
        %v4941 = vpack.c.bf16 %v4935, %v4933
        %v4942 = vld [vmem:[%s335] sm:$0xff]
        %v4943 = vld [vmem:[%s335 + $0x8] sm:$0xff]
        %v4944 = vld [vmem:[%s335 + $0x10] sm:$0xff]
        %v4945 = vld [vmem:[%s335 + $0x18] sm:$0xff]
        %v4946 = vld [vmem:[%s335 + $0x20] sm:$0xff]
        %v4947 = vld [vmem:[%s335 + $0x28] sm:$0xff]
        %v4948 = vld [vmem:[%s335 + $0x30] sm:$0xff]
        %v4949 = vld [vmem:[%s335 + $0x38] sm:$0xff]
        %v4950 = vld [vmem:[%s335 + $0x40] sm:$0xff]
        %v4951 = vld [vmem:[%s335 + $0x48] sm:$0xff]
        %v4952 = vld [vmem:[%s335 + $0x50] sm:$0xff]
        %v4953 = vld [vmem:[%s335 + $0x58] sm:$0xff]
        %v4954 = vld [vmem:[%s335 + $0x60] sm:$0xff]
        %v4955 = vld [vmem:[%s335 + $0x68] sm:$0xff]
        %v4956 = vld [vmem:[%s335 + $0x70] sm:$0xff]
        %v4957 = vld [vmem:[%s335 + $0x78] sm:$0xff]
        %v4958 = vld [vmem:[%s335 + $0x80] sm:$0xff]
        %v4959 = vld [vmem:[%s335 + $0x88] sm:$0xff]
        %v4960 = vld [vmem:[%s335 + $0x90] sm:$0xff]
        %v4961 = vld [vmem:[%s335 + $0x98] sm:$0xff]
        %v4962 = vld [vmem:[%s335 + $0xa0] sm:$0xff]
        %v4963 = vld [vmem:[%s335 + $0xa8] sm:$0xff]
        %v4964 = vld [vmem:[%s335 + $0xb0] sm:$0xff]
        %v4965 = vld [vmem:[%s335 + $0xb8] sm:$0xff]
        %v4966 = vld [vmem:[%s335 + $0xc0] sm:$0xff]
        %v4967 = vld [vmem:[%s335 + $0xc8] sm:$0xff]
        %v4968 = vld [vmem:[%s335 + $0xd0] sm:$0xff]
        %v4969 = vld [vmem:[%s335 + $0xd8] sm:$0xff]
        %v4970 = vld [vmem:[%s335 + $0xe0] sm:$0xff]
        %v4971 = vld [vmem:[%s335 + $0xe8] sm:$0xff]
        %v4972 = vld [vmem:[%s335 + $0xf0] sm:$0xff]
        %v4973 = vld [vmem:[%s335 + $0xf8] sm:$0xff]
        %v5006 = vunpack.c.l.b16 %v4942
        %v5007 = vunpack.c.h.b16 %v4942
        %v5008 = vunpack.c.l.b16 %v4943
        %v5009 = vunpack.c.h.b16 %v4943
        %v5010 = vunpack.c.l.b16 %v4944
        %v5011 = vunpack.c.h.b16 %v4944
        %v5012 = vunpack.c.l.b16 %v4945
        %v5013 = vunpack.c.h.b16 %v4945
        %v5014 = vunpack.c.l.b16 %v4946
        %v5015 = vunpack.c.h.b16 %v4946
        %v5016 = vunpack.c.l.b16 %v4947
        %v5017 = vunpack.c.h.b16 %v4947
        %v5018 = vunpack.c.l.b16 %v4948
        %v5019 = vunpack.c.h.b16 %v4948
        %v5020 = vunpack.c.l.b16 %v4949
        %v5021 = vunpack.c.h.b16 %v4949
        %v5022 = vunpack.c.l.b16 %v4950
        %v5023 = vunpack.c.h.b16 %v4950
        %v5024 = vunpack.c.l.b16 %v4951
        %v5025 = vunpack.c.h.b16 %v4951
        %v5026 = vunpack.c.l.b16 %v4952
        %v5027 = vunpack.c.h.b16 %v4952
        %v5028 = vunpack.c.l.b16 %v4953
        %v5029 = vunpack.c.h.b16 %v4953
        %v5030 = vunpack.c.l.b16 %v4954
        %v5031 = vunpack.c.h.b16 %v4954
        %v5032 = vunpack.c.l.b16 %v4955
        %v5033 = vunpack.c.h.b16 %v4955
        %v5034 = vunpack.c.l.b16 %v4956
        %v5035 = vunpack.c.h.b16 %v4956
        %v5036 = vunpack.c.l.b16 %v4957
        %v5037 = vunpack.c.h.b16 %v4957
        %v5038 = vunpack.c.l.b16 %v4958
        %v5039 = vunpack.c.h.b16 %v4958
        %v5040 = vunpack.c.l.b16 %v4959
        %v5041 = vunpack.c.h.b16 %v4959
        %v5042 = vunpack.c.l.b16 %v4960
        %v5043 = vunpack.c.h.b16 %v4960
        %v5044 = vunpack.c.l.b16 %v4961
        %v5045 = vunpack.c.h.b16 %v4961
        %v5046 = vunpack.c.l.b16 %v4962
        %v5047 = vunpack.c.h.b16 %v4962
        %v5048 = vunpack.c.l.b16 %v4963
        %v5049 = vunpack.c.h.b16 %v4963
        %v5050 = vunpack.c.l.b16 %v4964
        %v5051 = vunpack.c.h.b16 %v4964
        %v5052 = vunpack.c.l.b16 %v4965
        %v5053 = vunpack.c.h.b16 %v4965
        %v5054 = vunpack.c.l.b16 %v4966
        %v5055 = vunpack.c.h.b16 %v4966
        %v5056 = vunpack.c.l.b16 %v4967
        %v5057 = vunpack.c.h.b16 %v4967
        %v5058 = vunpack.c.l.b16 %v4968
        %v5059 = vunpack.c.h.b16 %v4968
        %v5060 = vunpack.c.l.b16 %v4969
        %v5061 = vunpack.c.h.b16 %v4969
        %v5062 = vunpack.c.l.b16 %v4970
        %v5063 = vunpack.c.h.b16 %v4970
        %v5064 = vunpack.c.l.b16 %v4971
        %v5065 = vunpack.c.h.b16 %v4971
        %v5066 = vunpack.c.l.b16 %v4972
        %v5067 = vunpack.c.h.b16 %v4972
        %v5068 = vunpack.c.l.b16 %v4973
        %v5069 = vunpack.c.h.b16 %v4973
        %v5070 = vpack.c.b16 %v5008, %v5006
        %v5071 = vpack.c.b16 %v5009, %v5007
        %v5072 = vpack.c.b16 %v5012, %v5010
        %v5073 = vpack.c.b16 %v5013, %v5011
        %v5074 = vpack.c.b16 %v5016, %v5014
        %v5075 = vpack.c.b16 %v5017, %v5015
        %v5076 = vpack.c.b16 %v5020, %v5018
        %v5077 = vpack.c.b16 %v5021, %v5019
        %v5078 = vpack.c.b16 %v5024, %v5022
        %v5079 = vpack.c.b16 %v5025, %v5023
        %v5080 = vpack.c.b16 %v5028, %v5026
        %v5081 = vpack.c.b16 %v5029, %v5027
        %v5082 = vpack.c.b16 %v5032, %v5030
        %v5083 = vpack.c.b16 %v5033, %v5031
        %v5084 = vpack.c.b16 %v5036, %v5034
        %v5085 = vpack.c.b16 %v5037, %v5035
        %v5086 = vpack.c.b16 %v5040, %v5038
        %v5087 = vpack.c.b16 %v5041, %v5039
        %v5088 = vpack.c.b16 %v5044, %v5042
        %v5089 = vpack.c.b16 %v5045, %v5043
        %v5090 = vpack.c.b16 %v5048, %v5046
        %v5091 = vpack.c.b16 %v5049, %v5047
        %v5092 = vpack.c.b16 %v5052, %v5050
        %v5093 = vpack.c.b16 %v5053, %v5051
        %v5094 = vpack.c.b16 %v5056, %v5054
        %v5095 = vpack.c.b16 %v5057, %v5055
        %v5096 = vpack.c.b16 %v5060, %v5058
        %v5097 = vpack.c.b16 %v5061, %v5059
        %v5098 = vpack.c.b16 %v5064, %v5062
        %v5099 = vpack.c.b16 %v5065, %v5063
        %v5100 = vpack.c.b16 %v5068, %v5066
        %v5101 = vpack.c.b16 %v5069, %v5067
        %5134 = vmatprep.subr.bf16.mxu0 %v5071
        %5135 = vmatpush1.bf16.msra.mxu0 %v5070
        %5136 = vmatprep.subr.bf16.mxu0 %v5073
        %5137 = vmatpush1.bf16.msra.mxu0 %v5072
        %5138 = vmatprep.subr.bf16.mxu0 %v5075
        %5139 = vmatpush1.bf16.msra.mxu0 %v5074
        %5140 = vmatprep.subr.bf16.mxu0 %v5077
        %5141 = vmatpush1.bf16.msra.mxu0 %v5076
        %5142 = vmatprep.subr.bf16.mxu0 %v5079
        %5143 = vmatpush1.bf16.msra.mxu0 %v5078
        %5144 = vmatprep.subr.bf16.mxu0 %v5081
        %5145 = vmatpush1.bf16.msra.mxu0 %v5080
        %5146 = vmatprep.subr.bf16.mxu0 %v5083
        %5147 = vmatpush1.bf16.msra.mxu0 %v5082
        %5148 = vmatprep.subr.bf16.mxu0 %v5085
        %5149 = vmatpush1.bf16.msra.mxu0 %v5084
        %5150 = vmatprep.subr.bf16.mxu0 %v5087
        %5151 = vmatpush1.bf16.msra.mxu0 %v5086
        %5152 = vmatprep.subr.bf16.mxu0 %v5089
        %5153 = vmatpush1.bf16.msra.mxu0 %v5088
        %5154 = vmatprep.subr.bf16.mxu0 %v5091
        %5155 = vmatpush1.bf16.msra.mxu0 %v5090
        %5156 = vmatprep.subr.bf16.mxu0 %v5093
        %5157 = vmatpush1.bf16.msra.mxu0 %v5092
        %5158 = vmatprep.subr.bf16.mxu0 %v5095
        %5159 = vmatpush1.bf16.msra.mxu0 %v5094
        %5160 = vmatprep.subr.bf16.mxu0 %v5097
        %5161 = vmatpush1.bf16.msra.mxu0 %v5096
        %5162 = vmatprep.subr.bf16.mxu0 %v5099
        %5163 = vmatpush1.bf16.msra.mxu0 %v5098
        %5164 = vmatprep.subr.bf16.mxu0 %v5101
        %5165 = vmatpush1.bf16.msra.mxu0 %v5100
        %5166 = vmatprep.mubr.bf16.mxu0 %v4941
        %5167 = vmatmul.mubr.bf16.gmra.mrb[0].mxu0 %v4940
        %v5168 = vpop.f32.mrb[0].mxu0
        %v5169 = vadd.f32 0.0, %v5168
        %v5170 = vpop.f32.mrb[0].mxu0
        %v5171 = vadd.f32 0.0, %v5170
        %v5172 = vpop.f32.mrb[0].mxu0
        %v5173 = vadd.f32 0.0, %v5172
        %v5174 = vpop.f32.mrb[0].mxu0
        %v5175 = vadd.f32 0.0, %v5174
        %5176 = vdwg.mxu0
        %v5177 = vadd.f32 %v4936, %v5169
        %v5178 = vadd.f32 %v4937, %v5171
        %v5179 = vadd.f32 %v4938, %v5173
        %v5180 = vadd.f32 %v4939, %v5175
        %5181 = vst [vmem:[%s385] sm:$0xff] %v5177
        %5182 = vst [vmem:[%s385 + $0x8] sm:$0xff] %v5178
        %5183 = vst [vmem:[%s385 + $0x10] sm:$0xff] %v5179
        %5184 = vst [vmem:[%s385 + $0x18] sm:$0xff] %v5180
        %p5185 = scmp.lt.s32.totalorder %s29, 1
        %s5186 = scalar_select %p5185, %s29, 1
        %s5187 = smul.addr %s5186, 4
        %s5188 = smul.addr %s5187, 8
        %s5189 = scalar_lea.vmem %s5, %s5188
        // Predicated region
        $region61: #{fused_forward.1} parent=39 // pred_check
          %p5190 = pneg %p188
        $region62: #{fused_forward.1} parent=39 // pred_check_branch
          %5192 = sbr.rel (%p5190) target = $region64
        $region63: #{fused_forward.1} parent=39 // pred_region
          _
        $region64: #{fused_forward.1} parent=39 // pred_fallthru
          _
      $region40: #{fused_forward.1} parent=5 // pred_fallthru
        _
      %p5193 = scmp.le.s32.totalorder 2, %s20
      // Predicated region
      $region65: #{fused_forward.1} parent=5 // pred_check
        %p5194 = pneg %p5193
      $region66: #{fused_forward.1} parent=5 // pred_check_branch
        %5196 = sbr.rel (%p5194) target = $region68
      $region67: #{fused_forward.1} parent=5 // pred_region
        %s5197 = ssub.s32 %s20, 2
        // Predicated region
        $region69: #{fused_forward.1} parent=67 // pred_check
          %p5198 = pneg %p194
        $region70: #{fused_forward.1} parent=67 // pred_check_branch
          %5200 = sbr.rel (%p5198) target = $region72
        $region71: #{fused_forward.1} parent=67 // pred_region
          %p5201 = scmp.lt.s32.totalorder %s31, 1
          %s5202 = scalar_select %p5201, %s31, 1
          %s5203 = smul.addr %s5202, 4
          %s5204 = smul.addr %s5203, 8
          %s5205 = scalar_lea.vmem %s5, %s5204
        $region72: #{fused_forward.1} parent=67 // pred_fallthru
          _
      $region68: #{fused_forward.1} parent=5 // pred_fallthru
        _
    $region6: #{fused_forward.1} parent=1 // loop_footer
      %s24 = sadd.s32 1, %s20
    $region7: #{fused_forward.1} parent=1 // loop_footer_branch
      %19 = sbr.rel target = $region3
    $region8: #{fused_forward.1} parent=1 // loop_exit
      _
    %5206 = vsyncpa [#allocation3], 1
    %s5207 = scalar_lea.sflag [#allocation3], 1
    %5208 = vsyncpa %s5207, 1
    %5209 = vsyncpa [#allocation5], 1
    %s5210 = scalar_lea.sflag [#allocation5], 1
    %5211 = vsyncpa %s5210, 1
    %5212 = vsyncpa [#allocation8], 1
    %s5213 = scalar_lea.sflag [#allocation8], 1
    %5214 = vsyncpa %s5213, 1

</llo_original>
